<compile_context>
chip_gen: v5e
topology: v5e:2x2
jax: 0.10.0
libtpu: 0.0.40
codegen_flags: <defaults>
</compile_context>

<pallas_src>
import math
import numpy as np
import jax
import jax.numpy as jnp
from jax.experimental import pallas as pl
from jax.experimental.pallas import tpu as pltpu


def _round_up(x, m):
    return ((x + m - 1) // m) * m


def prepare_params(w_dw, w_cmb, b_cmb, H, W):
    """One-time host-side parameter preprocessing (kept out of the per-call jit)."""
    w_dw = np.asarray(w_dw, np.float32)
    NB, C, K, _ = w_dw.shape
    P = K // 2
    Hp, Wp = H + 2 * P, W + 2 * P
    HpWp = Hp * Wp
    S = _round_up(HpWp, 128)
    KK = K * K

    # Fold FOLD_B branches onto the sublane axis so vregs are full even for small C.
    FOLD_B = max(1, 8 // C) if C < 8 else 1
    FOLD_B = min(FOLD_B, NB)
    while NB % FOLD_B:
        FOLD_B -= 1
    NG = NB // FOLD_B
    C_rows = FOLD_B * C

    # Grouped tap weights: row f*C+c of group g == (branch g*FOLD_B+f, channel c).
    wg = (w_dw.reshape(NG, FOLD_B, C, KK)
               .transpose(0, 3, 1, 2)
               .reshape(NG, KK, C_rows))

    # Pre-broadcast along lanes (removes in-kernel lane-broadcasts) when small.
    if NG * KK * C_rows * S * 4 <= (4 << 20):
        w_tap = np.broadcast_to(wg[..., None], (NG, KK, C_rows, S)).copy()
    else:
        w_tap = np.ascontiguousarray(wg[..., None])          # (NG, KK, C_rows, 1)

    # Valid-center 0/1 mask in the padded-flattened layout, pre-tiled to C_rows rows.
    q = np.arange(S)
    row, col = q // Wp, q % Wp
    valid = ((q < HpWp) & (row >= P) & (row < P + H) &
             (col >= P) & (col < P + W)).astype(np.float32)
    mask = np.broadcast_to(valid[None, :], (C_rows, S)).copy()

    w_c = np.asarray(w_cmb, np.float32).reshape(C, C)
    b_c = np.asarray(b_cmb, np.float32).reshape(C, 1)
    return (jnp.asarray(w_tap), jnp.asarray(w_c), jnp.asarray(b_c), jnp.asarray(mask))


@jax.jit
def basic_block2_forward(x, w_tap, w_c, b_c, mask):
    """x: (N,C,H,W) f32; w_tap: (NG,KK,C_rows,WS); w_c: (C,C); b_c: (C,1); mask: (C_rows,S)."""
    N, C, H, W = x.shape
    NG, KK, C_rows, WS = w_tap.shape
    K = int(round(math.sqrt(KK)))
    P = K // 2
    Wp = W + 2 * P
    S = mask.shape[1]
    FOLD_B = C_rows // C
    HW = H * W
    halo = P * Wp + P                      # max |tap offset| on the flattened axis
    MARGIN = _round_up(halo, 64)           # zero halo so every tap view is in-bounds
    EXT = MARGIN + S + MARGIN
    inv_hw = 1.0 / float(H * W)
    eps = 1e-5

    x_flat = x.astype(jnp.float32).reshape(N, C, HW)        # free bitcast, no HBM op

    def kernel(x_ref, w_ref, wc_ref, bc_ref, mask_ref, o_ref, xs_ref):
        # --- build the zero-haloed, flattened, branch-tiled input plane in VMEM ---
        xs_ref[...] = jnp.zeros((C_rows, EXT), jnp.float32)
        for i in range(H):
            row = x_ref[0, :, i * W:(i + 1) * W]                      # (C, W)
            off = MARGIN + (i + P) * Wp + P
            for f in range(FOLD_B):
                xs_ref[f * C:(f + 1) * C, off:off + W] = row

        # Compact-weight path only: hoist the tiny weight tensor into registers once.
        wall = w_ref[...] if WS == 1 else None

        # --- depthwise KxK conv: each tap is one contiguous lane-offset view shared
        #     by all branch groups; weights are full-lane resident tiles (no bcast) ---
        accs = [jnp.zeros((C_rows, S), jnp.float32) for _ in range(NG)]
        for kh in range(K):
            for kw in range(K):
                t = kh * K + kw
                d = (kh - P) * Wp + (kw - P)
                tv = xs_ref[:, MARGIN + d:MARGIN + d + S]             # (C_rows, S)
                for g in range(NG):
                    w_gt = wall[g, t] if WS == 1 else w_ref[g, t]     # (C_rows, S|1)
                    accs[g] = accs[g] + tv * w_gt

        # --- InstanceNorm (two-pass masked stats) + ReLU, summed over branch groups ---
        mask_v = mask_ref[...]                                        # (C_rows, S)
        zrows = None
        for g in range(NG):
            am = accs[g] * mask_v
            mean = jnp.sum(am, axis=1, keepdims=True) * inv_hw        # (C_rows, 1)
            dev = am - mean
            devm = dev * mask_v
            var = jnp.sum(devm * dev, axis=1, keepdims=True) * inv_hw
            y = jnp.maximum(dev * jax.lax.rsqrt(var + eps), 0.0)
            zrows = y if zrows is None else zrows + y

        # fold the FOLD_B branch blocks back to C channel rows
        zc = zrows[0:C, :]
        for f in range(1, FOLD_B):
            zc = zc + zrows[f * C:(f + 1) * C, :]

        # --- 1x1 combine + bias as C exact-f32 VPU FMAs (tiny; MXU dot not worth
        #     the f32->bf16 precision risk at contraction length C) ---
        wc = wc_ref[...]                                              # (C, C)
        res = None
        for ci in range(C):
            term = wc[:, ci:ci + 1] * zc[ci:ci + 1, :]                # (C,1)*(1,S)
            res = term if res is None else res + term
        res = res + bc_ref[...]                                       # + (C,1) bias

        # --- write only the valid HxW centers (through scratch so every slice is a
        #     plain static ref slice) ---
        xs_ref[0:C, MARGIN:MARGIN + S] = res
        for i in range(H):
            base = MARGIN + (i + P) * Wp + P
            o_ref[0, :, i * W:(i + 1) * W] = xs_ref[0:C, base:base + W]

    out_flat = pl.pallas_call(
        kernel,
        out_shape=jax.ShapeDtypeStruct((N, C, HW), jnp.float32),
        grid=(N,),
        in_specs=[
            pl.BlockSpec((1, C, HW), lambda n: (n, 0, 0)),
            pl.BlockSpec((NG, KK, C_rows, WS), lambda n: (0, 0, 0, 0)),
            pl.BlockSpec((C, C), lambda n: (0, 0)),
            pl.BlockSpec((C, 1), lambda n: (0, 0)),
            pl.BlockSpec((C_rows, S), lambda n: (0, 0)),
        ],
        out_specs=pl.BlockSpec((1, C, HW), lambda n: (n, 0, 0)),
        scratch_shapes=[pltpu.VMEM((C_rows, EXT), jnp.float32)],
        compiler_params=pltpu.CompilerParams(
            dimension_semantics=("parallel",)),
    )(x_flat, w_tap, w_c, b_c, mask)

    return out_flat.reshape(N, C, H, W)                              # free bitcast


# ---------------------------------------------------------------------------
# Pure-JAX reference matching the PyTorch module (numerical sanity check)
# ---------------------------------------------------------------------------
def _ref_forward(x, w_dw, w_cmb, b_cmb):
    N, C, H, W = x.shape
    NB, _, K, _ = w_dw.shape
    P = K // 2

    def branch(xin, w):                    # w: (C, 1, K, K) depthwise (groups=C)
        y = jax.lax.conv_general_dilated(
            xin, w, (1, 1), [(P, P), (P, P)],
            dimension_numbers=("NCHW", "OIHW", "NCHW"),
            feature_group_count=C,
            precision=jax.lax.Precision.HIGHEST)
        m = jnp.mean(y, axis=(2, 3), keepdims=True)
        v = jnp.mean((y - m) ** 2, axis=(2, 3), keepdims=True)
        return jnp.maximum((y - m) * jax.lax.rsqrt(v + 1e-5), 0.0)

    s = None
    for b in range(NB):
        ob = branch(x, w_dw[b][:, None, :, :])
        s = ob if s is None else s + ob
    out = jnp.einsum("nchw,oc->nohw", s, w_cmb,
                     precision=jax.lax.Precision.HIGHEST)
    return out + b_cmb[None, :, None, None]


if __name__ == "__main__":
    # Small config consistent with the module: 4 branches of 5x5 depthwise convs.
    N, C, H, W, K, NB = 2, 4, 16, 16, 5, 4

    key = jax.random.PRNGKey(0)
    kx, k1, k2, k3 = jax.random.split(key, 4)
    x = jax.random.normal(kx, (N, C, H, W), dtype=jnp.float32)             # NCHW
    w_dw = jax.random.normal(k1, (NB, C, K, K), dtype=jnp.float32) * 0.08  # 4x(C,1,5,5)
    w_cmb = jax.random.normal(k2, (C, C), dtype=jnp.float32) * 0.3         # (C,C,1,1)
    b_cmb = jax.random.normal(k3, (C,), dtype=jnp.float32) * 0.1

    params = prepare_params(w_dw, w_cmb, b_cmb, H, W)
    out = jax.block_until_ready(basic_block2_forward(x, *params))
    ref = jax.block_until_ready(_ref_forward(x, w_dw, w_cmb, b_cmb))

    assert out.shape == (N, C, H, W) and out.dtype == jnp.float32
    np.testing.assert_allclose(np.asarray(out), np.asarray(ref),
                               rtol=2e-3, atol=2e-3)
    print("KERNEL_OK")
</pallas_src>

<mosaic_0001>
module attributes {stable_mosaic.version = 11 : i64} {
  func.func @kernel(%arg0: i32, %arg1: memref<1x4x256xf32, #tpu.memory_space<vmem>>, %arg2: memref<2x25x8x512xf32, #tpu.memory_space<vmem>>, %arg3: memref<4x4xf32, #tpu.memory_space<vmem>>, %arg4: memref<4x1xf32, #tpu.memory_space<vmem>>, %arg5: memref<8x512xf32, #tpu.memory_space<vmem>>, %arg6: memref<1x4x256xf32, #tpu.memory_space<vmem>>, %arg7: memref<8x640xf32, #tpu.memory_space<vmem>>) attributes {dimension_semantics = [#tpu.dimension_semantics<parallel>], iteration_bounds = array<i64: 2>, scalar_prefetch = 0 : i64, scratch_operands = 1 : i64, tpu.core_type = #tpu.core_type<tc>, window_params = [{transform_indices = @transform_0, window_bounds = array<i64: 1, 4, 256>}, {pipeline_mode = #tpu.pipeline_mode<synchronous>, transform_indices = @transform_1, window_bounds = array<i64: 2, 25, 8, 512>}, {pipeline_mode = #tpu.pipeline_mode<synchronous>, transform_indices = @transform_2, window_bounds = array<i64: 4, 4>}, {pipeline_mode = #tpu.pipeline_mode<synchronous>, transform_indices = @transform_3, window_bounds = array<i64: 4, 1>}, {pipeline_mode = #tpu.pipeline_mode<synchronous>, transform_indices = @transform_4, window_bounds = array<i64: 8, 512>}, {transform_indices = @transform_5, window_bounds = array<i64: 1, 4, 256>}]} {
    %cst = arith.constant 0.000000e+00 : f32
    %0 = vector.broadcast %cst : f32 to vector<8x640xf32>
    %c0 = arith.constant 0 : index
    %c0_0 = arith.constant 0 : index
    %1 = vector.load %arg7[%c0, %c0_0] : memref<8x640xf32, #tpu.memory_space<vmem>>, vector<8x640xf32>
    tpu.vector_store %arg7[%c0, %c0_0], %0 {strides = array<i32>} : memref<8x640xf32, #tpu.memory_space<vmem>>, vector<8x640xf32>,
    %c0_1 = arith.constant 0 : index
    %c0_2 = arith.constant 0 : index
    %c0_3 = arith.constant 0 : index
    %2 = vector.load %arg1[%c0_1, %c0_2, %c0_3] : memref<1x4x256xf32, #tpu.memory_space<vmem>>, vector<1x4x16xf32>
    %3 = vector.shape_cast %2 : vector<1x4x16xf32> to vector<4x16xf32>
    %c0_4 = arith.constant 0 : index
    %c106 = arith.constant 106 : index
    %4 = vector.load %arg7[%c0_4, %c106] : memref<8x640xf32, #tpu.memory_space<vmem>>, vector<4x16xf32>
    tpu.vector_store %arg7[%c0_4, %c106], %3 {strides = array<i32>} : memref<8x640xf32, #tpu.memory_space<vmem>>, vector<4x16xf32>,
    %c4 = arith.constant 4 : index
    %c106_5 = arith.constant 106 : index
    %5 = vector.load %arg7[%c4, %c106_5] : memref<8x640xf32, #tpu.memory_space<vmem>>, vector<4x16xf32>
    tpu.vector_store %arg7[%c4, %c106_5], %3 {strides = array<i32>} : memref<8x640xf32, #tpu.memory_space<vmem>>, vector<4x16xf32>,
    %c0_6 = arith.constant 0 : index
    %c0_7 = arith.constant 0 : index
    %c16 = arith.constant 16 : index
    %6 = vector.load %arg1[%c0_6, %c0_7, %c16] : memref<1x4x256xf32, #tpu.memory_space<vmem>>, vector<1x4x16xf32>
    %7 = vector.shape_cast %6 : vector<1x4x16xf32> to vector<4x16xf32>
    %c0_8 = arith.constant 0 : index
    %c126 = arith.constant 126 : index
    %8 = vector.load %arg7[%c0_8, %c126] : memref<8x640xf32, #tpu.memory_space<vmem>>, vector<4x16xf32>
    tpu.vector_store %arg7[%c0_8, %c126], %7 {strides = array<i32>} : memref<8x640xf32, #tpu.memory_space<vmem>>, vector<4x16xf32>,
    %c4_9 = arith.constant 4 : index
    %c126_10 = arith.constant 126 : index
    %9 = vector.load %arg7[%c4_9, %c126_10] : memref<8x640xf32, #tpu.memory_space<vmem>>, vector<4x16xf32>
    tpu.vector_store %arg7[%c4_9, %c126_10], %7 {strides = array<i32>} : memref<8x640xf32, #tpu.memory_space<vmem>>, vector<4x16xf32>,
    %c0_11 = arith.constant 0 : index
    %c0_12 = arith.constant 0 : index
    %c32 = arith.constant 32 : index
    %10 = vector.load %arg1[%c0_11, %c0_12, %c32] : memref<1x4x256xf32, #tpu.memory_space<vmem>>, vector<1x4x16xf32>
    %11 = vector.shape_cast %10 : vector<1x4x16xf32> to vector<4x16xf32>
    %c0_13 = arith.constant 0 : index
    %c146 = arith.constant 146 : index
    %12 = vector.load %arg7[%c0_13, %c146] : memref<8x640xf32, #tpu.memory_space<vmem>>, vector<4x16xf32>
    tpu.vector_store %arg7[%c0_13, %c146], %11 {strides = array<i32>} : memref<8x640xf32, #tpu.memory_space<vmem>>, vector<4x16xf32>,
    %c4_14 = arith.constant 4 : index
    %c146_15 = arith.constant 146 : index
    %13 = vector.load %arg7[%c4_14, %c146_15] : memref<8x640xf32, #tpu.memory_space<vmem>>, vector<4x16xf32>
    tpu.vector_store %arg7[%c4_14, %c146_15], %11 {strides = array<i32>} : memref<8x640xf32, #tpu.memory_space<vmem>>, vector<4x16xf32>,
    %c0_16 = arith.constant 0 : index
    %c0_17 = arith.constant 0 : index
    %c48 = arith.constant 48 : index
    %14 = vector.load %arg1[%c0_16, %c0_17, %c48] : memref<1x4x256xf32, #tpu.memory_space<vmem>>, vector<1x4x16xf32>
    %15 = vector.shape_cast %14 : vector<1x4x16xf32> to vector<4x16xf32>
    %c0_18 = arith.constant 0 : index
    %c166 = arith.constant 166 : index
    %16 = vector.load %arg7[%c0_18, %c166] : memref<8x640xf32, #tpu.memory_space<vmem>>, vector<4x16xf32>
    tpu.vector_store %arg7[%c0_18, %c166], %15 {strides = array<i32>} : memref<8x640xf32, #tpu.memory_space<vmem>>, vector<4x16xf32>,
    %c4_19 = arith.constant 4 : index
    %c166_20 = arith.constant 166 : index
    %17 = vector.load %arg7[%c4_19, %c166_20] : memref<8x640xf32, #tpu.memory_space<vmem>>, vector<4x16xf32>
    tpu.vector_store %arg7[%c4_19, %c166_20], %15 {strides = array<i32>} : memref<8x640xf32, #tpu.memory_space<vmem>>, vector<4x16xf32>,
    %c0_21 = arith.constant 0 : index
    %c0_22 = arith.constant 0 : index
    %c64 = arith.constant 64 : index
    %18 = vector.load %arg1[%c0_21, %c0_22, %c64] : memref<1x4x256xf32, #tpu.memory_space<vmem>>, vector<1x4x16xf32>
    %19 = vector.shape_cast %18 : vector<1x4x16xf32> to vector<4x16xf32>
    %c0_23 = arith.constant 0 : index
    %c186 = arith.constant 186 : index
    %20 = vector.load %arg7[%c0_23, %c186] : memref<8x640xf32, #tpu.memory_space<vmem>>, vector<4x16xf32>
    tpu.vector_store %arg7[%c0_23, %c186], %19 {strides = array<i32>} : memref<8x640xf32, #tpu.memory_space<vmem>>, vector<4x16xf32>,
    %c4_24 = arith.constant 4 : index
    %c186_25 = arith.constant 186 : index
    %21 = vector.load %arg7[%c4_24, %c186_25] : memref<8x640xf32, #tpu.memory_space<vmem>>, vector<4x16xf32>
    tpu.vector_store %arg7[%c4_24, %c186_25], %19 {strides = array<i32>} : memref<8x640xf32, #tpu.memory_space<vmem>>, vector<4x16xf32>,
    %c0_26 = arith.constant 0 : index
    %c0_27 = arith.constant 0 : index
    %c80 = arith.constant 80 : index
    %22 = vector.load %arg1[%c0_26, %c0_27, %c80] : memref<1x4x256xf32, #tpu.memory_space<vmem>>, vector<1x4x16xf32>
    %23 = vector.shape_cast %22 : vector<1x4x16xf32> to vector<4x16xf32>
    %c0_28 = arith.constant 0 : index
    %c206 = arith.constant 206 : index
    %24 = vector.load %arg7[%c0_28, %c206] : memref<8x640xf32, #tpu.memory_space<vmem>>, vector<4x16xf32>
    tpu.vector_store %arg7[%c0_28, %c206], %23 {strides = array<i32>} : memref<8x640xf32, #tpu.memory_space<vmem>>, vector<4x16xf32>,
    %c4_29 = arith.constant 4 : index
    %c206_30 = arith.constant 206 : index
    %25 = vector.load %arg7[%c4_29, %c206_30] : memref<8x640xf32, #tpu.memory_space<vmem>>, vector<4x16xf32>
    tpu.vector_store %arg7[%c4_29, %c206_30], %23 {strides = array<i32>} : memref<8x640xf32, #tpu.memory_space<vmem>>, vector<4x16xf32>,
    %c0_31 = arith.constant 0 : index
    %c0_32 = arith.constant 0 : index
    %c96 = arith.constant 96 : index
    %26 = vector.load %arg1[%c0_31, %c0_32, %c96] : memref<1x4x256xf32, #tpu.memory_space<vmem>>, vector<1x4x16xf32>
    %27 = vector.shape_cast %26 : vector<1x4x16xf32> to vector<4x16xf32>
    %c0_33 = arith.constant 0 : index
    %c226 = arith.constant 226 : index
    %28 = vector.load %arg7[%c0_33, %c226] : memref<8x640xf32, #tpu.memory_space<vmem>>, vector<4x16xf32>
    tpu.vector_store %arg7[%c0_33, %c226], %27 {strides = array<i32>} : memref<8x640xf32, #tpu.memory_space<vmem>>, vector<4x16xf32>,
    %c4_34 = arith.constant 4 : index
    %c226_35 = arith.constant 226 : index
    %29 = vector.load %arg7[%c4_34, %c226_35] : memref<8x640xf32, #tpu.memory_space<vmem>>, vector<4x16xf32>
    tpu.vector_store %arg7[%c4_34, %c226_35], %27 {strides = array<i32>} : memref<8x640xf32, #tpu.memory_space<vmem>>, vector<4x16xf32>,
    %c0_36 = arith.constant 0 : index
    %c0_37 = arith.constant 0 : index
    %c112 = arith.constant 112 : index
    %30 = vector.load %arg1[%c0_36, %c0_37, %c112] : memref<1x4x256xf32, #tpu.memory_space<vmem>>, vector<1x4x16xf32>
    %31 = vector.shape_cast %30 : vector<1x4x16xf32> to vector<4x16xf32>
    %c0_38 = arith.constant 0 : index
    %c246 = arith.constant 246 : index
    %32 = vector.load %arg7[%c0_38, %c246] : memref<8x640xf32, #tpu.memory_space<vmem>>, vector<4x16xf32>
    tpu.vector_store %arg7[%c0_38, %c246], %31 {strides = array<i32>} : memref<8x640xf32, #tpu.memory_space<vmem>>, vector<4x16xf32>,
    %c4_39 = arith.constant 4 : index
    %c246_40 = arith.constant 246 : index
    %33 = vector.load %arg7[%c4_39, %c246_40] : memref<8x640xf32, #tpu.memory_space<vmem>>, vector<4x16xf32>
    tpu.vector_store %arg7[%c4_39, %c246_40], %31 {strides = array<i32>} : memref<8x640xf32, #tpu.memory_space<vmem>>, vector<4x16xf32>,
    %c0_41 = arith.constant 0 : index
    %c0_42 = arith.constant 0 : index
    %c128 = arith.constant 128 : index
    %34 = vector.load %arg1[%c0_41, %c0_42, %c128] : memref<1x4x256xf32, #tpu.memory_space<vmem>>, vector<1x4x16xf32>
    %35 = vector.shape_cast %34 : vector<1x4x16xf32> to vector<4x16xf32>
    %c0_43 = arith.constant 0 : index
    %c266 = arith.constant 266 : index
    %36 = vector.load %arg7[%c0_43, %c266] : memref<8x640xf32, #tpu.memory_space<vmem>>, vector<4x16xf32>
    tpu.vector_store %arg7[%c0_43, %c266], %35 {strides = array<i32>} : memref<8x640xf32, #tpu.memory_space<vmem>>, vector<4x16xf32>,
    %c4_44 = arith.constant 4 : index
    %c266_45 = arith.constant 266 : index
    %37 = vector.load %arg7[%c4_44, %c266_45] : memref<8x640xf32, #tpu.memory_space<vmem>>, vector<4x16xf32>
    tpu.vector_store %arg7[%c4_44, %c266_45], %35 {strides = array<i32>} : memref<8x640xf32, #tpu.memory_space<vmem>>, vector<4x16xf32>,
    %c0_46 = arith.constant 0 : index
    %c0_47 = arith.constant 0 : index
    %c144 = arith.constant 144 : index
    %38 = vector.load %arg1[%c0_46, %c0_47, %c144] : memref<1x4x256xf32, #tpu.memory_space<vmem>>, vector<1x4x16xf32>
    %39 = vector.shape_cast %38 : vector<1x4x16xf32> to vector<4x16xf32>
    %c0_48 = arith.constant 0 : index
    %c286 = arith.constant 286 : index
    %40 = vector.load %arg7[%c0_48, %c286] : memref<8x640xf32, #tpu.memory_space<vmem>>, vector<4x16xf32>
    tpu.vector_store %arg7[%c0_48, %c286], %39 {strides = array<i32>} : memref<8x640xf32, #tpu.memory_space<vmem>>, vector<4x16xf32>,
    %c4_49 = arith.constant 4 : index
    %c286_50 = arith.constant 286 : index
    %41 = vector.load %arg7[%c4_49, %c286_50] : memref<8x640xf32, #tpu.memory_space<vmem>>, vector<4x16xf32>
    tpu.vector_store %arg7[%c4_49, %c286_50], %39 {strides = array<i32>} : memref<8x640xf32, #tpu.memory_space<vmem>>, vector<4x16xf32>,
    %c0_51 = arith.constant 0 : index
    %c0_52 = arith.constant 0 : index
    %c160 = arith.constant 160 : index
    %42 = vector.load %arg1[%c0_51, %c0_52, %c160] : memref<1x4x256xf32, #tpu.memory_space<vmem>>, vector<1x4x16xf32>
    %43 = vector.shape_cast %42 : vector<1x4x16xf32> to vector<4x16xf32>
    %c0_53 = arith.constant 0 : index
    %c306 = arith.constant 306 : index
    %44 = vector.load %arg7[%c0_53, %c306] : memref<8x640xf32, #tpu.memory_space<vmem>>, vector<4x16xf32>
    tpu.vector_store %arg7[%c0_53, %c306], %43 {strides = array<i32>} : memref<8x640xf32, #tpu.memory_space<vmem>>, vector<4x16xf32>,
    %c4_54 = arith.constant 4 : index
    %c306_55 = arith.constant 306 : index
    %45 = vector.load %arg7[%c4_54, %c306_55] : memref<8x640xf32, #tpu.memory_space<vmem>>, vector<4x16xf32>
    tpu.vector_store %arg7[%c4_54, %c306_55], %43 {strides = array<i32>} : memref<8x640xf32, #tpu.memory_space<vmem>>, vector<4x16xf32>,
    %c0_56 = arith.constant 0 : index
    %c0_57 = arith.constant 0 : index
    %c176 = arith.constant 176 : index
    %46 = vector.load %arg1[%c0_56, %c0_57, %c176] : memref<1x4x256xf32, #tpu.memory_space<vmem>>, vector<1x4x16xf32>
    %47 = vector.shape_cast %46 : vector<1x4x16xf32> to vector<4x16xf32>
    %c0_58 = arith.constant 0 : index
    %c326 = arith.constant 326 : index
    %48 = vector.load %arg7[%c0_58, %c326] : memref<8x640xf32, #tpu.memory_space<vmem>>, vector<4x16xf32>
    tpu.vector_store %arg7[%c0_58, %c326], %47 {strides = array<i32>} : memref<8x640xf32, #tpu.memory_space<vmem>>, vector<4x16xf32>,
    %c4_59 = arith.constant 4 : index
    %c326_60 = arith.constant 326 : index
    %49 = vector.load %arg7[%c4_59, %c326_60] : memref<8x640xf32, #tpu.memory_space<vmem>>, vector<4x16xf32>
    tpu.vector_store %arg7[%c4_59, %c326_60], %47 {strides = array<i32>} : memref<8x640xf32, #tpu.memory_space<vmem>>, vector<4x16xf32>,
    %c0_61 = arith.constant 0 : index
    %c0_62 = arith.constant 0 : index
    %c192 = arith.constant 192 : index
    %50 = vector.load %arg1[%c0_61, %c0_62, %c192] : memref<1x4x256xf32, #tpu.memory_space<vmem>>, vector<1x4x16xf32>
    %51 = vector.shape_cast %50 : vector<1x4x16xf32> to vector<4x16xf32>
    %c0_63 = arith.constant 0 : index
    %c346 = arith.constant 346 : index
    %52 = vector.load %arg7[%c0_63, %c346] : memref<8x640xf32, #tpu.memory_space<vmem>>, vector<4x16xf32>
    tpu.vector_store %arg7[%c0_63, %c346], %51 {strides = array<i32>} : memref<8x640xf32, #tpu.memory_space<vmem>>, vector<4x16xf32>,
    %c4_64 = arith.constant 4 : index
    %c346_65 = arith.constant 346 : index
    %53 = vector.load %arg7[%c4_64, %c346_65] : memref<8x640xf32, #tpu.memory_space<vmem>>, vector<4x16xf32>
    tpu.vector_store %arg7[%c4_64, %c346_65], %51 {strides = array<i32>} : memref<8x640xf32, #tpu.memory_space<vmem>>, vector<4x16xf32>,
    %c0_66 = arith.constant 0 : index
    %c0_67 = arith.constant 0 : index
    %c208 = arith.constant 208 : index
    %54 = vector.load %arg1[%c0_66, %c0_67, %c208] : memref<1x4x256xf32, #tpu.memory_space<vmem>>, vector<1x4x16xf32>
    %55 = vector.shape_cast %54 : vector<1x4x16xf32> to vector<4x16xf32>
    %c0_68 = arith.constant 0 : index
    %c366 = arith.constant 366 : index
    %56 = vector.load %arg7[%c0_68, %c366] : memref<8x640xf32, #tpu.memory_space<vmem>>, vector<4x16xf32>
    tpu.vector_store %arg7[%c0_68, %c366], %55 {strides = array<i32>} : memref<8x640xf32, #tpu.memory_space<vmem>>, vector<4x16xf32>,
    %c4_69 = arith.constant 4 : index
    %c366_70 = arith.constant 366 : index
    %57 = vector.load %arg7[%c4_69, %c366_70] : memref<8x640xf32, #tpu.memory_space<vmem>>, vector<4x16xf32>
    tpu.vector_store %arg7[%c4_69, %c366_70], %55 {strides = array<i32>} : memref<8x640xf32, #tpu.memory_space<vmem>>, vector<4x16xf32>,
    %c0_71 = arith.constant 0 : index
    %c0_72 = arith.constant 0 : index
    %c224 = arith.constant 224 : index
    %58 = vector.load %arg1[%c0_71, %c0_72, %c224] : memref<1x4x256xf32, #tpu.memory_space<vmem>>, vector<1x4x16xf32>
    %59 = vector.shape_cast %58 : vector<1x4x16xf32> to vector<4x16xf32>
    %c0_73 = arith.constant 0 : index
    %c386 = arith.constant 386 : index
    %60 = vector.load %arg7[%c0_73, %c386] : memref<8x640xf32, #tpu.memory_space<vmem>>, vector<4x16xf32>
    tpu.vector_store %arg7[%c0_73, %c386], %59 {strides = array<i32>} : memref<8x640xf32, #tpu.memory_space<vmem>>, vector<4x16xf32>,
    %c4_74 = arith.constant 4 : index
    %c386_75 = arith.constant 386 : index
    %61 = vector.load %arg7[%c4_74, %c386_75] : memref<8x640xf32, #tpu.memory_space<vmem>>, vector<4x16xf32>
    tpu.vector_store %arg7[%c4_74, %c386_75], %59 {strides = array<i32>} : memref<8x640xf32, #tpu.memory_space<vmem>>, vector<4x16xf32>,
    %c0_76 = arith.constant 0 : index
    %c0_77 = arith.constant 0 : index
    %c240 = arith.constant 240 : index
    %62 = vector.load %arg1[%c0_76, %c0_77, %c240] : memref<1x4x256xf32, #tpu.memory_space<vmem>>, vector<1x4x16xf32>
    %63 = vector.shape_cast %62 : vector<1x4x16xf32> to vector<4x16xf32>
    %c0_78 = arith.constant 0 : index
    %c406 = arith.constant 406 : index
    %64 = vector.load %arg7[%c0_78, %c406] : memref<8x640xf32, #tpu.memory_space<vmem>>, vector<4x16xf32>
    tpu.vector_store %arg7[%c0_78, %c406], %63 {strides = array<i32>} : memref<8x640xf32, #tpu.memory_space<vmem>>, vector<4x16xf32>,
    %c4_79 = arith.constant 4 : index
    %c406_80 = arith.constant 406 : index
    %65 = vector.load %arg7[%c4_79, %c406_80] : memref<8x640xf32, #tpu.memory_space<vmem>>, vector<4x16xf32>
    tpu.vector_store %arg7[%c4_79, %c406_80], %63 {strides = array<i32>} : memref<8x640xf32, #tpu.memory_space<vmem>>, vector<4x16xf32>,
    %cst_81 = arith.constant 0.000000e+00 : f32
    %66 = vector.broadcast %cst_81 : f32 to vector<8x512xf32>
    %cst_82 = arith.constant 0.000000e+00 : f32
    %67 = vector.broadcast %cst_82 : f32 to vector<8x512xf32>
    %c0_83 = arith.constant 0 : index
    %c22 = arith.constant 22 : index
    %68 = vector.load %arg7[%c0_83, %c22] : memref<8x640xf32, #tpu.memory_space<vmem>>, vector<8x512xf32>
    %c0_84 = arith.constant 0 : index
    %c0_85 = arith.constant 0 : index
    %c0_86 = arith.constant 0 : index
    %c0_87 = arith.constant 0 : index
    %69 = vector.load %arg2[%c0_84, %c0_85, %c0_86, %c0_87] : memref<2x25x8x512xf32, #tpu.memory_space<vmem>>, vector<1x1x8x512xf32>
    %70 = vector.shape_cast %69 : vector<1x1x8x512xf32> to vector<8x512xf32>
    %71 = arith.mulf %68, %70 : vector<8x512xf32>
    %72 = arith.addf %66, %71 : vector<8x512xf32>
    %c1 = arith.constant 1 : index
    %c0_88 = arith.constant 0 : index
    %c0_89 = arith.constant 0 : index
    %c0_90 = arith.constant 0 : index
    %73 = vector.load %arg2[%c1, %c0_88, %c0_89, %c0_90] : memref<2x25x8x512xf32, #tpu.memory_space<vmem>>, vector<1x1x8x512xf32>
    %74 = vector.shape_cast %73 : vector<1x1x8x512xf32> to vector<8x512xf32>
    %75 = arith.mulf %68, %74 : vector<8x512xf32>
    %76 = arith.addf %67, %75 : vector<8x512xf32>
    %c0_91 = arith.constant 0 : index
    %c23 = arith.constant 23 : index
    %77 = vector.load %arg7[%c0_91, %c23] : memref<8x640xf32, #tpu.memory_space<vmem>>, vector<8x512xf32>
    %c0_92 = arith.constant 0 : index
    %c1_93 = arith.constant 1 : index
    %c0_94 = arith.constant 0 : index
    %c0_95 = arith.constant 0 : index
    %78 = vector.load %arg2[%c0_92, %c1_93, %c0_94, %c0_95] : memref<2x25x8x512xf32, #tpu.memory_space<vmem>>, vector<1x1x8x512xf32>
    %79 = vector.shape_cast %78 : vector<1x1x8x512xf32> to vector<8x512xf32>
    %80 = arith.mulf %77, %79 : vector<8x512xf32>
    %81 = arith.addf %72, %80 : vector<8x512xf32>
    %c1_96 = arith.constant 1 : index
    %c1_97 = arith.constant 1 : index
    %c0_98 = arith.constant 0 : index
    %c0_99 = arith.constant 0 : index
    %82 = vector.load %arg2[%c1_96, %c1_97, %c0_98, %c0_99] : memref<2x25x8x512xf32, #tpu.memory_space<vmem>>, vector<1x1x8x512xf32>
    %83 = vector.shape_cast %82 : vector<1x1x8x512xf32> to vector<8x512xf32>
    %84 = arith.mulf %77, %83 : vector<8x512xf32>
    %85 = arith.addf %76, %84 : vector<8x512xf32>
    %c0_100 = arith.constant 0 : index
    %c24 = arith.constant 24 : index
    %86 = vector.load %arg7[%c0_100, %c24] : memref<8x640xf32, #tpu.memory_space<vmem>>, vector<8x512xf32>
    %c0_101 = arith.constant 0 : index
    %c2 = arith.constant 2 : index
    %c0_102 = arith.constant 0 : index
    %c0_103 = arith.constant 0 : index
    %87 = vector.load %arg2[%c0_101, %c2, %c0_102, %c0_103] : memref<2x25x8x512xf32, #tpu.memory_space<vmem>>, vector<1x1x8x512xf32>
    %88 = vector.shape_cast %87 : vector<1x1x8x512xf32> to vector<8x512xf32>
    %89 = arith.mulf %86, %88 : vector<8x512xf32>
    %90 = arith.addf %81, %89 : vector<8x512xf32>
    %c1_104 = arith.constant 1 : index
    %c2_105 = arith.constant 2 : index
    %c0_106 = arith.constant 0 : index
    %c0_107 = arith.constant 0 : index
    %91 = vector.load %arg2[%c1_104, %c2_105, %c0_106, %c0_107] : memref<2x25x8x512xf32, #tpu.memory_space<vmem>>, vector<1x1x8x512xf32>
    %92 = vector.shape_cast %91 : vector<1x1x8x512xf32> to vector<8x512xf32>
    %93 = arith.mulf %86, %92 : vector<8x512xf32>
    %94 = arith.addf %85, %93 : vector<8x512xf32>
    %c0_108 = arith.constant 0 : index
    %c25 = arith.constant 25 : index
    %95 = vector.load %arg7[%c0_108, %c25] : memref<8x640xf32, #tpu.memory_space<vmem>>, vector<8x512xf32>
    %c0_109 = arith.constant 0 : index
    %c3 = arith.constant 3 : index
    %c0_110 = arith.constant 0 : index
    %c0_111 = arith.constant 0 : index
    %96 = vector.load %arg2[%c0_109, %c3, %c0_110, %c0_111] : memref<2x25x8x512xf32, #tpu.memory_space<vmem>>, vector<1x1x8x512xf32>
    %97 = vector.shape_cast %96 : vector<1x1x8x512xf32> to vector<8x512xf32>
    %98 = arith.mulf %95, %97 : vector<8x512xf32>
    %99 = arith.addf %90, %98 : vector<8x512xf32>
    %c1_112 = arith.constant 1 : index
    %c3_113 = arith.constant 3 : index
    %c0_114 = arith.constant 0 : index
    %c0_115 = arith.constant 0 : index
    %100 = vector.load %arg2[%c1_112, %c3_113, %c0_114, %c0_115] : memref<2x25x8x512xf32, #tpu.memory_space<vmem>>, vector<1x1x8x512xf32>
    %101 = vector.shape_cast %100 : vector<1x1x8x512xf32> to vector<8x512xf32>
    %102 = arith.mulf %95, %101 : vector<8x512xf32>
    %103 = arith.addf %94, %102 : vector<8x512xf32>
    %c0_116 = arith.constant 0 : index
    %c26 = arith.constant 26 : index
    %104 = vector.load %arg7[%c0_116, %c26] : memref<8x640xf32, #tpu.memory_space<vmem>>, vector<8x512xf32>
    %c0_117 = arith.constant 0 : index
    %c4_118 = arith.constant 4 : index
    %c0_119 = arith.constant 0 : index
    %c0_120 = arith.constant 0 : index
    %105 = vector.load %arg2[%c0_117, %c4_118, %c0_119, %c0_120] : memref<2x25x8x512xf32, #tpu.memory_space<vmem>>, vector<1x1x8x512xf32>
    %106 = vector.shape_cast %105 : vector<1x1x8x512xf32> to vector<8x512xf32>
    %107 = arith.mulf %104, %106 : vector<8x512xf32>
    %108 = arith.addf %99, %107 : vector<8x512xf32>
    %c1_121 = arith.constant 1 : index
    %c4_122 = arith.constant 4 : index
    %c0_123 = arith.constant 0 : index
    %c0_124 = arith.constant 0 : index
    %109 = vector.load %arg2[%c1_121, %c4_122, %c0_123, %c0_124] : memref<2x25x8x512xf32, #tpu.memory_space<vmem>>, vector<1x1x8x512xf32>
    %110 = vector.shape_cast %109 : vector<1x1x8x512xf32> to vector<8x512xf32>
    %111 = arith.mulf %104, %110 : vector<8x512xf32>
    %112 = arith.addf %103, %111 : vector<8x512xf32>
    %c0_125 = arith.constant 0 : index
    %c42 = arith.constant 42 : index
    %113 = vector.load %arg7[%c0_125, %c42] : memref<8x640xf32, #tpu.memory_space<vmem>>, vector<8x512xf32>
    %c0_126 = arith.constant 0 : index
    %c5 = arith.constant 5 : index
    %c0_127 = arith.constant 0 : index
    %c0_128 = arith.constant 0 : index
    %114 = vector.load %arg2[%c0_126, %c5, %c0_127, %c0_128] : memref<2x25x8x512xf32, #tpu.memory_space<vmem>>, vector<1x1x8x512xf32>
    %115 = vector.shape_cast %114 : vector<1x1x8x512xf32> to vector<8x512xf32>
    %116 = arith.mulf %113, %115 : vector<8x512xf32>
    %117 = arith.addf %108, %116 : vector<8x512xf32>
    %c1_129 = arith.constant 1 : index
    %c5_130 = arith.constant 5 : index
    %c0_131 = arith.constant 0 : index
    %c0_132 = arith.constant 0 : index
    %118 = vector.load %arg2[%c1_129, %c5_130, %c0_131, %c0_132] : memref<2x25x8x512xf32, #tpu.memory_space<vmem>>, vector<1x1x8x512xf32>
    %119 = vector.shape_cast %118 : vector<1x1x8x512xf32> to vector<8x512xf32>
    %120 = arith.mulf %113, %119 : vector<8x512xf32>
    %121 = arith.addf %112, %120 : vector<8x512xf32>
    %c0_133 = arith.constant 0 : index
    %c43 = arith.constant 43 : index
    %122 = vector.load %arg7[%c0_133, %c43] : memref<8x640xf32, #tpu.memory_space<vmem>>, vector<8x512xf32>
    %c0_134 = arith.constant 0 : index
    %c6 = arith.constant 6 : index
    %c0_135 = arith.constant 0 : index
    %c0_136 = arith.constant 0 : index
    %123 = vector.load %arg2[%c0_134, %c6, %c0_135, %c0_136] : memref<2x25x8x512xf32, #tpu.memory_space<vmem>>, vector<1x1x8x512xf32>
    %124 = vector.shape_cast %123 : vector<1x1x8x512xf32> to vector<8x512xf32>
    %125 = arith.mulf %122, %124 : vector<8x512xf32>
    %126 = arith.addf %117, %125 : vector<8x512xf32>
    %c1_137 = arith.constant 1 : index
    %c6_138 = arith.constant 6 : index
    %c0_139 = arith.constant 0 : index
    %c0_140 = arith.constant 0 : index
    %127 = vector.load %arg2[%c1_137, %c6_138, %c0_139, %c0_140] : memref<2x25x8x512xf32, #tpu.memory_space<vmem>>, vector<1x1x8x512xf32>
    %128 = vector.shape_cast %127 : vector<1x1x8x512xf32> to vector<8x512xf32>
    %129 = arith.mulf %122, %128 : vector<8x512xf32>
    %130 = arith.addf %121, %129 : vector<8x512xf32>
    %c0_141 = arith.constant 0 : index
    %c44 = arith.constant 44 : index
    %131 = vector.load %arg7[%c0_141, %c44] : memref<8x640xf32, #tpu.memory_space<vmem>>, vector<8x512xf32>
    %c0_142 = arith.constant 0 : index
    %c7 = arith.constant 7 : index
    %c0_143 = arith.constant 0 : index
    %c0_144 = arith.constant 0 : index
    %132 = vector.load %arg2[%c0_142, %c7, %c0_143, %c0_144] : memref<2x25x8x512xf32, #tpu.memory_space<vmem>>, vector<1x1x8x512xf32>
    %133 = vector.shape_cast %132 : vector<1x1x8x512xf32> to vector<8x512xf32>
    %134 = arith.mulf %131, %133 : vector<8x512xf32>
    %135 = arith.addf %126, %134 : vector<8x512xf32>
    %c1_145 = arith.constant 1 : index
    %c7_146 = arith.constant 7 : index
    %c0_147 = arith.constant 0 : index
    %c0_148 = arith.constant 0 : index
    %136 = vector.load %arg2[%c1_145, %c7_146, %c0_147, %c0_148] : memref<2x25x8x512xf32, #tpu.memory_space<vmem>>, vector<1x1x8x512xf32>
    %137 = vector.shape_cast %136 : vector<1x1x8x512xf32> to vector<8x512xf32>
    %138 = arith.mulf %131, %137 : vector<8x512xf32>
    %139 = arith.addf %130, %138 : vector<8x512xf32>
    %c0_149 = arith.constant 0 : index
    %c45 = arith.constant 45 : index
    %140 = vector.load %arg7[%c0_149, %c45] : memref<8x640xf32, #tpu.memory_space<vmem>>, vector<8x512xf32>
    %c0_150 = arith.constant 0 : index
    %c8 = arith.constant 8 : index
    %c0_151 = arith.constant 0 : index
    %c0_152 = arith.constant 0 : index
    %141 = vector.load %arg2[%c0_150, %c8, %c0_151, %c0_152] : memref<2x25x8x512xf32, #tpu.memory_space<vmem>>, vector<1x1x8x512xf32>
    %142 = vector.shape_cast %141 : vector<1x1x8x512xf32> to vector<8x512xf32>
    %143 = arith.mulf %140, %142 : vector<8x512xf32>
    %144 = arith.addf %135, %143 : vector<8x512xf32>
    %c1_153 = arith.constant 1 : index
    %c8_154 = arith.constant 8 : index
    %c0_155 = arith.constant 0 : index
    %c0_156 = arith.constant 0 : index
    %145 = vector.load %arg2[%c1_153, %c8_154, %c0_155, %c0_156] : memref<2x25x8x512xf32, #tpu.memory_space<vmem>>, vector<1x1x8x512xf32>
    %146 = vector.shape_cast %145 : vector<1x1x8x512xf32> to vector<8x512xf32>
    %147 = arith.mulf %140, %146 : vector<8x512xf32>
    %148 = arith.addf %139, %147 : vector<8x512xf32>
    %c0_157 = arith.constant 0 : index
    %c46 = arith.constant 46 : index
    %149 = vector.load %arg7[%c0_157, %c46] : memref<8x640xf32, #tpu.memory_space<vmem>>, vector<8x512xf32>
    %c0_158 = arith.constant 0 : index
    %c9 = arith.constant 9 : index
    %c0_159 = arith.constant 0 : index
    %c0_160 = arith.constant 0 : index
    %150 = vector.load %arg2[%c0_158, %c9, %c0_159, %c0_160] : memref<2x25x8x512xf32, #tpu.memory_space<vmem>>, vector<1x1x8x512xf32>
    %151 = vector.shape_cast %150 : vector<1x1x8x512xf32> to vector<8x512xf32>
    %152 = arith.mulf %149, %151 : vector<8x512xf32>
    %153 = arith.addf %144, %152 : vector<8x512xf32>
    %c1_161 = arith.constant 1 : index
    %c9_162 = arith.constant 9 : index
    %c0_163 = arith.constant 0 : index
    %c0_164 = arith.constant 0 : index
    %154 = vector.load %arg2[%c1_161, %c9_162, %c0_163, %c0_164] : memref<2x25x8x512xf32, #tpu.memory_space<vmem>>, vector<1x1x8x512xf32>
    %155 = vector.shape_cast %154 : vector<1x1x8x512xf32> to vector<8x512xf32>
    %156 = arith.mulf %149, %155 : vector<8x512xf32>
    %157 = arith.addf %148, %156 : vector<8x512xf32>
    %c0_165 = arith.constant 0 : index
    %c62 = arith.constant 62 : index
    %158 = vector.load %arg7[%c0_165, %c62] : memref<8x640xf32, #tpu.memory_space<vmem>>, vector<8x512xf32>
    %c0_166 = arith.constant 0 : index
    %c10 = arith.constant 10 : index
    %c0_167 = arith.constant 0 : index
    %c0_168 = arith.constant 0 : index
    %159 = vector.load %arg2[%c0_166, %c10, %c0_167, %c0_168] : memref<2x25x8x512xf32, #tpu.memory_space<vmem>>, vector<1x1x8x512xf32>
    %160 = vector.shape_cast %159 : vector<1x1x8x512xf32> to vector<8x512xf32>
    %161 = arith.mulf %158, %160 : vector<8x512xf32>
    %162 = arith.addf %153, %161 : vector<8x512xf32>
    %c1_169 = arith.constant 1 : index
    %c10_170 = arith.constant 10 : index
    %c0_171 = arith.constant 0 : index
    %c0_172 = arith.constant 0 : index
    %163 = vector.load %arg2[%c1_169, %c10_170, %c0_171, %c0_172] : memref<2x25x8x512xf32, #tpu.memory_space<vmem>>, vector<1x1x8x512xf32>
    %164 = vector.shape_cast %163 : vector<1x1x8x512xf32> to vector<8x512xf32>
    %165 = arith.mulf %158, %164 : vector<8x512xf32>
    %166 = arith.addf %157, %165 : vector<8x512xf32>
    %c0_173 = arith.constant 0 : index
    %c63 = arith.constant 63 : index
    %167 = vector.load %arg7[%c0_173, %c63] : memref<8x640xf32, #tpu.memory_space<vmem>>, vector<8x512xf32>
    %c0_174 = arith.constant 0 : index
    %c11 = arith.constant 11 : index
    %c0_175 = arith.constant 0 : index
    %c0_176 = arith.constant 0 : index
    %168 = vector.load %arg2[%c0_174, %c11, %c0_175, %c0_176] : memref<2x25x8x512xf32, #tpu.memory_space<vmem>>, vector<1x1x8x512xf32>
    %169 = vector.shape_cast %168 : vector<1x1x8x512xf32> to vector<8x512xf32>
    %170 = arith.mulf %167, %169 : vector<8x512xf32>
    %171 = arith.addf %162, %170 : vector<8x512xf32>
    %c1_177 = arith.constant 1 : index
    %c11_178 = arith.constant 11 : index
    %c0_179 = arith.constant 0 : index
    %c0_180 = arith.constant 0 : index
    %172 = vector.load %arg2[%c1_177, %c11_178, %c0_179, %c0_180] : memref<2x25x8x512xf32, #tpu.memory_space<vmem>>, vector<1x1x8x512xf32>
    %173 = vector.shape_cast %172 : vector<1x1x8x512xf32> to vector<8x512xf32>
    %174 = arith.mulf %167, %173 : vector<8x512xf32>
    %175 = arith.addf %166, %174 : vector<8x512xf32>
    %c0_181 = arith.constant 0 : index
    %c64_182 = arith.constant 64 : index
    %176 = vector.load %arg7[%c0_181, %c64_182] : memref<8x640xf32, #tpu.memory_space<vmem>>, vector<8x512xf32>
    %c0_183 = arith.constant 0 : index
    %c12 = arith.constant 12 : index
    %c0_184 = arith.constant 0 : index
    %c0_185 = arith.constant 0 : index
    %177 = vector.load %arg2[%c0_183, %c12, %c0_184, %c0_185] : memref<2x25x8x512xf32, #tpu.memory_space<vmem>>, vector<1x1x8x512xf32>
    %178 = vector.shape_cast %177 : vector<1x1x8x512xf32> to vector<8x512xf32>
    %179 = arith.mulf %176, %178 : vector<8x512xf32>
    %180 = arith.addf %171, %179 : vector<8x512xf32>
    %c1_186 = arith.constant 1 : index
    %c12_187 = arith.constant 12 : index
    %c0_188 = arith.constant 0 : index
    %c0_189 = arith.constant 0 : index
    %181 = vector.load %arg2[%c1_186, %c12_187, %c0_188, %c0_189] : memref<2x25x8x512xf32, #tpu.memory_space<vmem>>, vector<1x1x8x512xf32>
    %182 = vector.shape_cast %181 : vector<1x1x8x512xf32> to vector<8x512xf32>
    %183 = arith.mulf %176, %182 : vector<8x512xf32>
    %184 = arith.addf %175, %183 : vector<8x512xf32>
    %c0_190 = arith.constant 0 : index
    %c65 = arith.constant 65 : index
    %185 = vector.load %arg7[%c0_190, %c65] : memref<8x640xf32, #tpu.memory_space<vmem>>, vector<8x512xf32>
    %c0_191 = arith.constant 0 : index
    %c13 = arith.constant 13 : index
    %c0_192 = arith.constant 0 : index
    %c0_193 = arith.constant 0 : index
    %186 = vector.load %arg2[%c0_191, %c13, %c0_192, %c0_193] : memref<2x25x8x512xf32, #tpu.memory_space<vmem>>, vector<1x1x8x512xf32>
    %187 = vector.shape_cast %186 : vector<1x1x8x512xf32> to vector<8x512xf32>
    %188 = arith.mulf %185, %187 : vector<8x512xf32>
    %189 = arith.addf %180, %188 : vector<8x512xf32>
    %c1_194 = arith.constant 1 : index
    %c13_195 = arith.constant 13 : index
    %c0_196 = arith.constant 0 : index
    %c0_197 = arith.constant 0 : index
    %190 = vector.load %arg2[%c1_194, %c13_195, %c0_196, %c0_197] : memref<2x25x8x512xf32, #tpu.memory_space<vmem>>, vector<1x1x8x512xf32>
    %191 = vector.shape_cast %190 : vector<1x1x8x512xf32> to vector<8x512xf32>
    %192 = arith.mulf %185, %191 : vector<8x512xf32>
    %193 = arith.addf %184, %192 : vector<8x512xf32>
    %c0_198 = arith.constant 0 : index
    %c66 = arith.constant 66 : index
    %194 = vector.load %arg7[%c0_198, %c66] : memref<8x640xf32, #tpu.memory_space<vmem>>, vector<8x512xf32>
    %c0_199 = arith.constant 0 : index
    %c14 = arith.constant 14 : index
    %c0_200 = arith.constant 0 : index
    %c0_201 = arith.constant 0 : index
    %195 = vector.load %arg2[%c0_199, %c14, %c0_200, %c0_201] : memref<2x25x8x512xf32, #tpu.memory_space<vmem>>, vector<1x1x8x512xf32>
    %196 = vector.shape_cast %195 : vector<1x1x8x512xf32> to vector<8x512xf32>
    %197 = arith.mulf %194, %196 : vector<8x512xf32>
    %198 = arith.addf %189, %197 : vector<8x512xf32>
    %c1_202 = arith.constant 1 : index
    %c14_203 = arith.constant 14 : index
    %c0_204 = arith.constant 0 : index
    %c0_205 = arith.constant 0 : index
    %199 = vector.load %arg2[%c1_202, %c14_203, %c0_204, %c0_205] : memref<2x25x8x512xf32, #tpu.memory_space<vmem>>, vector<1x1x8x512xf32>
    %200 = vector.shape_cast %199 : vector<1x1x8x512xf32> to vector<8x512xf32>
    %201 = arith.mulf %194, %200 : vector<8x512xf32>
    %202 = arith.addf %193, %201 : vector<8x512xf32>
    %c0_206 = arith.constant 0 : index
    %c82 = arith.constant 82 : index
    %203 = vector.load %arg7[%c0_206, %c82] : memref<8x640xf32, #tpu.memory_space<vmem>>, vector<8x512xf32>
    %c0_207 = arith.constant 0 : index
    %c15 = arith.constant 15 : index
    %c0_208 = arith.constant 0 : index
    %c0_209 = arith.constant 0 : index
    %204 = vector.load %arg2[%c0_207, %c15, %c0_208, %c0_209] : memref<2x25x8x512xf32, #tpu.memory_space<vmem>>, vector<1x1x8x512xf32>
    %205 = vector.shape_cast %204 : vector<1x1x8x512xf32> to vector<8x512xf32>
    %206 = arith.mulf %203, %205 : vector<8x512xf32>
    %207 = arith.addf %198, %206 : vector<8x512xf32>
    %c1_210 = arith.constant 1 : index
    %c15_211 = arith.constant 15 : index
    %c0_212 = arith.constant 0 : index
    %c0_213 = arith.constant 0 : index
    %208 = vector.load %arg2[%c1_210, %c15_211, %c0_212, %c0_213] : memref<2x25x8x512xf32, #tpu.memory_space<vmem>>, vector<1x1x8x512xf32>
    %209 = vector.shape_cast %208 : vector<1x1x8x512xf32> to vector<8x512xf32>
    %210 = arith.mulf %203, %209 : vector<8x512xf32>
    %211 = arith.addf %202, %210 : vector<8x512xf32>
    %c0_214 = arith.constant 0 : index
    %c83 = arith.constant 83 : index
    %212 = vector.load %arg7[%c0_214, %c83] : memref<8x640xf32, #tpu.memory_space<vmem>>, vector<8x512xf32>
    %c0_215 = arith.constant 0 : index
    %c16_216 = arith.constant 16 : index
    %c0_217 = arith.constant 0 : index
    %c0_218 = arith.constant 0 : index
    %213 = vector.load %arg2[%c0_215, %c16_216, %c0_217, %c0_218] : memref<2x25x8x512xf32, #tpu.memory_space<vmem>>, vector<1x1x8x512xf32>
    %214 = vector.shape_cast %213 : vector<1x1x8x512xf32> to vector<8x512xf32>
    %215 = arith.mulf %212, %214 : vector<8x512xf32>
    %216 = arith.addf %207, %215 : vector<8x512xf32>
    %c1_219 = arith.constant 1 : index
    %c16_220 = arith.constant 16 : index
    %c0_221 = arith.constant 0 : index
    %c0_222 = arith.constant 0 : index
    %217 = vector.load %arg2[%c1_219, %c16_220, %c0_221, %c0_222] : memref<2x25x8x512xf32, #tpu.memory_space<vmem>>, vector<1x1x8x512xf32>
    %218 = vector.shape_cast %217 : vector<1x1x8x512xf32> to vector<8x512xf32>
    %219 = arith.mulf %212, %218 : vector<8x512xf32>
    %220 = arith.addf %211, %219 : vector<8x512xf32>
    %c0_223 = arith.constant 0 : index
    %c84 = arith.constant 84 : index
    %221 = vector.load %arg7[%c0_223, %c84] : memref<8x640xf32, #tpu.memory_space<vmem>>, vector<8x512xf32>
    %c0_224 = arith.constant 0 : index
    %c17 = arith.constant 17 : index
    %c0_225 = arith.constant 0 : index
    %c0_226 = arith.constant 0 : index
    %222 = vector.load %arg2[%c0_224, %c17, %c0_225, %c0_226] : memref<2x25x8x512xf32, #tpu.memory_space<vmem>>, vector<1x1x8x512xf32>
    %223 = vector.shape_cast %222 : vector<1x1x8x512xf32> to vector<8x512xf32>
    %224 = arith.mulf %221, %223 : vector<8x512xf32>
    %225 = arith.addf %216, %224 : vector<8x512xf32>
    %c1_227 = arith.constant 1 : index
    %c17_228 = arith.constant 17 : index
    %c0_229 = arith.constant 0 : index
    %c0_230 = arith.constant 0 : index
    %226 = vector.load %arg2[%c1_227, %c17_228, %c0_229, %c0_230] : memref<2x25x8x512xf32, #tpu.memory_space<vmem>>, vector<1x1x8x512xf32>
    %227 = vector.shape_cast %226 : vector<1x1x8x512xf32> to vector<8x512xf32>
    %228 = arith.mulf %221, %227 : vector<8x512xf32>
    %229 = arith.addf %220, %228 : vector<8x512xf32>
    %c0_231 = arith.constant 0 : index
    %c85 = arith.constant 85 : index
    %230 = vector.load %arg7[%c0_231, %c85] : memref<8x640xf32, #tpu.memory_space<vmem>>, vector<8x512xf32>
    %c0_232 = arith.constant 0 : index
    %c18 = arith.constant 18 : index
    %c0_233 = arith.constant 0 : index
    %c0_234 = arith.constant 0 : index
    %231 = vector.load %arg2[%c0_232, %c18, %c0_233, %c0_234] : memref<2x25x8x512xf32, #tpu.memory_space<vmem>>, vector<1x1x8x512xf32>
    %232 = vector.shape_cast %231 : vector<1x1x8x512xf32> to vector<8x512xf32>
    %233 = arith.mulf %230, %232 : vector<8x512xf32>
    %234 = arith.addf %225, %233 : vector<8x512xf32>
    %c1_235 = arith.constant 1 : index
    %c18_236 = arith.constant 18 : index
    %c0_237 = arith.constant 0 : index
    %c0_238 = arith.constant 0 : index
    %235 = vector.load %arg2[%c1_235, %c18_236, %c0_237, %c0_238] : memref<2x25x8x512xf32, #tpu.memory_space<vmem>>, vector<1x1x8x512xf32>
    %236 = vector.shape_cast %235 : vector<1x1x8x512xf32> to vector<8x512xf32>
    %237 = arith.mulf %230, %236 : vector<8x512xf32>
    %238 = arith.addf %229, %237 : vector<8x512xf32>
    %c0_239 = arith.constant 0 : index
    %c86 = arith.constant 86 : index
    %239 = vector.load %arg7[%c0_239, %c86] : memref<8x640xf32, #tpu.memory_space<vmem>>, vector<8x512xf32>
    %c0_240 = arith.constant 0 : index
    %c19 = arith.constant 19 : index
    %c0_241 = arith.constant 0 : index
    %c0_242 = arith.constant 0 : index
    %240 = vector.load %arg2[%c0_240, %c19, %c0_241, %c0_242] : memref<2x25x8x512xf32, #tpu.memory_space<vmem>>, vector<1x1x8x512xf32>
    %241 = vector.shape_cast %240 : vector<1x1x8x512xf32> to vector<8x512xf32>
    %242 = arith.mulf %239, %241 : vector<8x512xf32>
    %243 = arith.addf %234, %242 : vector<8x512xf32>
    %c1_243 = arith.constant 1 : index
    %c19_244 = arith.constant 19 : index
    %c0_245 = arith.constant 0 : index
    %c0_246 = arith.constant 0 : index
    %244 = vector.load %arg2[%c1_243, %c19_244, %c0_245, %c0_246] : memref<2x25x8x512xf32, #tpu.memory_space<vmem>>, vector<1x1x8x512xf32>
    %245 = vector.shape_cast %244 : vector<1x1x8x512xf32> to vector<8x512xf32>
    %246 = arith.mulf %239, %245 : vector<8x512xf32>
    %247 = arith.addf %238, %246 : vector<8x512xf32>
    %c0_247 = arith.constant 0 : index
    %c102 = arith.constant 102 : index
    %248 = vector.load %arg7[%c0_247, %c102] : memref<8x640xf32, #tpu.memory_space<vmem>>, vector<8x512xf32>
    %c0_248 = arith.constant 0 : index
    %c20 = arith.constant 20 : index
    %c0_249 = arith.constant 0 : index
    %c0_250 = arith.constant 0 : index
    %249 = vector.load %arg2[%c0_248, %c20, %c0_249, %c0_250] : memref<2x25x8x512xf32, #tpu.memory_space<vmem>>, vector<1x1x8x512xf32>
    %250 = vector.shape_cast %249 : vector<1x1x8x512xf32> to vector<8x512xf32>
    %251 = arith.mulf %248, %250 : vector<8x512xf32>
    %252 = arith.addf %243, %251 : vector<8x512xf32>
    %c1_251 = arith.constant 1 : index
    %c20_252 = arith.constant 20 : index
    %c0_253 = arith.constant 0 : index
    %c0_254 = arith.constant 0 : index
    %253 = vector.load %arg2[%c1_251, %c20_252, %c0_253, %c0_254] : memref<2x25x8x512xf32, #tpu.memory_space<vmem>>, vector<1x1x8x512xf32>
    %254 = vector.shape_cast %253 : vector<1x1x8x512xf32> to vector<8x512xf32>
    %255 = arith.mulf %248, %254 : vector<8x512xf32>
    %256 = arith.addf %247, %255 : vector<8x512xf32>
    %c0_255 = arith.constant 0 : index
    %c103 = arith.constant 103 : index
    %257 = vector.load %arg7[%c0_255, %c103] : memref<8x640xf32, #tpu.memory_space<vmem>>, vector<8x512xf32>
    %c0_256 = arith.constant 0 : index
    %c21 = arith.constant 21 : index
    %c0_257 = arith.constant 0 : index
    %c0_258 = arith.constant 0 : index
    %258 = vector.load %arg2[%c0_256, %c21, %c0_257, %c0_258] : memref<2x25x8x512xf32, #tpu.memory_space<vmem>>, vector<1x1x8x512xf32>
    %259 = vector.shape_cast %258 : vector<1x1x8x512xf32> to vector<8x512xf32>
    %260 = arith.mulf %257, %259 : vector<8x512xf32>
    %261 = arith.addf %252, %260 : vector<8x512xf32>
    %c1_259 = arith.constant 1 : index
    %c21_260 = arith.constant 21 : index
    %c0_261 = arith.constant 0 : index
    %c0_262 = arith.constant 0 : index
    %262 = vector.load %arg2[%c1_259, %c21_260, %c0_261, %c0_262] : memref<2x25x8x512xf32, #tpu.memory_space<vmem>>, vector<1x1x8x512xf32>
    %263 = vector.shape_cast %262 : vector<1x1x8x512xf32> to vector<8x512xf32>
    %264 = arith.mulf %257, %263 : vector<8x512xf32>
    %265 = arith.addf %256, %264 : vector<8x512xf32>
    %c0_263 = arith.constant 0 : index
    %c104 = arith.constant 104 : index
    %266 = vector.load %arg7[%c0_263, %c104] : memref<8x640xf32, #tpu.memory_space<vmem>>, vector<8x512xf32>
    %c0_264 = arith.constant 0 : index
    %c22_265 = arith.constant 22 : index
    %c0_266 = arith.constant 0 : index
    %c0_267 = arith.constant 0 : index
    %267 = vector.load %arg2[%c0_264, %c22_265, %c0_266, %c0_267] : memref<2x25x8x512xf32, #tpu.memory_space<vmem>>, vector<1x1x8x512xf32>
    %268 = vector.shape_cast %267 : vector<1x1x8x512xf32> to vector<8x512xf32>
    %269 = arith.mulf %266, %268 : vector<8x512xf32>
    %270 = arith.addf %261, %269 : vector<8x512xf32>
    %c1_268 = arith.constant 1 : index
    %c22_269 = arith.constant 22 : index
    %c0_270 = arith.constant 0 : index
    %c0_271 = arith.constant 0 : index
    %271 = vector.load %arg2[%c1_268, %c22_269, %c0_270, %c0_271] : memref<2x25x8x512xf32, #tpu.memory_space<vmem>>, vector<1x1x8x512xf32>
    %272 = vector.shape_cast %271 : vector<1x1x8x512xf32> to vector<8x512xf32>
    %273 = arith.mulf %266, %272 : vector<8x512xf32>
    %274 = arith.addf %265, %273 : vector<8x512xf32>
    %c0_272 = arith.constant 0 : index
    %c105 = arith.constant 105 : index
    %275 = vector.load %arg7[%c0_272, %c105] : memref<8x640xf32, #tpu.memory_space<vmem>>, vector<8x512xf32>
    %c0_273 = arith.constant 0 : index
    %c23_274 = arith.constant 23 : index
    %c0_275 = arith.constant 0 : index
    %c0_276 = arith.constant 0 : index
    %276 = vector.load %arg2[%c0_273, %c23_274, %c0_275, %c0_276] : memref<2x25x8x512xf32, #tpu.memory_space<vmem>>, vector<1x1x8x512xf32>
    %277 = vector.shape_cast %276 : vector<1x1x8x512xf32> to vector<8x512xf32>
    %278 = arith.mulf %275, %277 : vector<8x512xf32>
    %279 = arith.addf %270, %278 : vector<8x512xf32>
    %c1_277 = arith.constant 1 : index
    %c23_278 = arith.constant 23 : index
    %c0_279 = arith.constant 0 : index
    %c0_280 = arith.constant 0 : index
    %280 = vector.load %arg2[%c1_277, %c23_278, %c0_279, %c0_280] : memref<2x25x8x512xf32, #tpu.memory_space<vmem>>, vector<1x1x8x512xf32>
    %281 = vector.shape_cast %280 : vector<1x1x8x512xf32> to vector<8x512xf32>
    %282 = arith.mulf %275, %281 : vector<8x512xf32>
    %283 = arith.addf %274, %282 : vector<8x512xf32>
    %c0_281 = arith.constant 0 : index
    %c106_282 = arith.constant 106 : index
    %284 = vector.load %arg7[%c0_281, %c106_282] : memref<8x640xf32, #tpu.memory_space<vmem>>, vector<8x512xf32>
    %c0_283 = arith.constant 0 : index
    %c24_284 = arith.constant 24 : index
    %c0_285 = arith.constant 0 : index
    %c0_286 = arith.constant 0 : index
    %285 = vector.load %arg2[%c0_283, %c24_284, %c0_285, %c0_286] : memref<2x25x8x512xf32, #tpu.memory_space<vmem>>, vector<1x1x8x512xf32>
    %286 = vector.shape_cast %285 : vector<1x1x8x512xf32> to vector<8x512xf32>
    %287 = arith.mulf %284, %286 : vector<8x512xf32>
    %288 = arith.addf %279, %287 : vector<8x512xf32>
    %c1_287 = arith.constant 1 : index
    %c24_288 = arith.constant 24 : index
    %c0_289 = arith.constant 0 : index
    %c0_290 = arith.constant 0 : index
    %289 = vector.load %arg2[%c1_287, %c24_288, %c0_289, %c0_290] : memref<2x25x8x512xf32, #tpu.memory_space<vmem>>, vector<1x1x8x512xf32>
    %290 = vector.shape_cast %289 : vector<1x1x8x512xf32> to vector<8x512xf32>
    %291 = arith.mulf %284, %290 : vector<8x512xf32>
    %292 = arith.addf %283, %291 : vector<8x512xf32>
    %c0_291 = arith.constant 0 : index
    %c0_292 = arith.constant 0 : index
    %293 = vector.load %arg5[%c0_291, %c0_292] : memref<8x512xf32, #tpu.memory_space<vmem>>, vector<8x512xf32>
    %294 = arith.mulf %288, %293 : vector<8x512xf32>
    %cst_293 = arith.constant dense<0.000000e+00> : vector<8xf32>
    %295 = vector.multi_reduction <add>, %294, %cst_293 [1] : vector<8x512xf32> to vector<8xf32>
    %296 = vector.shape_cast %295 : vector<8xf32> to vector<8x1xf32>
    %cst_294 = arith.constant 3.906250e-03 : f32
    %297 = vector.broadcast %cst_294 : f32 to vector<8x1xf32>
    %298 = arith.mulf %296, %297 : vector<8x1xf32>
    %299 = vector.broadcast %298 : vector<8x1xf32> to vector<8x512xf32>
    %300 = arith.subf %294, %299 : vector<8x512xf32>
    %301 = arith.mulf %300, %293 : vector<8x512xf32>
    %302 = arith.mulf %301, %300 : vector<8x512xf32>
    %cst_295 = arith.constant dense<0.000000e+00> : vector<8xf32>
    %303 = vector.multi_reduction <add>, %302, %cst_295 [1] : vector<8x512xf32> to vector<8xf32>
    %304 = vector.shape_cast %303 : vector<8xf32> to vector<8x1xf32>
    %cst_296 = arith.constant 3.906250e-03 : f32
    %305 = vector.broadcast %cst_296 : f32 to vector<8x1xf32>
    %306 = arith.mulf %304, %305 : vector<8x1xf32>
    %cst_297 = arith.constant 9.99999974E-6 : f32
    %307 = vector.broadcast %cst_297 : f32 to vector<8x1xf32>
    %308 = arith.addf %306, %307 : vector<8x1xf32>
    %309 = math.rsqrt %308 : vector<8x1xf32>
    %310 = vector.broadcast %309 : vector<8x1xf32> to vector<8x512xf32>
    %311 = arith.mulf %300, %310 : vector<8x512xf32>
    %cst_298 = arith.constant 0.000000e+00 : f32
    %312 = vector.broadcast %cst_298 : f32 to vector<8x512xf32>
    %313 = arith.maximumf %311, %312 : vector<8x512xf32>
    %314 = arith.mulf %292, %293 : vector<8x512xf32>
    %cst_299 = arith.constant dense<0.000000e+00> : vector<8xf32>
    %315 = vector.multi_reduction <add>, %314, %cst_299 [1] : vector<8x512xf32> to vector<8xf32>
    %316 = vector.shape_cast %315 : vector<8xf32> to vector<8x1xf32>
    %cst_300 = arith.constant 3.906250e-03 : f32
    %317 = vector.broadcast %cst_300 : f32 to vector<8x1xf32>
    %318 = arith.mulf %316, %317 : vector<8x1xf32>
    %319 = vector.broadcast %318 : vector<8x1xf32> to vector<8x512xf32>
    %320 = arith.subf %314, %319 : vector<8x512xf32>
    %321 = arith.mulf %320, %293 : vector<8x512xf32>
    %322 = arith.mulf %321, %320 : vector<8x512xf32>
    %cst_301 = arith.constant dense<0.000000e+00> : vector<8xf32>
    %323 = vector.multi_reduction <add>, %322, %cst_301 [1] : vector<8x512xf32> to vector<8xf32>
    %324 = vector.shape_cast %323 : vector<8xf32> to vector<8x1xf32>
    %cst_302 = arith.constant 3.906250e-03 : f32
    %325 = vector.broadcast %cst_302 : f32 to vector<8x1xf32>
    %326 = arith.mulf %324, %325 : vector<8x1xf32>
    %cst_303 = arith.constant 9.99999974E-6 : f32
    %327 = vector.broadcast %cst_303 : f32 to vector<8x1xf32>
    %328 = arith.addf %326, %327 : vector<8x1xf32>
    %329 = math.rsqrt %328 : vector<8x1xf32>
    %330 = vector.broadcast %329 : vector<8x1xf32> to vector<8x512xf32>
    %331 = arith.mulf %320, %330 : vector<8x512xf32>
    %cst_304 = arith.constant 0.000000e+00 : f32
    %332 = vector.broadcast %cst_304 : f32 to vector<8x512xf32>
    %333 = arith.maximumf %331, %332 : vector<8x512xf32>
    %334 = arith.addf %313, %333 : vector<8x512xf32>
    %335 = vector.extract_strided_slice %334 {offsets = [0, 0], sizes = [4, 512], strides = [1, 1]} : vector<8x512xf32> to vector<4x512xf32>
    %336 = vector.extract_strided_slice %334 {offsets = [4, 0], sizes = [4, 512], strides = [1, 1]} : vector<8x512xf32> to vector<4x512xf32>
    %337 = arith.addf %335, %336 : vector<4x512xf32>
    %c0_305 = arith.constant 0 : index
    %c0_306 = arith.constant 0 : index
    %338 = vector.load %arg3[%c0_305, %c0_306] : memref<4x4xf32, #tpu.memory_space<vmem>>, vector<4x4xf32>
    %339 = vector.extract_strided_slice %338 {offsets = [0, 0], sizes = [4, 1], strides = [1, 1]} : vector<4x4xf32> to vector<4x1xf32>
    %340 = vector.extract_strided_slice %337 {offsets = [0, 0], sizes = [1, 512], strides = [1, 1]} : vector<4x512xf32> to vector<1x512xf32>
    %341 = vector.broadcast %339 : vector<4x1xf32> to vector<4x512xf32>
    %342 = vector.broadcast %340 : vector<1x512xf32> to vector<4x512xf32>
    %343 = arith.mulf %341, %342 : vector<4x512xf32>
    %344 = vector.extract_strided_slice %338 {offsets = [0, 1], sizes = [4, 1], strides = [1, 1]} : vector<4x4xf32> to vector<4x1xf32>
    %345 = vector.extract_strided_slice %337 {offsets = [1, 0], sizes = [1, 512], strides = [1, 1]} : vector<4x512xf32> to vector<1x512xf32>
    %346 = vector.broadcast %344 : vector<4x1xf32> to vector<4x512xf32>
    %347 = vector.broadcast %345 : vector<1x512xf32> to vector<4x512xf32>
    %348 = arith.mulf %346, %347 : vector<4x512xf32>
    %349 = arith.addf %343, %348 : vector<4x512xf32>
    %350 = vector.extract_strided_slice %338 {offsets = [0, 2], sizes = [4, 1], strides = [1, 1]} : vector<4x4xf32> to vector<4x1xf32>
    %351 = vector.extract_strided_slice %337 {offsets = [2, 0], sizes = [1, 512], strides = [1, 1]} : vector<4x512xf32> to vector<1x512xf32>
    %352 = vector.broadcast %350 : vector<4x1xf32> to vector<4x512xf32>
    %353 = vector.broadcast %351 : vector<1x512xf32> to vector<4x512xf32>
    %354 = arith.mulf %352, %353 : vector<4x512xf32>
    %355 = arith.addf %349, %354 : vector<4x512xf32>
    %356 = vector.extract_strided_slice %338 {offsets = [0, 3], sizes = [4, 1], strides = [1, 1]} : vector<4x4xf32> to vector<4x1xf32>
    %357 = vector.extract_strided_slice %337 {offsets = [3, 0], sizes = [1, 512], strides = [1, 1]} : vector<4x512xf32> to vector<1x512xf32>
    %358 = vector.broadcast %356 : vector<4x1xf32> to vector<4x512xf32>
    %359 = vector.broadcast %357 : vector<1x512xf32> to vector<4x512xf32>
    %360 = arith.mulf %358, %359 : vector<4x512xf32>
    %361 = arith.addf %355, %360 : vector<4x512xf32>
    %c0_307 = arith.constant 0 : index
    %c0_308 = arith.constant 0 : index
    %362 = vector.load %arg4[%c0_307, %c0_308] : memref<4x1xf32, #tpu.memory_space<vmem>>, vector<4x1xf32>
    %363 = vector.broadcast %362 : vector<4x1xf32> to vector<4x512xf32>
    %364 = arith.addf %361, %363 : vector<4x512xf32>
    %c0_309 = arith.constant 0 : index
    %c64_310 = arith.constant 64 : index
    %365 = vector.load %arg7[%c0_309, %c64_310] : memref<8x640xf32, #tpu.memory_space<vmem>>, vector<4x512xf32>
    tpu.vector_store %arg7[%c0_309, %c64_310], %364 {strides = array<i32>} : memref<8x640xf32, #tpu.memory_space<vmem>>, vector<4x512xf32>,
    %c0_311 = arith.constant 0 : index
    %c106_312 = arith.constant 106 : index
    %366 = vector.load %arg7[%c0_311, %c106_312] : memref<8x640xf32, #tpu.memory_space<vmem>>, vector<4x16xf32>
    %c0_313 = arith.constant 0 : index
    %c0_314 = arith.constant 0 : index
    %c0_315 = arith.constant 0 : index
    %367 = vector.load %arg6[%c0_313, %c0_314, %c0_315] : memref<1x4x256xf32, #tpu.memory_space<vmem>>, vector<1x4x16xf32>
    %368 = vector.shape_cast %367 : vector<1x4x16xf32> to vector<4x16xf32>
    %369 = vector.shape_cast %366 : vector<4x16xf32> to vector<1x4x16xf32>
    tpu.vector_store %arg6[%c0_313, %c0_314, %c0_315], %369 {strides = array<i32>} : memref<1x4x256xf32, #tpu.memory_space<vmem>>, vector<1x4x16xf32>,
    %c0_316 = arith.constant 0 : index
    %c126_317 = arith.constant 126 : index
    %370 = vector.load %arg7[%c0_316, %c126_317] : memref<8x640xf32, #tpu.memory_space<vmem>>, vector<4x16xf32>
    %c0_318 = arith.constant 0 : index
    %c0_319 = arith.constant 0 : index
    %c16_320 = arith.constant 16 : index
    %371 = vector.load %arg6[%c0_318, %c0_319, %c16_320] : memref<1x4x256xf32, #tpu.memory_space<vmem>>, vector<1x4x16xf32>
    %372 = vector.shape_cast %371 : vector<1x4x16xf32> to vector<4x16xf32>
    %373 = vector.shape_cast %370 : vector<4x16xf32> to vector<1x4x16xf32>
    tpu.vector_store %arg6[%c0_318, %c0_319, %c16_320], %373 {strides = array<i32>} : memref<1x4x256xf32, #tpu.memory_space<vmem>>, vector<1x4x16xf32>,
    %c0_321 = arith.constant 0 : index
    %c146_322 = arith.constant 146 : index
    %374 = vector.load %arg7[%c0_321, %c146_322] : memref<8x640xf32, #tpu.memory_space<vmem>>, vector<4x16xf32>
    %c0_323 = arith.constant 0 : index
    %c0_324 = arith.constant 0 : index
    %c32_325 = arith.constant 32 : index
    %375 = vector.load %arg6[%c0_323, %c0_324, %c32_325] : memref<1x4x256xf32, #tpu.memory_space<vmem>>, vector<1x4x16xf32>
    %376 = vector.shape_cast %375 : vector<1x4x16xf32> to vector<4x16xf32>
    %377 = vector.shape_cast %374 : vector<4x16xf32> to vector<1x4x16xf32>
    tpu.vector_store %arg6[%c0_323, %c0_324, %c32_325], %377 {strides = array<i32>} : memref<1x4x256xf32, #tpu.memory_space<vmem>>, vector<1x4x16xf32>,
    %c0_326 = arith.constant 0 : index
    %c166_327 = arith.constant 166 : index
    %378 = vector.load %arg7[%c0_326, %c166_327] : memref<8x640xf32, #tpu.memory_space<vmem>>, vector<4x16xf32>
    %c0_328 = arith.constant 0 : index
    %c0_329 = arith.constant 0 : index
    %c48_330 = arith.constant 48 : index
    %379 = vector.load %arg6[%c0_328, %c0_329, %c48_330] : memref<1x4x256xf32, #tpu.memory_space<vmem>>, vector<1x4x16xf32>
    %380 = vector.shape_cast %379 : vector<1x4x16xf32> to vector<4x16xf32>
    %381 = vector.shape_cast %378 : vector<4x16xf32> to vector<1x4x16xf32>
    tpu.vector_store %arg6[%c0_328, %c0_329, %c48_330], %381 {strides = array<i32>} : memref<1x4x256xf32, #tpu.memory_space<vmem>>, vector<1x4x16xf32>,
    %c0_331 = arith.constant 0 : index
    %c186_332 = arith.constant 186 : index
    %382 = vector.load %arg7[%c0_331, %c186_332] : memref<8x640xf32, #tpu.memory_space<vmem>>, vector<4x16xf32>
    %c0_333 = arith.constant 0 : index
    %c0_334 = arith.constant 0 : index
    %c64_335 = arith.constant 64 : index
    %383 = vector.load %arg6[%c0_333, %c0_334, %c64_335] : memref<1x4x256xf32, #tpu.memory_space<vmem>>, vector<1x4x16xf32>
    %384 = vector.shape_cast %383 : vector<1x4x16xf32> to vector<4x16xf32>
    %385 = vector.shape_cast %382 : vector<4x16xf32> to vector<1x4x16xf32>
    tpu.vector_store %arg6[%c0_333, %c0_334, %c64_335], %385 {strides = array<i32>} : memref<1x4x256xf32, #tpu.memory_space<vmem>>, vector<1x4x16xf32>,
    %c0_336 = arith.constant 0 : index
    %c206_337 = arith.constant 206 : index
    %386 = vector.load %arg7[%c0_336, %c206_337] : memref<8x640xf32, #tpu.memory_space<vmem>>, vector<4x16xf32>
    %c0_338 = arith.constant 0 : index
    %c0_339 = arith.constant 0 : index
    %c80_340 = arith.constant 80 : index
    %387 = vector.load %arg6[%c0_338, %c0_339, %c80_340] : memref<1x4x256xf32, #tpu.memory_space<vmem>>, vector<1x4x16xf32>
    %388 = vector.shape_cast %387 : vector<1x4x16xf32> to vector<4x16xf32>
    %389 = vector.shape_cast %386 : vector<4x16xf32> to vector<1x4x16xf32>
    tpu.vector_store %arg6[%c0_338, %c0_339, %c80_340], %389 {strides = array<i32>} : memref<1x4x256xf32, #tpu.memory_space<vmem>>, vector<1x4x16xf32>,
    %c0_341 = arith.constant 0 : index
    %c226_342 = arith.constant 226 : index
    %390 = vector.load %arg7[%c0_341, %c226_342] : memref<8x640xf32, #tpu.memory_space<vmem>>, vector<4x16xf32>
    %c0_343 = arith.constant 0 : index
    %c0_344 = arith.constant 0 : index
    %c96_345 = arith.constant 96 : index
    %391 = vector.load %arg6[%c0_343, %c0_344, %c96_345] : memref<1x4x256xf32, #tpu.memory_space<vmem>>, vector<1x4x16xf32>
    %392 = vector.shape_cast %391 : vector<1x4x16xf32> to vector<4x16xf32>
    %393 = vector.shape_cast %390 : vector<4x16xf32> to vector<1x4x16xf32>
    tpu.vector_store %arg6[%c0_343, %c0_344, %c96_345], %393 {strides = array<i32>} : memref<1x4x256xf32, #tpu.memory_space<vmem>>, vector<1x4x16xf32>,
    %c0_346 = arith.constant 0 : index
    %c246_347 = arith.constant 246 : index
    %394 = vector.load %arg7[%c0_346, %c246_347] : memref<8x640xf32, #tpu.memory_space<vmem>>, vector<4x16xf32>
    %c0_348 = arith.constant 0 : index
    %c0_349 = arith.constant 0 : index
    %c112_350 = arith.constant 112 : index
    %395 = vector.load %arg6[%c0_348, %c0_349, %c112_350] : memref<1x4x256xf32, #tpu.memory_space<vmem>>, vector<1x4x16xf32>
    %396 = vector.shape_cast %395 : vector<1x4x16xf32> to vector<4x16xf32>
    %397 = vector.shape_cast %394 : vector<4x16xf32> to vector<1x4x16xf32>
    tpu.vector_store %arg6[%c0_348, %c0_349, %c112_350], %397 {strides = array<i32>} : memref<1x4x256xf32, #tpu.memory_space<vmem>>, vector<1x4x16xf32>,
    %c0_351 = arith.constant 0 : index
    %c266_352 = arith.constant 266 : index
    %398 = vector.load %arg7[%c0_351, %c266_352] : memref<8x640xf32, #tpu.memory_space<vmem>>, vector<4x16xf32>
    %c0_353 = arith.constant 0 : index
    %c0_354 = arith.constant 0 : index
    %c128_355 = arith.constant 128 : index
    %399 = vector.load %arg6[%c0_353, %c0_354, %c128_355] : memref<1x4x256xf32, #tpu.memory_space<vmem>>, vector<1x4x16xf32>
    %400 = vector.shape_cast %399 : vector<1x4x16xf32> to vector<4x16xf32>
    %401 = vector.shape_cast %398 : vector<4x16xf32> to vector<1x4x16xf32>
    tpu.vector_store %arg6[%c0_353, %c0_354, %c128_355], %401 {strides = array<i32>} : memref<1x4x256xf32, #tpu.memory_space<vmem>>, vector<1x4x16xf32>,
    %c0_356 = arith.constant 0 : index
    %c286_357 = arith.constant 286 : index
    %402 = vector.load %arg7[%c0_356, %c286_357] : memref<8x640xf32, #tpu.memory_space<vmem>>, vector<4x16xf32>
    %c0_358 = arith.constant 0 : index
    %c0_359 = arith.constant 0 : index
    %c144_360 = arith.constant 144 : index
    %403 = vector.load %arg6[%c0_358, %c0_359, %c144_360] : memref<1x4x256xf32, #tpu.memory_space<vmem>>, vector<1x4x16xf32>
    %404 = vector.shape_cast %403 : vector<1x4x16xf32> to vector<4x16xf32>
    %405 = vector.shape_cast %402 : vector<4x16xf32> to vector<1x4x16xf32>
    tpu.vector_store %arg6[%c0_358, %c0_359, %c144_360], %405 {strides = array<i32>} : memref<1x4x256xf32, #tpu.memory_space<vmem>>, vector<1x4x16xf32>,
    %c0_361 = arith.constant 0 : index
    %c306_362 = arith.constant 306 : index
    %406 = vector.load %arg7[%c0_361, %c306_362] : memref<8x640xf32, #tpu.memory_space<vmem>>, vector<4x16xf32>
    %c0_363 = arith.constant 0 : index
    %c0_364 = arith.constant 0 : index
    %c160_365 = arith.constant 160 : index
    %407 = vector.load %arg6[%c0_363, %c0_364, %c160_365] : memref<1x4x256xf32, #tpu.memory_space<vmem>>, vector<1x4x16xf32>
    %408 = vector.shape_cast %407 : vector<1x4x16xf32> to vector<4x16xf32>
    %409 = vector.shape_cast %406 : vector<4x16xf32> to vector<1x4x16xf32>
    tpu.vector_store %arg6[%c0_363, %c0_364, %c160_365], %409 {strides = array<i32>} : memref<1x4x256xf32, #tpu.memory_space<vmem>>, vector<1x4x16xf32>,
    %c0_366 = arith.constant 0 : index
    %c326_367 = arith.constant 326 : index
    %410 = vector.load %arg7[%c0_366, %c326_367] : memref<8x640xf32, #tpu.memory_space<vmem>>, vector<4x16xf32>
    %c0_368 = arith.constant 0 : index
    %c0_369 = arith.constant 0 : index
    %c176_370 = arith.constant 176 : index
    %411 = vector.load %arg6[%c0_368, %c0_369, %c176_370] : memref<1x4x256xf32, #tpu.memory_space<vmem>>, vector<1x4x16xf32>
    %412 = vector.shape_cast %411 : vector<1x4x16xf32> to vector<4x16xf32>
    %413 = vector.shape_cast %410 : vector<4x16xf32> to vector<1x4x16xf32>
    tpu.vector_store %arg6[%c0_368, %c0_369, %c176_370], %413 {strides = array<i32>} : memref<1x4x256xf32, #tpu.memory_space<vmem>>, vector<1x4x16xf32>,
    %c0_371 = arith.constant 0 : index
    %c346_372 = arith.constant 346 : index
    %414 = vector.load %arg7[%c0_371, %c346_372] : memref<8x640xf32, #tpu.memory_space<vmem>>, vector<4x16xf32>
    %c0_373 = arith.constant 0 : index
    %c0_374 = arith.constant 0 : index
    %c192_375 = arith.constant 192 : index
    %415 = vector.load %arg6[%c0_373, %c0_374, %c192_375] : memref<1x4x256xf32, #tpu.memory_space<vmem>>, vector<1x4x16xf32>
    %416 = vector.shape_cast %415 : vector<1x4x16xf32> to vector<4x16xf32>
    %417 = vector.shape_cast %414 : vector<4x16xf32> to vector<1x4x16xf32>
    tpu.vector_store %arg6[%c0_373, %c0_374, %c192_375], %417 {strides = array<i32>} : memref<1x4x256xf32, #tpu.memory_space<vmem>>, vector<1x4x16xf32>,
    %c0_376 = arith.constant 0 : index
    %c366_377 = arith.constant 366 : index
    %418 = vector.load %arg7[%c0_376, %c366_377] : memref<8x640xf32, #tpu.memory_space<vmem>>, vector<4x16xf32>
    %c0_378 = arith.constant 0 : index
    %c0_379 = arith.constant 0 : index
    %c208_380 = arith.constant 208 : index
    %419 = vector.load %arg6[%c0_378, %c0_379, %c208_380] : memref<1x4x256xf32, #tpu.memory_space<vmem>>, vector<1x4x16xf32>
    %420 = vector.shape_cast %419 : vector<1x4x16xf32> to vector<4x16xf32>
    %421 = vector.shape_cast %418 : vector<4x16xf32> to vector<1x4x16xf32>
    tpu.vector_store %arg6[%c0_378, %c0_379, %c208_380], %421 {strides = array<i32>} : memref<1x4x256xf32, #tpu.memory_space<vmem>>, vector<1x4x16xf32>,
    %c0_381 = arith.constant 0 : index
    %c386_382 = arith.constant 386 : index
    %422 = vector.load %arg7[%c0_381, %c386_382] : memref<8x640xf32, #tpu.memory_space<vmem>>, vector<4x16xf32>
    %c0_383 = arith.constant 0 : index
    %c0_384 = arith.constant 0 : index
    %c224_385 = arith.constant 224 : index
    %423 = vector.load %arg6[%c0_383, %c0_384, %c224_385] : memref<1x4x256xf32, #tpu.memory_space<vmem>>, vector<1x4x16xf32>
    %424 = vector.shape_cast %423 : vector<1x4x16xf32> to vector<4x16xf32>
    %425 = vector.shape_cast %422 : vector<4x16xf32> to vector<1x4x16xf32>
    tpu.vector_store %arg6[%c0_383, %c0_384, %c224_385], %425 {strides = array<i32>} : memref<1x4x256xf32, #tpu.memory_space<vmem>>, vector<1x4x16xf32>,
    %c0_386 = arith.constant 0 : index
    %c406_387 = arith.constant 406 : index
    %426 = vector.load %arg7[%c0_386, %c406_387] : memref<8x640xf32, #tpu.memory_space<vmem>>, vector<4x16xf32>
    %c0_388 = arith.constant 0 : index
    %c0_389 = arith.constant 0 : index
    %c240_390 = arith.constant 240 : index
    %427 = vector.load %arg6[%c0_388, %c0_389, %c240_390] : memref<1x4x256xf32, #tpu.memory_space<vmem>>, vector<1x4x16xf32>
    %428 = vector.shape_cast %427 : vector<1x4x16xf32> to vector<4x16xf32>
    %429 = vector.shape_cast %426 : vector<4x16xf32> to vector<1x4x16xf32>
    tpu.vector_store %arg6[%c0_388, %c0_389, %c240_390], %429 {strides = array<i32>} : memref<1x4x256xf32, #tpu.memory_space<vmem>>, vector<1x4x16xf32>,
    return
  }
  func.func @transform_0(%arg0: i32) -> (i32, i32, i32) {
    %c0_i32 = arith.constant 0 : i32
    %c0_i32_0 = arith.constant 0 : i32
    %c0_i32_1 = arith.constant 0 : i32
    return %arg0, %c0_i32, %c0_i32_0 : i32, i32, i32
  }
  func.func @transform_1(%arg0: i32) -> (i32, i32, i32, i32) {
    %c0_i32 = arith.constant 0 : i32
    %c0_i32_0 = arith.constant 0 : i32
    %c0_i32_1 = arith.constant 0 : i32
    %c0_i32_2 = arith.constant 0 : i32
    %c0_i32_3 = arith.constant 0 : i32
    return %c0_i32, %c0_i32_0, %c0_i32_1, %c0_i32_2 : i32, i32, i32, i32
  }
  func.func @transform_2(%arg0: i32) -> (i32, i32) {
    %c0_i32 = arith.constant 0 : i32
    %c0_i32_0 = arith.constant 0 : i32
    %c0_i32_1 = arith.constant 0 : i32
    return %c0_i32, %c0_i32_0 : i32, i32
  }
  func.func @transform_3(%arg0: i32) -> (i32, i32) {
    %c0_i32 = arith.constant 0 : i32
    %c0_i32_0 = arith.constant 0 : i32
    %c0_i32_1 = arith.constant 0 : i32
    return %c0_i32, %c0_i32_0 : i32, i32
  }
  func.func @transform_4(%arg0: i32) -> (i32, i32) {
    %c0_i32 = arith.constant 0 : i32
    %c0_i32_0 = arith.constant 0 : i32
    %c0_i32_1 = arith.constant 0 : i32
    return %c0_i32, %c0_i32_0 : i32, i32
  }
  func.func @transform_5(%arg0: i32) -> (i32, i32, i32) {
    %c0_i32 = arith.constant 0 : i32
    %c0_i32_0 = arith.constant 0 : i32
    %c0_i32_1 = arith.constant 0 : i32
    return %arg0, %c0_i32, %c0_i32_0 : i32, i32, i32
  }
}

</mosaic_0001>

<llo_original>
// kernel: basic_block2_forward.1
$region0: #{basic_block2_forward.1}
  #allocation0 [shape = 'u32[]', space=smem, size = 0x4, offset = 0x4, fixed_abs, tag = 'smem constant byte address 0x4 - core index']
  #allocation1 [shape = 'u32[72,128]{1,0:T(1,128)}', space=vmem, size = 0x9000, scoped, tag = 'internal scratch']
  #allocation2 [shape = 'f32[8,640]{1,0:T(8,128)}', space=vmem, size = 0x5000, scoped, tag = 'scratch operand']
  %s0 = inlined_call_operand.vmem [shape: f32[2,4,256], index: 0, kind: input, shape index: {}]
  %s1 = inlined_call_operand.hbm [shape: f32[2,25,8,512], index: 1, kind: input, shape index: {}]
  %s2 = inlined_call_operand.vmem [shape: f32[4,4], index: 2, kind: input, shape index: {}]
  %s3 = inlined_call_operand.vmem [shape: f32[4,1], index: 3, kind: input, shape index: {}]
  %s4 = inlined_call_operand.vmem [shape: f32[8,512], index: 4, kind: input, shape index: {}]
  %s5 = inlined_call_operand.vmem [shape: f32[2,4,256], index: 5, kind: output, shape index: {}]
  %s6 = sld [smem:[#allocation0]]
  $region57: #{basic_block2_forward.1} parent=0
    _
  %s8 = ssub.s32 1, %s6
  %s9 = scalar_select 0, %s8, %s6
  $region1: #{basic_block2_forward.1} parent=0
    #allocation3 [shape = 'u8[819200]{0}', space=vmem, size = 0xc8000, scoped, tag = 'input window, operand 1, single buffered']
    #allocation4 [shape = 's32[2]{0}', space=sflag, size = 0x8, scoped, tag = 'scoped memory for basic_block2_forward.1']
    %10 = vsyncpa [#allocation4], 0
    loop: start=0, step=1, limit=4
    $region2: #{basic_block2_forward.1} parent=1 // loop_pre_header
      _
    $region3: #{basic_block2_forward.1} parent=1 // loop_header
      %s12 = sphi 0, %s16
      %p13 = scmp.ge.s32.totalorder %s12, 4
      %s22 = sphi 0, %s24
      %s25 = sphi 0, %s22
      %s26 = sphi 0, %s25
      %s42 = sphi 0, %s26
      %s46 = sphi 0, %s46
      %s48 = sphi 0, %s46
      %s49 = sphi 0, %s48
      %s63 = sphi 0, %s49
      %s67 = sphi 0, %s67
      %s69 = sphi 0, %s67
      %s70 = sphi 0, %s69
      %s84 = sphi 0, %s70
      %s88 = sphi 0, %s88
      %s90 = sphi 0, %s88
      %s91 = sphi 0, %s90
      %s105 = sphi 0, %s91
      %s109 = sphi 0, %s109
      %s111 = sphi 0, %s109
      %s112 = sphi 0, %s111
      %s126 = sphi 0, %s112
      %s132 = sphi 0, %s134
      %s135 = sphi 0, %s132
      %s136 = sphi 0, %s135
      %s152 = sphi 0, %s136
    $region4: #{basic_block2_forward.1} parent=1 // loop_header_branch
      %15 = sbr.rel (%p13) target = $region8
    $region5: #{basic_block2_forward.1} parent=1 // loop_body
      %s17 = ssub.s32 %s12, 1
      %s18 = ssub.s32 %s12, 2
      %s19 = sadd.s32 %s12, 1
      %s20 = ssub.s32 %s12, %s19
      %p21 = scmp.eq.s32.totalorder %s20, 0
      %s23 = sadd.s32 %s22, 1
      %s24 = scalar_select %p21, %s22, %s23
      %p27 = pneg %p21
      %p28 = scmp.eq.s32.totalorder %s12, 1
      %p29 = por %p27, %p28
      %p30 = scmp.ne.s32.totalorder %s22, %s25
      %p31 = scmp.eq.s32.totalorder %s12, 0
      %p32 = por %p30, %p31
      %p33 = scmp.ne.s32.totalorder %s22, %s25
      %p34 = scmp.eq.s32.totalorder %s17, 1
      %p35 = por %p33, %p34
      %p36 = scmp.ne.s32.totalorder %s25, %s26
      %p37 = scmp.eq.s32.totalorder %s17, 0
      %p38 = por %p36, %p37
      %p39 = scmp.ne.s32.totalorder %s25, %s26
      %p40 = scmp.eq.s32.totalorder %s18, 1
      %p41 = por %p39, %p40
      %p43 = scmp.ne.s32.totalorder %s26, %s42
      %p44 = scmp.eq.s32.totalorder %s18, 0
      %p45 = por %p43, %p44
      %s47 = sadd.s32 %s46, 1
      %p50 = scmp.eq.s32.totalorder %s12, 1
      %p51 = scmp.ne.s32.totalorder %s46, %s48
      %p52 = scmp.eq.s32.totalorder %s12, 0
      %p53 = por %p51, %p52
      %p54 = scmp.ne.s32.totalorder %s46, %s48
      %p55 = scmp.eq.s32.totalorder %s17, 1
      %p56 = por %p54, %p55
      %p57 = scmp.ne.s32.totalorder %s48, %s49
      %p58 = scmp.eq.s32.totalorder %s17, 0
      %p59 = por %p57, %p58
      %p60 = scmp.ne.s32.totalorder %s48, %s49
      %p61 = scmp.eq.s32.totalorder %s18, 1
      %p62 = por %p60, %p61
      %p64 = scmp.ne.s32.totalorder %s49, %s63
      %p65 = scmp.eq.s32.totalorder %s18, 0
      %p66 = por %p64, %p65
      %s68 = sadd.s32 %s67, 1
      %p71 = scmp.eq.s32.totalorder %s12, 1
      %p72 = scmp.ne.s32.totalorder %s67, %s69
      %p73 = scmp.eq.s32.totalorder %s12, 0
      %p74 = por %p72, %p73
      %p75 = scmp.ne.s32.totalorder %s67, %s69
      %p76 = scmp.eq.s32.totalorder %s17, 1
      %p77 = por %p75, %p76
      %p78 = scmp.ne.s32.totalorder %s69, %s70
      %p79 = scmp.eq.s32.totalorder %s17, 0
      %p80 = por %p78, %p79
      %p81 = scmp.ne.s32.totalorder %s69, %s70
      %p82 = scmp.eq.s32.totalorder %s18, 1
      %p83 = por %p81, %p82
      %p85 = scmp.ne.s32.totalorder %s70, %s84
      %p86 = scmp.eq.s32.totalorder %s18, 0
      %p87 = por %p85, %p86
      %s89 = sadd.s32 %s88, 1
      %p92 = scmp.eq.s32.totalorder %s12, 1
      %p93 = scmp.ne.s32.totalorder %s88, %s90
      %p94 = scmp.eq.s32.totalorder %s12, 0
      %p95 = por %p93, %p94
      %p96 = scmp.ne.s32.totalorder %s88, %s90
      %p97 = scmp.eq.s32.totalorder %s17, 1
      %p98 = por %p96, %p97
      %p99 = scmp.ne.s32.totalorder %s90, %s91
      %p100 = scmp.eq.s32.totalorder %s17, 0
      %p101 = por %p99, %p100
      %p102 = scmp.ne.s32.totalorder %s90, %s91
      %p103 = scmp.eq.s32.totalorder %s18, 1
      %p104 = por %p102, %p103
      %p106 = scmp.ne.s32.totalorder %s91, %s105
      %p107 = scmp.eq.s32.totalorder %s18, 0
      %p108 = por %p106, %p107
      %s110 = sadd.s32 %s109, 1
      %p113 = scmp.eq.s32.totalorder %s12, 1
      %p114 = scmp.ne.s32.totalorder %s109, %s111
      %p115 = scmp.eq.s32.totalorder %s12, 0
      %p116 = por %p114, %p115
      %p117 = scmp.ne.s32.totalorder %s109, %s111
      %p118 = scmp.eq.s32.totalorder %s17, 1
      %p119 = por %p117, %p118
      %p120 = scmp.ne.s32.totalorder %s111, %s112
      %p121 = scmp.eq.s32.totalorder %s17, 0
      %p122 = por %p120, %p121
      %p123 = scmp.ne.s32.totalorder %s111, %s112
      %p124 = scmp.eq.s32.totalorder %s18, 1
      %p125 = por %p123, %p124
      %p127 = scmp.ne.s32.totalorder %s112, %s126
      %p128 = scmp.eq.s32.totalorder %s18, 0
      %p129 = por %p127, %p128
      %s130 = ssub.s32 %s12, %s19
      %p131 = scmp.eq.s32.totalorder %s130, 0
      %s133 = sadd.s32 %s132, 1
      %s134 = scalar_select %p131, %s132, %s133
      %p137 = pneg %p131
      %p138 = scmp.eq.s32.totalorder %s12, 1
      %p139 = por %p137, %p138
      %p140 = scmp.ne.s32.totalorder %s132, %s135
      %p141 = scmp.eq.s32.totalorder %s12, 0
      %p142 = por %p140, %p141
      %p143 = scmp.ne.s32.totalorder %s132, %s135
      %p144 = scmp.eq.s32.totalorder %s17, 1
      %p145 = por %p143, %p144
      %p146 = scmp.ne.s32.totalorder %s135, %s136
      %p147 = scmp.eq.s32.totalorder %s17, 0
      %p148 = por %p146, %p147
      %p149 = scmp.ne.s32.totalorder %s135, %s136
      %p150 = scmp.eq.s32.totalorder %s18, 1
      %p151 = por %p149, %p150
      %p153 = scmp.ne.s32.totalorder %s136, %s152
      %p154 = scmp.eq.s32.totalorder %s18, 0
      %p155 = por %p153, %p154
      %p156 = scmp.le.s32.totalorder 1, %s12
      %p157 = scmp.lt.s32.totalorder %s12, 3
      %p158 = pnand %p156, %p157
      %p159 = pneg %p158
      // Predicated region
      $region9: #{basic_block2_forward.1} parent=5 // pred_check
        _
      $region10: #{basic_block2_forward.1} parent=5 // pred_check_branch
        %161 = sbr.rel (%p158) target = $region12
      $region11: #{basic_block2_forward.1} parent=5 // pred_region
        %s162 = ssub.s32 %s12, 1
        // Predicated region
        $region13: #{basic_block2_forward.1} parent=11 // pred_check
          %p163 = pneg %p59
        $region14: #{basic_block2_forward.1} parent=11 // pred_check_branch
          %165 = sbr.rel (%p163) target = $region16
        $region15: #{basic_block2_forward.1} parent=11 // pred_region
          %167 = vsyncadd [#allocation4], 0
          %s168 = sshll.u32 %s1, 4
          %s169 = int_to_ptr.hbm [resolvable:$true] %s168
          %s170 = sshll.u32 [#allocation3], 4
          %s171 = int_to_ptr.vmem [resolvable:$true] %s170
          %176 = dma.hbm_to_vmem [thread:$0]  %s169, 25600, %s171, [#allocation4], 512, 512, 32
        $region16: #{basic_block2_forward.1} parent=11 // pred_fallthru
          _
        // Predicated region
        $region17: #{basic_block2_forward.1} parent=11 // pred_check
          %p177 = pneg %p80
        $region18: #{basic_block2_forward.1} parent=11 // pred_check_branch
          %179 = sbr.rel (%p177) target = $region20
        $region19: #{basic_block2_forward.1} parent=11 // pred_region
          _
        $region20: #{basic_block2_forward.1} parent=11 // pred_fallthru
          _
        // Predicated region
        $region21: #{basic_block2_forward.1} parent=11 // pred_check
          %p180 = pneg %p101
        $region22: #{basic_block2_forward.1} parent=11 // pred_check_branch
          %182 = sbr.rel (%p180) target = $region24
        $region23: #{basic_block2_forward.1} parent=11 // pred_region
          _
        $region24: #{basic_block2_forward.1} parent=11 // pred_fallthru
          _
        // Predicated region
        $region25: #{basic_block2_forward.1} parent=11 // pred_check
          %p183 = pneg %p122
        $region26: #{basic_block2_forward.1} parent=11 // pred_check_branch
          %185 = sbr.rel (%p183) target = $region28
        $region27: #{basic_block2_forward.1} parent=11 // pred_region
          _
        $region28: #{basic_block2_forward.1} parent=11 // pred_fallthru
          _
      $region12: #{basic_block2_forward.1} parent=5 // pred_fallthru
        _
      %p186 = scmp.lt.s32.totalorder %s12, 2
      // Predicated region
      $region29: #{basic_block2_forward.1} parent=5 // pred_check
        %p187 = pneg %p186
      $region30: #{basic_block2_forward.1} parent=5 // pred_check_branch
        %189 = sbr.rel (%p187) target = $region32
      $region31: #{basic_block2_forward.1} parent=5 // pred_region
        // Predicated region
        $region33: #{basic_block2_forward.1} parent=31 // pred_check
          %p190 = pneg %p32
        $region34: #{basic_block2_forward.1} parent=31 // pred_check_branch
          %192 = sbr.rel (%p190) target = $region36
        $region35: #{basic_block2_forward.1} parent=31 // pred_region
          %p193 = scmp.lt.s32.totalorder %s12, 1
          %s194 = scalar_select %p193, %s12, 1
          %s195 = smul.addr %s194, 2
          %s196 = smul.addr %s195, 4
          %s197 = scalar_lea.vmem %s0, %s196
        $region36: #{basic_block2_forward.1} parent=31 // pred_fallthru
          _
      $region32: #{basic_block2_forward.1} parent=5 // pred_fallthru
        _
      %p198 = scmp.le.s32.totalorder 1, %s12
      %p199 = scmp.lt.s32.totalorder %s12, 3
      %p200 = pnand %p198, %p199
      %p201 = pneg %p200
      // Predicated region
      $region37: #{basic_block2_forward.1} parent=5 // pred_check
        _
      $region38: #{basic_block2_forward.1} parent=5 // pred_check_branch
        %203 = sbr.rel (%p200) target = $region40
      $region39: #{basic_block2_forward.1} parent=5 // pred_region
        %s204 = ssub.s32 %s12, 1
        // Predicated region
        $region41: #{basic_block2_forward.1} parent=39 // pred_check
          %p205 = pneg %p59
        $region42: #{basic_block2_forward.1} parent=39 // pred_check_branch
          %207 = sbr.rel (%p205) target = $region44
        $region43: #{basic_block2_forward.1} parent=39 // pred_region
          %209 = dma.done [#allocation4], 25600
        $region44: #{basic_block2_forward.1} parent=39 // pred_fallthru
          _
        %p210 = scmp.lt.s32.totalorder %s17, 1
        %s211 = scalar_select %p210, %s17, 1
        %s212 = smul.addr %s211, 2
        %s213 = smul.addr %s212, 4
        %s214 = scalar_lea.vmem %s0, %s213
        %p215 = pneg %p38
        %p216 = pneg %p35
        %p217 = pneg %p59
        %p218 = pneg %p56
        %p219 = pneg %p80
        %p220 = pneg %p77
        %p221 = pneg %p101
        %p222 = pneg %p98
        %p223 = pneg %p122
        %p224 = pneg %p119
        %p225 = pneg %p148
        %p226 = pneg %p145
        %p227 = scmp.lt.s32.totalorder %s17, 1
        %s228 = scalar_select %p227, %s17, 1
        %s229 = smul.addr %s228, 2
        %s230 = smul.addr %s229, 4
        %s231 = scalar_lea.vmem %s5, %s230
        %p232 = scmp.lt.s32.totalorder %s17, 1
        %s233 = scalar_select %p232, %s17, 1
        %s234 = smul.addr %s233, 2
        %s235 = smul.addr %s234, 4
        %s236 = scalar_lea.vmem %s0, %s235
        %p237 = scmp.lt.s32.totalorder %s17, 1
        %s238 = scalar_select %p237, %s17, 1
        %s239 = smul.addr %s238, 2
        %s240 = smul.addr %s239, 4
        %s241 = scalar_lea.vmem %s5, %s240
        %242 = vst [vmem:[#allocation2] sm:$0xff] 0.0
        %243 = vst [vmem:[#allocation2 + $0x8] sm:$0xff] 0.0
        %244 = vst [vmem:[#allocation2 + $0x10] sm:$0xff] 0.0
        %245 = vst [vmem:[#allocation2 + $0x18] sm:$0xff] 0.0
        %246 = vst [vmem:[#allocation2 + $0x20] sm:$0xff] 0.0
        %v247 = vld [vmem:[%s236] sm:$0xf]
        %249 = vst [vmem:[#allocation1] ss:$2 sm:$0xff] %v247
        %v250 = vld.sshfl [vmem:[#allocation1] sm:$0xff pattern:$0x75316420]
        %251 = vrot.lane.b32.xlu0 %v250, 106
        %v252 = vpop.permute.xlu0 %251
        %vm254 = vcmask 995152
        %255 = vst.msk [vmem:[#allocation2] sm:$0xf] %vm254, %v252
        %s256 = scalar_lea.vmem [#allocation1], 1
        %257 = vst [vmem:[%s256] ss:$2 sm:$0xff] %v247
        %v258 = vld.sshfl [vmem:[#allocation1] sm:$0xff pattern:$0x75316420]
        %259 = vrot.lane.b32.xlu0 %v258, 106
        %v260 = vpop.permute.xlu0 %259
        %vm262 = vcmask 999252
        %263 = vst.msk [vmem:[#allocation2] sm:$0xf0] %vm262, %v260
        %v264 = vld [vmem:[%s236] sm:$0xf]
        %266 = vst [vmem:[#allocation1] ss:$2 sm:$0xff] %v264
        %v267 = vld.sshfl [vmem:[#allocation1] sm:$0xff pattern:$0x75316420]
        %268 = vrot.lane.b32.xlu0 %v267, 110
        %v269 = vpop.permute.xlu0 %268
        %vm271 = vcmask 1044464
        %272 = vst.msk [vmem:[#allocation2] sm:$0xf] %vm271, %v269
        %vm273 = vcmask 109568
        %274 = vst.msk [vmem:[#allocation2 + $0x8] sm:$0xf] %vm273, %v269
        %s275 = scalar_lea.vmem [#allocation1], 1
        %276 = vst [vmem:[%s275] ss:$2 sm:$0xff] %v264
        %v277 = vld.sshfl [vmem:[#allocation1] sm:$0xff pattern:$0x75316420]
        %278 = vrot.lane.b32.xlu0 %v277, 110
        %v279 = vpop.permute.xlu0 %278
        %vm281 = vcmask 1048564
        %282 = vst.msk [vmem:[#allocation2] sm:$0xf0] %vm281, %v279
        %vm283 = vcmask 113668
        %284 = vst.msk [vmem:[#allocation2 + $0x8] sm:$0xf0] %vm283, %v279
        %v285 = vld [vmem:[%s236] sm:$0xf]
        %287 = vst [vmem:[#allocation1] ss:$2 sm:$0xff] %v285
        %v288 = vld.sshfl [vmem:[#allocation1] sm:$0xff pattern:$0x75316420]
        %289 = vrot.lane.b32.xlu0 %v288, 114
        %v290 = vpop.permute.xlu0 %289
        %vm292 = vcmask 273552
        %293 = vst.msk [vmem:[#allocation2 + $0x8] sm:$0xf] %vm292, %v290
        %s294 = scalar_lea.vmem [#allocation1], 1
        %295 = vst [vmem:[%s294] ss:$2 sm:$0xff] %v285
        %v296 = vld.sshfl [vmem:[#allocation1] sm:$0xff pattern:$0x75316420]
        %297 = vrot.lane.b32.xlu0 %v296, 114
        %v298 = vpop.permute.xlu0 %297
        %vm300 = vcmask 277652
        %301 = vst.msk [vmem:[#allocation2 + $0x8] sm:$0xf0] %vm300, %v298
        %v302 = vld [vmem:[%s236] sm:$0xf]
        %304 = vst [vmem:[#allocation1] ss:$2 sm:$0xff] %v302
        %v305 = vld.sshfl [vmem:[#allocation1] sm:$0xff pattern:$0x75316420]
        %306 = vrot.lane.b32.xlu0 %v305, 118
        %v307 = vpop.permute.xlu0 %306
        %vm309 = vcmask 437552
        %310 = vst.msk [vmem:[#allocation2 + $0x8] sm:$0xf] %vm309, %v307
        %s311 = scalar_lea.vmem [#allocation1], 1
        %312 = vst [vmem:[%s311] ss:$2 sm:$0xff] %v302
        %v313 = vld.sshfl [vmem:[#allocation1] sm:$0xff pattern:$0x75316420]
        %314 = vrot.lane.b32.xlu0 %v313, 118
        %v315 = vpop.permute.xlu0 %314
        %vm317 = vcmask 441652
        %318 = vst.msk [vmem:[#allocation2 + $0x8] sm:$0xf0] %vm317, %v315
        %v319 = vld [vmem:[%s236] sm:$0xf]
        %321 = vst [vmem:[#allocation1] ss:$2 sm:$0xff] %v319
        %v322 = vld.sshfl [vmem:[#allocation1] sm:$0xff pattern:$0x75316420]
        %323 = vrot.lane.b32.xlu0 %v322, 122
        %v324 = vpop.permute.xlu0 %323
        %vm326 = vcmask 601552
        %327 = vst.msk [vmem:[#allocation2 + $0x8] sm:$0xf] %vm326, %v324
        %s328 = scalar_lea.vmem [#allocation1], 1
        %329 = vst [vmem:[%s328] ss:$2 sm:$0xff] %v319
        %v330 = vld.sshfl [vmem:[#allocation1] sm:$0xff pattern:$0x75316420]
        %331 = vrot.lane.b32.xlu0 %v330, 122
        %v332 = vpop.permute.xlu0 %331
        %vm334 = vcmask 605652
        %335 = vst.msk [vmem:[#allocation2 + $0x8] sm:$0xf0] %vm334, %v332
        %v336 = vld [vmem:[%s236] sm:$0xf]
        %338 = vst [vmem:[#allocation1] ss:$2 sm:$0xff] %v336
        %v339 = vld.sshfl [vmem:[#allocation1] sm:$0xff pattern:$0x75316420]
        %340 = vrot.lane.b32.xlu0 %v339, 126
        %v341 = vpop.permute.xlu0 %340
        %vm343 = vcmask 765552
        %344 = vst.msk [vmem:[#allocation2 + $0x8] sm:$0xf] %vm343, %v341
        %s345 = scalar_lea.vmem [#allocation1], 1
        %346 = vst [vmem:[%s345] ss:$2 sm:$0xff] %v336
        %v347 = vld.sshfl [vmem:[#allocation1] sm:$0xff pattern:$0x75316420]
        %348 = vrot.lane.b32.xlu0 %v347, 126
        %v349 = vpop.permute.xlu0 %348
        %vm351 = vcmask 769652
        %352 = vst.msk [vmem:[#allocation2 + $0x8] sm:$0xf0] %vm351, %v349
        %v353 = vld [vmem:[%s236] sm:$0xf]
        %355 = vst [vmem:[#allocation1] ss:$2 sm:$0xff] %v353
        %v356 = vld.sshfl [vmem:[#allocation1] sm:$0xff pattern:$0x75316420]
        %357 = vrot.lane.b32.xlu0 %v356, 2
        %v358 = vpop.permute.xlu0 %357
        %vm360 = vcmask 929552
        %361 = vst.msk [vmem:[#allocation2 + $0x8] sm:$0xf] %vm360, %v358
        %s362 = scalar_lea.vmem [#allocation1], 1
        %363 = vst [vmem:[%s362] ss:$2 sm:$0xff] %v353
        %v364 = vld.sshfl [vmem:[#allocation1] sm:$0xff pattern:$0x75316420]
        %365 = vrot.lane.b32.xlu0 %v364, 2
        %v366 = vpop.permute.xlu0 %365
        %vm368 = vcmask 933652
        %369 = vst.msk [vmem:[#allocation2 + $0x8] sm:$0xf0] %vm368, %v366
        %v370 = vld [vmem:[%s236] sm:$0xf]
        %372 = vst [vmem:[#allocation1] ss:$2 sm:$0xff] %v370
        %v373 = vld.sshfl [vmem:[#allocation1] sm:$0xff pattern:$0x75316420]
        %374 = vrot.lane.b32.xlu0 %v373, 6
        %v375 = vpop.permute.xlu0 %374
        %vm377 = vcmask 1044400
        %378 = vst.msk [vmem:[#allocation2 + $0x8] sm:$0xf] %vm377, %v375
        %vm379 = vcmask 44032
        %380 = vst.msk [vmem:[#allocation2 + $0x10] sm:$0xf] %vm379, %v375
        %s381 = scalar_lea.vmem [#allocation1], 1
        %382 = vst [vmem:[%s381] ss:$2 sm:$0xff] %v370
        %v383 = vld.sshfl [vmem:[#allocation1] sm:$0xff pattern:$0x75316420]
        %384 = vrot.lane.b32.xlu0 %v383, 6
        %v385 = vpop.permute.xlu0 %384
        %vm387 = vcmask 1048500
        %388 = vst.msk [vmem:[#allocation2 + $0x8] sm:$0xf0] %vm387, %v385
        %vm389 = vcmask 48132
        %390 = vst.msk [vmem:[#allocation2 + $0x10] sm:$0xf0] %vm389, %v385
        %v391 = vld [vmem:[%s236 + $0x4] sm:$0xf]
        %393 = vst [vmem:[#allocation1] ss:$2 sm:$0xff] %v391
        %v394 = vld.sshfl [vmem:[#allocation1] sm:$0xff pattern:$0x75316420]
        %395 = vrot.lane.b32.xlu0 %v394, 10
        %v396 = vpop.permute.xlu0 %395
        %vm398 = vcmask 207952
        %399 = vst.msk [vmem:[#allocation2 + $0x10] sm:$0xf] %vm398, %v396
        %s400 = scalar_lea.vmem [#allocation1], 1
        %401 = vst [vmem:[%s400] ss:$2 sm:$0xff] %v391
        %v402 = vld.sshfl [vmem:[#allocation1] sm:$0xff pattern:$0x75316420]
        %403 = vrot.lane.b32.xlu0 %v402, 10
        %v404 = vpop.permute.xlu0 %403
        %vm406 = vcmask 212052
        %407 = vst.msk [vmem:[#allocation2 + $0x10] sm:$0xf0] %vm406, %v404
        %v408 = vld [vmem:[%s236 + $0x4] sm:$0xf]
        %410 = vst [vmem:[#allocation1] ss:$2 sm:$0xff] %v408
        %v411 = vld.sshfl [vmem:[#allocation1] sm:$0xff pattern:$0x75316420]
        %412 = vrot.lane.b32.xlu0 %v411, 14
        %v413 = vpop.permute.xlu0 %412
        %vm415 = vcmask 371952
        %416 = vst.msk [vmem:[#allocation2 + $0x10] sm:$0xf] %vm415, %v413
        %s417 = scalar_lea.vmem [#allocation1], 1
        %418 = vst [vmem:[%s417] ss:$2 sm:$0xff] %v408
        %v419 = vld.sshfl [vmem:[#allocation1] sm:$0xff pattern:$0x75316420]
        %420 = vrot.lane.b32.xlu0 %v419, 14
        %v421 = vpop.permute.xlu0 %420
        %vm423 = vcmask 376052
        %424 = vst.msk [vmem:[#allocation2 + $0x10] sm:$0xf0] %vm423, %v421
        %v425 = vld [vmem:[%s236 + $0x4] sm:$0xf]
        %427 = vst [vmem:[#allocation1] ss:$2 sm:$0xff] %v425
        %v428 = vld.sshfl [vmem:[#allocation1] sm:$0xff pattern:$0x75316420]
        %429 = vrot.lane.b32.xlu0 %v428, 18
        %v430 = vpop.permute.xlu0 %429
        %vm432 = vcmask 535952
        %433 = vst.msk [vmem:[#allocation2 + $0x10] sm:$0xf] %vm432, %v430
        %s434 = scalar_lea.vmem [#allocation1], 1
        %435 = vst [vmem:[%s434] ss:$2 sm:$0xff] %v425
        %v436 = vld.sshfl [vmem:[#allocation1] sm:$0xff pattern:$0x75316420]
        %437 = vrot.lane.b32.xlu0 %v436, 18
        %v438 = vpop.permute.xlu0 %437
        %vm440 = vcmask 540052
        %441 = vst.msk [vmem:[#allocation2 + $0x10] sm:$0xf0] %vm440, %v438
        %v442 = vld [vmem:[%s236 + $0x4] sm:$0xf]
        %444 = vst [vmem:[#allocation1] ss:$2 sm:$0xff] %v442
        %v445 = vld.sshfl [vmem:[#allocation1] sm:$0xff pattern:$0x75316420]
        %446 = vrot.lane.b32.xlu0 %v445, 22
        %v447 = vpop.permute.xlu0 %446
        %vm449 = vcmask 699952
        %450 = vst.msk [vmem:[#allocation2 + $0x10] sm:$0xf] %vm449, %v447
        %s451 = scalar_lea.vmem [#allocation1], 1
        %452 = vst [vmem:[%s451] ss:$2 sm:$0xff] %v442
        %v453 = vld.sshfl [vmem:[#allocation1] sm:$0xff pattern:$0x75316420]
        %454 = vrot.lane.b32.xlu0 %v453, 22
        %v455 = vpop.permute.xlu0 %454
        %vm457 = vcmask 704052
        %458 = vst.msk [vmem:[#allocation2 + $0x10] sm:$0xf0] %vm457, %v455
        %v459 = vld [vmem:[%s236 + $0x4] sm:$0xf]
        %461 = vst [vmem:[#allocation1] ss:$2 sm:$0xff] %v459
        %v462 = vld.sshfl [vmem:[#allocation1] sm:$0xff pattern:$0x75316420]
        %463 = vrot.lane.b32.xlu0 %v462, 26
        %v464 = vpop.permute.xlu0 %463
        %vm466 = vcmask 863952
        %467 = vst.msk [vmem:[#allocation2 + $0x10] sm:$0xf] %vm466, %v464
        %s468 = scalar_lea.vmem [#allocation1], 1
        %469 = vst [vmem:[%s468] ss:$2 sm:$0xff] %v459
        %v470 = vld.sshfl [vmem:[#allocation1] sm:$0xff pattern:$0x75316420]
        %471 = vrot.lane.b32.xlu0 %v470, 26
        %v472 = vpop.permute.xlu0 %471
        %vm474 = vcmask 868052
        %475 = vst.msk [vmem:[#allocation2 + $0x10] sm:$0xf0] %vm474, %v472
        %v476 = vld [vmem:[%s236 + $0x4] sm:$0xf]
        %478 = vst [vmem:[#allocation1] ss:$2 sm:$0xff] %v476
        %v479 = vld.sshfl [vmem:[#allocation1] sm:$0xff pattern:$0x75316420]
        %480 = vrot.lane.b32.xlu0 %v479, 30
        %v481 = vpop.permute.xlu0 %480
        %vm483 = vcmask 1027952
        %484 = vst.msk [vmem:[#allocation2 + $0x10] sm:$0xf] %vm483, %v481
        %s485 = scalar_lea.vmem [#allocation1], 1
        %486 = vst [vmem:[%s485] ss:$2 sm:$0xff] %v476
        %v487 = vld.sshfl [vmem:[#allocation1] sm:$0xff pattern:$0x75316420]
        %488 = vrot.lane.b32.xlu0 %v487, 30
        %v489 = vpop.permute.xlu0 %488
        %vm491 = vcmask 1032052
        %492 = vst.msk [vmem:[#allocation2 + $0x10] sm:$0xf0] %vm491, %v489
        %v493 = vld [vmem:[%s236 + $0x4] sm:$0xf]
        %495 = vst [vmem:[#allocation1] ss:$2 sm:$0xff] %v493
        %v496 = vld.sshfl [vmem:[#allocation1] sm:$0xff pattern:$0x75316420]
        %497 = vrot.lane.b32.xlu0 %v496, 34
        %v498 = vpop.permute.xlu0 %497
        %vm500 = vcmask 142352
        %501 = vst.msk [vmem:[#allocation2 + $0x18] sm:$0xf] %vm500, %v498
        %s502 = scalar_lea.vmem [#allocation1], 1
        %503 = vst [vmem:[%s502] ss:$2 sm:$0xff] %v493
        %v504 = vld.sshfl [vmem:[#allocation1] sm:$0xff pattern:$0x75316420]
        %505 = vrot.lane.b32.xlu0 %v504, 34
        %v506 = vpop.permute.xlu0 %505
        %vm508 = vcmask 146452
        %509 = vst.msk [vmem:[#allocation2 + $0x18] sm:$0xf0] %vm508, %v506
        %v510 = vld [vmem:[%s236 + $0x4] sm:$0xf]
        %512 = vst [vmem:[#allocation1] ss:$2 sm:$0xff] %v510
        %v513 = vld.sshfl [vmem:[#allocation1] sm:$0xff pattern:$0x75316420]
        %514 = vrot.lane.b32.xlu0 %v513, 38
        %v515 = vpop.permute.xlu0 %514
        %vm517 = vcmask 306352
        %518 = vst.msk [vmem:[#allocation2 + $0x18] sm:$0xf] %vm517, %v515
        %s519 = scalar_lea.vmem [#allocation1], 1
        %520 = vst [vmem:[%s519] ss:$2 sm:$0xff] %v510
        %v521 = vld.sshfl [vmem:[#allocation1] sm:$0xff pattern:$0x75316420]
        %522 = vrot.lane.b32.xlu0 %v521, 38
        %v523 = vpop.permute.xlu0 %522
        %vm525 = vcmask 310452
        %526 = vst.msk [vmem:[#allocation2 + $0x18] sm:$0xf0] %vm525, %v523
        %v527 = vld [vmem:[#allocation2] sm:$0xff]
        %v528 = vld [vmem:[#allocation2 + $0x8] sm:$0xff]
        %v529 = vld [vmem:[#allocation2 + $0x10] sm:$0xff]
        %v530 = vld [vmem:[#allocation2 + $0x18] sm:$0xff]
        %v531 = vld [vmem:[#allocation2 + $0x20] sm:$0xff]
        %v532 = vld [vmem:[#allocation3] sm:$0xff]
        %v533 = vld [vmem:[#allocation3 + $0x8] sm:$0xff]
        %v534 = vld [vmem:[#allocation3 + $0x10] sm:$0xff]
        %v535 = vld [vmem:[#allocation3 + $0x18] sm:$0xff]
        %540 = vrot.lane.b32.xlu0 %v532, 22
        %v541 = vpop.permute.xlu0 %540
        %542 = vrot.lane.b32.xlu0 %v533, 22
        %v543 = vpop.permute.xlu0 %542
        %544 = vrot.lane.b32.xlu0 %v534, 22
        %v545 = vpop.permute.xlu0 %544
        %546 = vrot.lane.b32.xlu0 %v535, 22
        %v547 = vpop.permute.xlu0 %546
        %vm548 = vcmask 179200
        %v549 = vsel %vm548, %v541, %v543
        %v550 = vsel %vm548, %v543, %v545
        %v551 = vsel %vm548, %v545, %v547
        %v557 = vmul.f32 %v527, %v541
        %v558 = vmul.f32 %v528, %v549
        %v559 = vmul.f32 %v529, %v550
        %v560 = vmul.f32 %v530, %v551
        %v561 = vmul.f32 %v531, %v547
        %v562 = vadd.f32 %v557, 0.0
        %v563 = vadd.f32 %v558, 0.0
        %v564 = vadd.f32 %v559, 0.0
        %v565 = vadd.f32 %v560, 0.0
        %v566 = vadd.f32 %v561, 0.0
        %s567 = scalar_lea.vmem [#allocation3], 800
        %v568 = vld [vmem:[%s567] sm:$0xff]
        %v569 = vld [vmem:[%s567 + $0x8] sm:$0xff]
        %v570 = vld [vmem:[%s567 + $0x10] sm:$0xff]
        %v571 = vld [vmem:[%s567 + $0x18] sm:$0xff]
        %576 = vrot.lane.b32.xlu0 %v568, 22
        %v577 = vpop.permute.xlu0 %576
        %578 = vrot.lane.b32.xlu0 %v569, 22
        %v579 = vpop.permute.xlu0 %578
        %580 = vrot.lane.b32.xlu0 %v570, 22
        %v581 = vpop.permute.xlu0 %580
        %582 = vrot.lane.b32.xlu0 %v571, 22
        %v583 = vpop.permute.xlu0 %582
        %v584 = vsel %vm548, %v577, %v579
        %v585 = vsel %vm548, %v579, %v581
        %v586 = vsel %vm548, %v581, %v583
        %v592 = vmul.f32 %v527, %v577
        %v593 = vmul.f32 %v528, %v584
        %v594 = vmul.f32 %v529, %v585
        %v595 = vmul.f32 %v530, %v586
        %v596 = vmul.f32 %v531, %v583
        %v597 = vadd.f32 %v592, 0.0
        %v598 = vadd.f32 %v593, 0.0
        %v599 = vadd.f32 %v594, 0.0
        %v600 = vadd.f32 %v595, 0.0
        %v601 = vadd.f32 %v596, 0.0
        %s602 = scalar_lea.vmem [#allocation3], 32
        %v603 = vld [vmem:[%s602] sm:$0xff]
        %v604 = vld [vmem:[%s602 + $0x8] sm:$0xff]
        %v605 = vld [vmem:[%s602 + $0x10] sm:$0xff]
        %v606 = vld [vmem:[%s602 + $0x18] sm:$0xff]
        %611 = vrot.lane.b32.xlu0 %v603, 23
        %v612 = vpop.permute.xlu0 %611
        %613 = vrot.lane.b32.xlu0 %v604, 23
        %v614 = vpop.permute.xlu0 %613
        %615 = vrot.lane.b32.xlu0 %v605, 23
        %v616 = vpop.permute.xlu0 %615
        %617 = vrot.lane.b32.xlu0 %v606, 23
        %v618 = vpop.permute.xlu0 %617
        %vm619 = vcmask 187392
        %v620 = vsel %vm619, %v612, %v614
        %v621 = vsel %vm619, %v614, %v616
        %v622 = vsel %vm619, %v616, %v618
        %v628 = vmul.f32 %v527, %v612
        %v629 = vmul.f32 %v528, %v620
        %v630 = vmul.f32 %v529, %v621
        %v631 = vmul.f32 %v530, %v622
        %v632 = vmul.f32 %v531, %v618
        %638 = vrot.lane.b32.xlu0 %v628, 127
        %v639 = vpop.permute.xlu0 %638
        %640 = vrot.lane.b32.xlu0 %v629, 127
        %v641 = vpop.permute.xlu0 %640
        %642 = vrot.lane.b32.xlu0 %v630, 127
        %v643 = vpop.permute.xlu0 %642
        %644 = vrot.lane.b32.xlu0 %v631, 127
        %v645 = vpop.permute.xlu0 %644
        %646 = vrot.lane.b32.xlu0 %v632, 127
        %v647 = vpop.permute.xlu0 %646
        %vm648 = vcmask 1039360
        %v649 = vsel %vm648, %v639, %v641
        %v650 = vsel %vm648, %v641, %v643
        %v651 = vsel %vm648, %v643, %v645
        %v652 = vsel %vm648, %v645, %v647
        %v658 = vadd.f32 %v562, %v649
        %v659 = vadd.f32 %v563, %v650
        %v660 = vadd.f32 %v564, %v651
        %v661 = vadd.f32 %v565, %v652
        %v662 = vadd.f32 %v566, %v647
        %s663 = scalar_lea.vmem [#allocation3], 832
        %v664 = vld [vmem:[%s663] sm:$0xff]
        %v665 = vld [vmem:[%s663 + $0x8] sm:$0xff]
        %v666 = vld [vmem:[%s663 + $0x10] sm:$0xff]
        %v667 = vld [vmem:[%s663 + $0x18] sm:$0xff]
        %672 = vrot.lane.b32.xlu0 %v664, 23
        %v673 = vpop.permute.xlu0 %672
        %674 = vrot.lane.b32.xlu0 %v665, 23
        %v675 = vpop.permute.xlu0 %674
        %676 = vrot.lane.b32.xlu0 %v666, 23
        %v677 = vpop.permute.xlu0 %676
        %678 = vrot.lane.b32.xlu0 %v667, 23
        %v679 = vpop.permute.xlu0 %678
        %v680 = vsel %vm619, %v673, %v675
        %v681 = vsel %vm619, %v675, %v677
        %v682 = vsel %vm619, %v677, %v679
        %v688 = vmul.f32 %v527, %v673
        %v689 = vmul.f32 %v528, %v680
        %v690 = vmul.f32 %v529, %v681
        %v691 = vmul.f32 %v530, %v682
        %v692 = vmul.f32 %v531, %v679
        %698 = vrot.lane.b32.xlu0 %v688, 127
        %v699 = vpop.permute.xlu0 %698
        %700 = vrot.lane.b32.xlu0 %v689, 127
        %v701 = vpop.permute.xlu0 %700
        %702 = vrot.lane.b32.xlu0 %v690, 127
        %v703 = vpop.permute.xlu0 %702
        %704 = vrot.lane.b32.xlu0 %v691, 127
        %v705 = vpop.permute.xlu0 %704
        %706 = vrot.lane.b32.xlu0 %v692, 127
        %v707 = vpop.permute.xlu0 %706
        %v708 = vsel %vm648, %v699, %v701
        %v709 = vsel %vm648, %v701, %v703
        %v710 = vsel %vm648, %v703, %v705
        %v711 = vsel %vm648, %v705, %v707
        %v717 = vadd.f32 %v597, %v708
        %v718 = vadd.f32 %v598, %v709
        %v719 = vadd.f32 %v599, %v710
        %v720 = vadd.f32 %v600, %v711
        %v721 = vadd.f32 %v601, %v707
        %s722 = scalar_lea.vmem [#allocation3], 64
        %v723 = vld [vmem:[%s722] sm:$0xff]
        %v724 = vld [vmem:[%s722 + $0x8] sm:$0xff]
        %v725 = vld [vmem:[%s722 + $0x10] sm:$0xff]
        %v726 = vld [vmem:[%s722 + $0x18] sm:$0xff]
        %731 = vrot.lane.b32.xlu0 %v723, 24
        %v732 = vpop.permute.xlu0 %731
        %733 = vrot.lane.b32.xlu0 %v724, 24
        %v734 = vpop.permute.xlu0 %733
        %735 = vrot.lane.b32.xlu0 %v725, 24
        %v736 = vpop.permute.xlu0 %735
        %737 = vrot.lane.b32.xlu0 %v726, 24
        %v738 = vpop.permute.xlu0 %737
        %vm739 = vcmask 195584
        %v740 = vsel %vm739, %v732, %v734
        %v741 = vsel %vm739, %v734, %v736
        %v742 = vsel %vm739, %v736, %v738
        %v748 = vmul.f32 %v527, %v732
        %v749 = vmul.f32 %v528, %v740
        %v750 = vmul.f32 %v529, %v741
        %v751 = vmul.f32 %v530, %v742
        %v752 = vmul.f32 %v531, %v738
        %758 = vrot.lane.b32.xlu0 %v748, 126
        %v759 = vpop.permute.xlu0 %758
        %760 = vrot.lane.b32.xlu0 %v749, 126
        %v761 = vpop.permute.xlu0 %760
        %762 = vrot.lane.b32.xlu0 %v750, 126
        %v763 = vpop.permute.xlu0 %762
        %764 = vrot.lane.b32.xlu0 %v751, 126
        %v765 = vpop.permute.xlu0 %764
        %766 = vrot.lane.b32.xlu0 %v752, 126
        %v767 = vpop.permute.xlu0 %766
        %vm768 = vcmask 1031168
        %v769 = vsel %vm768, %v759, %v761
        %v770 = vsel %vm768, %v761, %v763
        %v771 = vsel %vm768, %v763, %v765
        %v772 = vsel %vm768, %v765, %v767
        %v778 = vadd.f32 %v658, %v769
        %v779 = vadd.f32 %v659, %v770
        %v780 = vadd.f32 %v660, %v771
        %v781 = vadd.f32 %v661, %v772
        %v782 = vadd.f32 %v662, %v767
        %s783 = scalar_lea.vmem [#allocation3], 864
        %v784 = vld [vmem:[%s783] sm:$0xff]
        %v785 = vld [vmem:[%s783 + $0x8] sm:$0xff]
        %v786 = vld [vmem:[%s783 + $0x10] sm:$0xff]
        %v787 = vld [vmem:[%s783 + $0x18] sm:$0xff]
        %792 = vrot.lane.b32.xlu0 %v784, 24
        %v793 = vpop.permute.xlu0 %792
        %794 = vrot.lane.b32.xlu0 %v785, 24
        %v795 = vpop.permute.xlu0 %794
        %796 = vrot.lane.b32.xlu0 %v786, 24
        %v797 = vpop.permute.xlu0 %796
        %798 = vrot.lane.b32.xlu0 %v787, 24
        %v799 = vpop.permute.xlu0 %798
        %v800 = vsel %vm739, %v793, %v795
        %v801 = vsel %vm739, %v795, %v797
        %v802 = vsel %vm739, %v797, %v799
        %v808 = vmul.f32 %v527, %v793
        %v809 = vmul.f32 %v528, %v800
        %v810 = vmul.f32 %v529, %v801
        %v811 = vmul.f32 %v530, %v802
        %v812 = vmul.f32 %v531, %v799
        %818 = vrot.lane.b32.xlu0 %v808, 126
        %v819 = vpop.permute.xlu0 %818
        %820 = vrot.lane.b32.xlu0 %v809, 126
        %v821 = vpop.permute.xlu0 %820
        %822 = vrot.lane.b32.xlu0 %v810, 126
        %v823 = vpop.permute.xlu0 %822
        %824 = vrot.lane.b32.xlu0 %v811, 126
        %v825 = vpop.permute.xlu0 %824
        %826 = vrot.lane.b32.xlu0 %v812, 126
        %v827 = vpop.permute.xlu0 %826
        %v828 = vsel %vm768, %v819, %v821
        %v829 = vsel %vm768, %v821, %v823
        %v830 = vsel %vm768, %v823, %v825
        %v831 = vsel %vm768, %v825, %v827
        %v837 = vadd.f32 %v717, %v828
        %v838 = vadd.f32 %v718, %v829
        %v839 = vadd.f32 %v719, %v830
        %v840 = vadd.f32 %v720, %v831
        %v841 = vadd.f32 %v721, %v827
        %s842 = scalar_lea.vmem [#allocation3], 96
        %v843 = vld [vmem:[%s842] sm:$0xff]
        %v844 = vld [vmem:[%s842 + $0x8] sm:$0xff]
        %v845 = vld [vmem:[%s842 + $0x10] sm:$0xff]
        %v846 = vld [vmem:[%s842 + $0x18] sm:$0xff]
        %851 = vrot.lane.b32.xlu0 %v843, 25
        %v852 = vpop.permute.xlu0 %851
        %853 = vrot.lane.b32.xlu0 %v844, 25
        %v854 = vpop.permute.xlu0 %853
        %855 = vrot.lane.b32.xlu0 %v845, 25
        %v856 = vpop.permute.xlu0 %855
        %857 = vrot.lane.b32.xlu0 %v846, 25
        %v858 = vpop.permute.xlu0 %857
        %vm859 = vcmask 203776
        %v860 = vsel %vm859, %v852, %v854
        %v861 = vsel %vm859, %v854, %v856
        %v862 = vsel %vm859, %v856, %v858
        %v868 = vmul.f32 %v527, %v852
        %v869 = vmul.f32 %v528, %v860
        %v870 = vmul.f32 %v529, %v861
        %v871 = vmul.f32 %v530, %v862
        %v872 = vmul.f32 %v531, %v858
        %878 = vrot.lane.b32.xlu0 %v868, 125
        %v879 = vpop.permute.xlu0 %878
        %880 = vrot.lane.b32.xlu0 %v869, 125
        %v881 = vpop.permute.xlu0 %880
        %882 = vrot.lane.b32.xlu0 %v870, 125
        %v883 = vpop.permute.xlu0 %882
        %884 = vrot.lane.b32.xlu0 %v871, 125
        %v885 = vpop.permute.xlu0 %884
        %886 = vrot.lane.b32.xlu0 %v872, 125
        %v887 = vpop.permute.xlu0 %886
        %vm888 = vcmask 1022976
        %v889 = vsel %vm888, %v879, %v881
        %v890 = vsel %vm888, %v881, %v883
        %v891 = vsel %vm888, %v883, %v885
        %v892 = vsel %vm888, %v885, %v887
        %v898 = vadd.f32 %v778, %v889
        %v899 = vadd.f32 %v779, %v890
        %v900 = vadd.f32 %v780, %v891
        %v901 = vadd.f32 %v781, %v892
        %v902 = vadd.f32 %v782, %v887
        %s903 = scalar_lea.vmem [#allocation3], 896
        %v904 = vld [vmem:[%s903] sm:$0xff]
        %v905 = vld [vmem:[%s903 + $0x8] sm:$0xff]
        %v906 = vld [vmem:[%s903 + $0x10] sm:$0xff]
        %v907 = vld [vmem:[%s903 + $0x18] sm:$0xff]
        %912 = vrot.lane.b32.xlu0 %v904, 25
        %v913 = vpop.permute.xlu0 %912
        %914 = vrot.lane.b32.xlu0 %v905, 25
        %v915 = vpop.permute.xlu0 %914
        %916 = vrot.lane.b32.xlu0 %v906, 25
        %v917 = vpop.permute.xlu0 %916
        %918 = vrot.lane.b32.xlu0 %v907, 25
        %v919 = vpop.permute.xlu0 %918
        %v920 = vsel %vm859, %v913, %v915
        %v921 = vsel %vm859, %v915, %v917
        %v922 = vsel %vm859, %v917, %v919
        %v928 = vmul.f32 %v527, %v913
        %v929 = vmul.f32 %v528, %v920
        %v930 = vmul.f32 %v529, %v921
        %v931 = vmul.f32 %v530, %v922
        %v932 = vmul.f32 %v531, %v919
        %938 = vrot.lane.b32.xlu0 %v928, 125
        %v939 = vpop.permute.xlu0 %938
        %940 = vrot.lane.b32.xlu0 %v929, 125
        %v941 = vpop.permute.xlu0 %940
        %942 = vrot.lane.b32.xlu0 %v930, 125
        %v943 = vpop.permute.xlu0 %942
        %944 = vrot.lane.b32.xlu0 %v931, 125
        %v945 = vpop.permute.xlu0 %944
        %946 = vrot.lane.b32.xlu0 %v932, 125
        %v947 = vpop.permute.xlu0 %946
        %v948 = vsel %vm888, %v939, %v941
        %v949 = vsel %vm888, %v941, %v943
        %v950 = vsel %vm888, %v943, %v945
        %v951 = vsel %vm888, %v945, %v947
        %v957 = vadd.f32 %v837, %v948
        %v958 = vadd.f32 %v838, %v949
        %v959 = vadd.f32 %v839, %v950
        %v960 = vadd.f32 %v840, %v951
        %v961 = vadd.f32 %v841, %v947
        %s962 = scalar_lea.vmem [#allocation3], 128
        %v963 = vld [vmem:[%s962] sm:$0xff]
        %v964 = vld [vmem:[%s962 + $0x8] sm:$0xff]
        %v965 = vld [vmem:[%s962 + $0x10] sm:$0xff]
        %v966 = vld [vmem:[%s962 + $0x18] sm:$0xff]
        %971 = vrot.lane.b32.xlu0 %v963, 26
        %v972 = vpop.permute.xlu0 %971
        %973 = vrot.lane.b32.xlu0 %v964, 26
        %v974 = vpop.permute.xlu0 %973
        %975 = vrot.lane.b32.xlu0 %v965, 26
        %v976 = vpop.permute.xlu0 %975
        %977 = vrot.lane.b32.xlu0 %v966, 26
        %v978 = vpop.permute.xlu0 %977
        %vm979 = vcmask 211968
        %v980 = vsel %vm979, %v972, %v974
        %v981 = vsel %vm979, %v974, %v976
        %v982 = vsel %vm979, %v976, %v978
        %v988 = vmul.f32 %v527, %v972
        %v989 = vmul.f32 %v528, %v980
        %v990 = vmul.f32 %v529, %v981
        %v991 = vmul.f32 %v530, %v982
        %v992 = vmul.f32 %v531, %v978
        %998 = vrot.lane.b32.xlu0 %v988, 124
        %v999 = vpop.permute.xlu0 %998
        %1000 = vrot.lane.b32.xlu0 %v989, 124
        %v1001 = vpop.permute.xlu0 %1000
        %1002 = vrot.lane.b32.xlu0 %v990, 124
        %v1003 = vpop.permute.xlu0 %1002
        %1004 = vrot.lane.b32.xlu0 %v991, 124
        %v1005 = vpop.permute.xlu0 %1004
        %1006 = vrot.lane.b32.xlu0 %v992, 124
        %v1007 = vpop.permute.xlu0 %1006
        %vm1008 = vcmask 1014784
        %v1009 = vsel %vm1008, %v999, %v1001
        %v1010 = vsel %vm1008, %v1001, %v1003
        %v1011 = vsel %vm1008, %v1003, %v1005
        %v1012 = vsel %vm1008, %v1005, %v1007
        %v1018 = vadd.f32 %v898, %v1009
        %v1019 = vadd.f32 %v899, %v1010
        %v1020 = vadd.f32 %v900, %v1011
        %v1021 = vadd.f32 %v901, %v1012
        %v1022 = vadd.f32 %v902, %v1007
        %s1023 = scalar_lea.vmem [#allocation3], 928
        %v1024 = vld [vmem:[%s1023] sm:$0xff]
        %v1025 = vld [vmem:[%s1023 + $0x8] sm:$0xff]
        %v1026 = vld [vmem:[%s1023 + $0x10] sm:$0xff]
        %v1027 = vld [vmem:[%s1023 + $0x18] sm:$0xff]
        %1032 = vrot.lane.b32.xlu0 %v1024, 26
        %v1033 = vpop.permute.xlu0 %1032
        %1034 = vrot.lane.b32.xlu0 %v1025, 26
        %v1035 = vpop.permute.xlu0 %1034
        %1036 = vrot.lane.b32.xlu0 %v1026, 26
        %v1037 = vpop.permute.xlu0 %1036
        %1038 = vrot.lane.b32.xlu0 %v1027, 26
        %v1039 = vpop.permute.xlu0 %1038
        %v1040 = vsel %vm979, %v1033, %v1035
        %v1041 = vsel %vm979, %v1035, %v1037
        %v1042 = vsel %vm979, %v1037, %v1039
        %v1048 = vmul.f32 %v527, %v1033
        %v1049 = vmul.f32 %v528, %v1040
        %v1050 = vmul.f32 %v529, %v1041
        %v1051 = vmul.f32 %v530, %v1042
        %v1052 = vmul.f32 %v531, %v1039
        %1058 = vrot.lane.b32.xlu0 %v1048, 124
        %v1059 = vpop.permute.xlu0 %1058
        %1060 = vrot.lane.b32.xlu0 %v1049, 124
        %v1061 = vpop.permute.xlu0 %1060
        %1062 = vrot.lane.b32.xlu0 %v1050, 124
        %v1063 = vpop.permute.xlu0 %1062
        %1064 = vrot.lane.b32.xlu0 %v1051, 124
        %v1065 = vpop.permute.xlu0 %1064
        %1066 = vrot.lane.b32.xlu0 %v1052, 124
        %v1067 = vpop.permute.xlu0 %1066
        %v1068 = vsel %vm1008, %v1059, %v1061
        %v1069 = vsel %vm1008, %v1061, %v1063
        %v1070 = vsel %vm1008, %v1063, %v1065
        %v1071 = vsel %vm1008, %v1065, %v1067
        %v1077 = vadd.f32 %v957, %v1068
        %v1078 = vadd.f32 %v958, %v1069
        %v1079 = vadd.f32 %v959, %v1070
        %v1080 = vadd.f32 %v960, %v1071
        %v1081 = vadd.f32 %v961, %v1067
        %s1082 = scalar_lea.vmem [#allocation3], 160
        %v1083 = vld [vmem:[%s1082] sm:$0xff]
        %v1084 = vld [vmem:[%s1082 + $0x8] sm:$0xff]
        %v1085 = vld [vmem:[%s1082 + $0x10] sm:$0xff]
        %v1086 = vld [vmem:[%s1082 + $0x18] sm:$0xff]
        %1091 = vrot.lane.b32.xlu0 %v1083, 42
        %v1092 = vpop.permute.xlu0 %1091
        %1093 = vrot.lane.b32.xlu0 %v1084, 42
        %v1094 = vpop.permute.xlu0 %1093
        %1095 = vrot.lane.b32.xlu0 %v1085, 42
        %v1096 = vpop.permute.xlu0 %1095
        %1097 = vrot.lane.b32.xlu0 %v1086, 42
        %v1098 = vpop.permute.xlu0 %1097
        %vm1099 = vcmask 343040
        %v1100 = vsel %vm1099, %v1092, %v1094
        %v1101 = vsel %vm1099, %v1094, %v1096
        %v1102 = vsel %vm1099, %v1096, %v1098
        %v1108 = vmul.f32 %v527, %v1092
        %v1109 = vmul.f32 %v528, %v1100
        %v1110 = vmul.f32 %v529, %v1101
        %v1111 = vmul.f32 %v530, %v1102
        %v1112 = vmul.f32 %v531, %v1098
        %1118 = vrot.lane.b32.xlu0 %v1108, 108
        %v1119 = vpop.permute.xlu0 %1118
        %1120 = vrot.lane.b32.xlu0 %v1109, 108
        %v1121 = vpop.permute.xlu0 %1120
        %1122 = vrot.lane.b32.xlu0 %v1110, 108
        %v1123 = vpop.permute.xlu0 %1122
        %1124 = vrot.lane.b32.xlu0 %v1111, 108
        %v1125 = vpop.permute.xlu0 %1124
        %1126 = vrot.lane.b32.xlu0 %v1112, 108
        %v1127 = vpop.permute.xlu0 %1126
        %vm1128 = vcmask 883712
        %v1129 = vsel %vm1128, %v1119, %v1121
        %v1130 = vsel %vm1128, %v1121, %v1123
        %v1131 = vsel %vm1128, %v1123, %v1125
        %v1132 = vsel %vm1128, %v1125, %v1127
        %v1138 = vadd.f32 %v1018, %v1129
        %v1139 = vadd.f32 %v1019, %v1130
        %v1140 = vadd.f32 %v1020, %v1131
        %v1141 = vadd.f32 %v1021, %v1132
        %v1142 = vadd.f32 %v1022, %v1127
        %s1143 = scalar_lea.vmem [#allocation3], 960
        %v1144 = vld [vmem:[%s1143] sm:$0xff]
        %v1145 = vld [vmem:[%s1143 + $0x8] sm:$0xff]
        %v1146 = vld [vmem:[%s1143 + $0x10] sm:$0xff]
        %v1147 = vld [vmem:[%s1143 + $0x18] sm:$0xff]
        %1152 = vrot.lane.b32.xlu0 %v1144, 42
        %v1153 = vpop.permute.xlu0 %1152
        %1154 = vrot.lane.b32.xlu0 %v1145, 42
        %v1155 = vpop.permute.xlu0 %1154
        %1156 = vrot.lane.b32.xlu0 %v1146, 42
        %v1157 = vpop.permute.xlu0 %1156
        %1158 = vrot.lane.b32.xlu0 %v1147, 42
        %v1159 = vpop.permute.xlu0 %1158
        %v1160 = vsel %vm1099, %v1153, %v1155
        %v1161 = vsel %vm1099, %v1155, %v1157
        %v1162 = vsel %vm1099, %v1157, %v1159
        %v1168 = vmul.f32 %v527, %v1153
        %v1169 = vmul.f32 %v528, %v1160
        %v1170 = vmul.f32 %v529, %v1161
        %v1171 = vmul.f32 %v530, %v1162
        %v1172 = vmul.f32 %v531, %v1159
        %1178 = vrot.lane.b32.xlu0 %v1168, 108
        %v1179 = vpop.permute.xlu0 %1178
        %1180 = vrot.lane.b32.xlu0 %v1169, 108
        %v1181 = vpop.permute.xlu0 %1180
        %1182 = vrot.lane.b32.xlu0 %v1170, 108
        %v1183 = vpop.permute.xlu0 %1182
        %1184 = vrot.lane.b32.xlu0 %v1171, 108
        %v1185 = vpop.permute.xlu0 %1184
        %1186 = vrot.lane.b32.xlu0 %v1172, 108
        %v1187 = vpop.permute.xlu0 %1186
        %v1188 = vsel %vm1128, %v1179, %v1181
        %v1189 = vsel %vm1128, %v1181, %v1183
        %v1190 = vsel %vm1128, %v1183, %v1185
        %v1191 = vsel %vm1128, %v1185, %v1187
        %v1197 = vadd.f32 %v1077, %v1188
        %v1198 = vadd.f32 %v1078, %v1189
        %v1199 = vadd.f32 %v1079, %v1190
        %v1200 = vadd.f32 %v1080, %v1191
        %v1201 = vadd.f32 %v1081, %v1187
        %s1202 = scalar_lea.vmem [#allocation3], 192
        %v1203 = vld [vmem:[%s1202] sm:$0xff]
        %v1204 = vld [vmem:[%s1202 + $0x8] sm:$0xff]
        %v1205 = vld [vmem:[%s1202 + $0x10] sm:$0xff]
        %v1206 = vld [vmem:[%s1202 + $0x18] sm:$0xff]
        %1211 = vrot.lane.b32.xlu0 %v1203, 43
        %v1212 = vpop.permute.xlu0 %1211
        %1213 = vrot.lane.b32.xlu0 %v1204, 43
        %v1214 = vpop.permute.xlu0 %1213
        %1215 = vrot.lane.b32.xlu0 %v1205, 43
        %v1216 = vpop.permute.xlu0 %1215
        %1217 = vrot.lane.b32.xlu0 %v1206, 43
        %v1218 = vpop.permute.xlu0 %1217
        %vm1219 = vcmask 351232
        %v1220 = vsel %vm1219, %v1212, %v1214
        %v1221 = vsel %vm1219, %v1214, %v1216
        %v1222 = vsel %vm1219, %v1216, %v1218
        %v1228 = vmul.f32 %v527, %v1212
        %v1229 = vmul.f32 %v528, %v1220
        %v1230 = vmul.f32 %v529, %v1221
        %v1231 = vmul.f32 %v530, %v1222
        %v1232 = vmul.f32 %v531, %v1218
        %1238 = vrot.lane.b32.xlu0 %v1228, 107
        %v1239 = vpop.permute.xlu0 %1238
        %1240 = vrot.lane.b32.xlu0 %v1229, 107
        %v1241 = vpop.permute.xlu0 %1240
        %1242 = vrot.lane.b32.xlu0 %v1230, 107
        %v1243 = vpop.permute.xlu0 %1242
        %1244 = vrot.lane.b32.xlu0 %v1231, 107
        %v1245 = vpop.permute.xlu0 %1244
        %1246 = vrot.lane.b32.xlu0 %v1232, 107
        %v1247 = vpop.permute.xlu0 %1246
        %vm1248 = vcmask 875520
        %v1249 = vsel %vm1248, %v1239, %v1241
        %v1250 = vsel %vm1248, %v1241, %v1243
        %v1251 = vsel %vm1248, %v1243, %v1245
        %v1252 = vsel %vm1248, %v1245, %v1247
        %v1258 = vadd.f32 %v1138, %v1249
        %v1259 = vadd.f32 %v1139, %v1250
        %v1260 = vadd.f32 %v1140, %v1251
        %v1261 = vadd.f32 %v1141, %v1252
        %v1262 = vadd.f32 %v1142, %v1247
        %s1263 = scalar_lea.vmem [#allocation3], 992
        %v1264 = vld [vmem:[%s1263] sm:$0xff]
        %v1265 = vld [vmem:[%s1263 + $0x8] sm:$0xff]
        %v1266 = vld [vmem:[%s1263 + $0x10] sm:$0xff]
        %v1267 = vld [vmem:[%s1263 + $0x18] sm:$0xff]
        %1272 = vrot.lane.b32.xlu0 %v1264, 43
        %v1273 = vpop.permute.xlu0 %1272
        %1274 = vrot.lane.b32.xlu0 %v1265, 43
        %v1275 = vpop.permute.xlu0 %1274
        %1276 = vrot.lane.b32.xlu0 %v1266, 43
        %v1277 = vpop.permute.xlu0 %1276
        %1278 = vrot.lane.b32.xlu0 %v1267, 43
        %v1279 = vpop.permute.xlu0 %1278
        %v1280 = vsel %vm1219, %v1273, %v1275
        %v1281 = vsel %vm1219, %v1275, %v1277
        %v1282 = vsel %vm1219, %v1277, %v1279
        %v1288 = vmul.f32 %v527, %v1273
        %v1289 = vmul.f32 %v528, %v1280
        %v1290 = vmul.f32 %v529, %v1281
        %v1291 = vmul.f32 %v530, %v1282
        %v1292 = vmul.f32 %v531, %v1279
        %1298 = vrot.lane.b32.xlu0 %v1288, 107
        %v1299 = vpop.permute.xlu0 %1298
        %1300 = vrot.lane.b32.xlu0 %v1289, 107
        %v1301 = vpop.permute.xlu0 %1300
        %1302 = vrot.lane.b32.xlu0 %v1290, 107
        %v1303 = vpop.permute.xlu0 %1302
        %1304 = vrot.lane.b32.xlu0 %v1291, 107
        %v1305 = vpop.permute.xlu0 %1304
        %1306 = vrot.lane.b32.xlu0 %v1292, 107
        %v1307 = vpop.permute.xlu0 %1306
        %v1308 = vsel %vm1248, %v1299, %v1301
        %v1309 = vsel %vm1248, %v1301, %v1303
        %v1310 = vsel %vm1248, %v1303, %v1305
        %v1311 = vsel %vm1248, %v1305, %v1307
        %v1317 = vadd.f32 %v1197, %v1308
        %v1318 = vadd.f32 %v1198, %v1309
        %v1319 = vadd.f32 %v1199, %v1310
        %v1320 = vadd.f32 %v1200, %v1311
        %v1321 = vadd.f32 %v1201, %v1307
        %s1322 = scalar_lea.vmem [#allocation3], 224
        %v1323 = vld [vmem:[%s1322] sm:$0xff]
        %v1324 = vld [vmem:[%s1322 + $0x8] sm:$0xff]
        %v1325 = vld [vmem:[%s1322 + $0x10] sm:$0xff]
        %v1326 = vld [vmem:[%s1322 + $0x18] sm:$0xff]
        %1331 = vrot.lane.b32.xlu0 %v1323, 44
        %v1332 = vpop.permute.xlu0 %1331
        %1333 = vrot.lane.b32.xlu0 %v1324, 44
        %v1334 = vpop.permute.xlu0 %1333
        %1335 = vrot.lane.b32.xlu0 %v1325, 44
        %v1336 = vpop.permute.xlu0 %1335
        %1337 = vrot.lane.b32.xlu0 %v1326, 44
        %v1338 = vpop.permute.xlu0 %1337
        %vm1339 = vcmask 359424
        %v1340 = vsel %vm1339, %v1332, %v1334
        %v1341 = vsel %vm1339, %v1334, %v1336
        %v1342 = vsel %vm1339, %v1336, %v1338
        %v1348 = vmul.f32 %v527, %v1332
        %v1349 = vmul.f32 %v528, %v1340
        %v1350 = vmul.f32 %v529, %v1341
        %v1351 = vmul.f32 %v530, %v1342
        %v1352 = vmul.f32 %v531, %v1338
        %1358 = vrot.lane.b32.xlu0 %v1348, 106
        %v1359 = vpop.permute.xlu0 %1358
        %1360 = vrot.lane.b32.xlu0 %v1349, 106
        %v1361 = vpop.permute.xlu0 %1360
        %1362 = vrot.lane.b32.xlu0 %v1350, 106
        %v1363 = vpop.permute.xlu0 %1362
        %1364 = vrot.lane.b32.xlu0 %v1351, 106
        %v1365 = vpop.permute.xlu0 %1364
        %1366 = vrot.lane.b32.xlu0 %v1352, 106
        %v1367 = vpop.permute.xlu0 %1366
        %vm1368 = vcmask 867328
        %v1369 = vsel %vm1368, %v1359, %v1361
        %v1370 = vsel %vm1368, %v1361, %v1363
        %v1371 = vsel %vm1368, %v1363, %v1365
        %v1372 = vsel %vm1368, %v1365, %v1367
        %v1378 = vadd.f32 %v1258, %v1369
        %v1379 = vadd.f32 %v1259, %v1370
        %v1380 = vadd.f32 %v1260, %v1371
        %v1381 = vadd.f32 %v1261, %v1372
        %v1382 = vadd.f32 %v1262, %v1367
        %s1383 = scalar_lea.vmem [#allocation3], 1024
        %v1384 = vld [vmem:[%s1383] sm:$0xff]
        %v1385 = vld [vmem:[%s1383 + $0x8] sm:$0xff]
        %v1386 = vld [vmem:[%s1383 + $0x10] sm:$0xff]
        %v1387 = vld [vmem:[%s1383 + $0x18] sm:$0xff]
        %1392 = vrot.lane.b32.xlu0 %v1384, 44
        %v1393 = vpop.permute.xlu0 %1392
        %1394 = vrot.lane.b32.xlu0 %v1385, 44
        %v1395 = vpop.permute.xlu0 %1394
        %1396 = vrot.lane.b32.xlu0 %v1386, 44
        %v1397 = vpop.permute.xlu0 %1396
        %1398 = vrot.lane.b32.xlu0 %v1387, 44
        %v1399 = vpop.permute.xlu0 %1398
        %v1400 = vsel %vm1339, %v1393, %v1395
        %v1401 = vsel %vm1339, %v1395, %v1397
        %v1402 = vsel %vm1339, %v1397, %v1399
        %v1408 = vmul.f32 %v527, %v1393
        %v1409 = vmul.f32 %v528, %v1400
        %v1410 = vmul.f32 %v529, %v1401
        %v1411 = vmul.f32 %v530, %v1402
        %v1412 = vmul.f32 %v531, %v1399
        %1418 = vrot.lane.b32.xlu0 %v1408, 106
        %v1419 = vpop.permute.xlu0 %1418
        %1420 = vrot.lane.b32.xlu0 %v1409, 106
        %v1421 = vpop.permute.xlu0 %1420
        %1422 = vrot.lane.b32.xlu0 %v1410, 106
        %v1423 = vpop.permute.xlu0 %1422
        %1424 = vrot.lane.b32.xlu0 %v1411, 106
        %v1425 = vpop.permute.xlu0 %1424
        %1426 = vrot.lane.b32.xlu0 %v1412, 106
        %v1427 = vpop.permute.xlu0 %1426
        %v1428 = vsel %vm1368, %v1419, %v1421
        %v1429 = vsel %vm1368, %v1421, %v1423
        %v1430 = vsel %vm1368, %v1423, %v1425
        %v1431 = vsel %vm1368, %v1425, %v1427
        %v1437 = vadd.f32 %v1317, %v1428
        %v1438 = vadd.f32 %v1318, %v1429
        %v1439 = vadd.f32 %v1319, %v1430
        %v1440 = vadd.f32 %v1320, %v1431
        %v1441 = vadd.f32 %v1321, %v1427
        %s1442 = scalar_lea.vmem [#allocation3], 256
        %v1443 = vld [vmem:[%s1442] sm:$0xff]
        %v1444 = vld [vmem:[%s1442 + $0x8] sm:$0xff]
        %v1445 = vld [vmem:[%s1442 + $0x10] sm:$0xff]
        %v1446 = vld [vmem:[%s1442 + $0x18] sm:$0xff]
        %1451 = vrot.lane.b32.xlu0 %v1443, 45
        %v1452 = vpop.permute.xlu0 %1451
        %1453 = vrot.lane.b32.xlu0 %v1444, 45
        %v1454 = vpop.permute.xlu0 %1453
        %1455 = vrot.lane.b32.xlu0 %v1445, 45
        %v1456 = vpop.permute.xlu0 %1455
        %1457 = vrot.lane.b32.xlu0 %v1446, 45
        %v1458 = vpop.permute.xlu0 %1457
        %vm1459 = vcmask 367616
        %v1460 = vsel %vm1459, %v1452, %v1454
        %v1461 = vsel %vm1459, %v1454, %v1456
        %v1462 = vsel %vm1459, %v1456, %v1458
        %v1468 = vmul.f32 %v527, %v1452
        %v1469 = vmul.f32 %v528, %v1460
        %v1470 = vmul.f32 %v529, %v1461
        %v1471 = vmul.f32 %v530, %v1462
        %v1472 = vmul.f32 %v531, %v1458
        %1478 = vrot.lane.b32.xlu0 %v1468, 105
        %v1479 = vpop.permute.xlu0 %1478
        %1480 = vrot.lane.b32.xlu0 %v1469, 105
        %v1481 = vpop.permute.xlu0 %1480
        %1482 = vrot.lane.b32.xlu0 %v1470, 105
        %v1483 = vpop.permute.xlu0 %1482
        %1484 = vrot.lane.b32.xlu0 %v1471, 105
        %v1485 = vpop.permute.xlu0 %1484
        %1486 = vrot.lane.b32.xlu0 %v1472, 105
        %v1487 = vpop.permute.xlu0 %1486
        %vm1488 = vcmask 859136
        %v1489 = vsel %vm1488, %v1479, %v1481
        %v1490 = vsel %vm1488, %v1481, %v1483
        %v1491 = vsel %vm1488, %v1483, %v1485
        %v1492 = vsel %vm1488, %v1485, %v1487
        %v1498 = vadd.f32 %v1378, %v1489
        %v1499 = vadd.f32 %v1379, %v1490
        %v1500 = vadd.f32 %v1380, %v1491
        %v1501 = vadd.f32 %v1381, %v1492
        %v1502 = vadd.f32 %v1382, %v1487
        %s1503 = scalar_lea.vmem [#allocation3], 1056
        %v1504 = vld [vmem:[%s1503] sm:$0xff]
        %v1505 = vld [vmem:[%s1503 + $0x8] sm:$0xff]
        %v1506 = vld [vmem:[%s1503 + $0x10] sm:$0xff]
        %v1507 = vld [vmem:[%s1503 + $0x18] sm:$0xff]
        %1512 = vrot.lane.b32.xlu0 %v1504, 45
        %v1513 = vpop.permute.xlu0 %1512
        %1514 = vrot.lane.b32.xlu0 %v1505, 45
        %v1515 = vpop.permute.xlu0 %1514
        %1516 = vrot.lane.b32.xlu0 %v1506, 45
        %v1517 = vpop.permute.xlu0 %1516
        %1518 = vrot.lane.b32.xlu0 %v1507, 45
        %v1519 = vpop.permute.xlu0 %1518
        %v1520 = vsel %vm1459, %v1513, %v1515
        %v1521 = vsel %vm1459, %v1515, %v1517
        %v1522 = vsel %vm1459, %v1517, %v1519
        %v1528 = vmul.f32 %v527, %v1513
        %v1529 = vmul.f32 %v528, %v1520
        %v1530 = vmul.f32 %v529, %v1521
        %v1531 = vmul.f32 %v530, %v1522
        %v1532 = vmul.f32 %v531, %v1519
        %1538 = vrot.lane.b32.xlu0 %v1528, 105
        %v1539 = vpop.permute.xlu0 %1538
        %1540 = vrot.lane.b32.xlu0 %v1529, 105
        %v1541 = vpop.permute.xlu0 %1540
        %1542 = vrot.lane.b32.xlu0 %v1530, 105
        %v1543 = vpop.permute.xlu0 %1542
        %1544 = vrot.lane.b32.xlu0 %v1531, 105
        %v1545 = vpop.permute.xlu0 %1544
        %1546 = vrot.lane.b32.xlu0 %v1532, 105
        %v1547 = vpop.permute.xlu0 %1546
        %v1548 = vsel %vm1488, %v1539, %v1541
        %v1549 = vsel %vm1488, %v1541, %v1543
        %v1550 = vsel %vm1488, %v1543, %v1545
        %v1551 = vsel %vm1488, %v1545, %v1547
        %v1557 = vadd.f32 %v1437, %v1548
        %v1558 = vadd.f32 %v1438, %v1549
        %v1559 = vadd.f32 %v1439, %v1550
        %v1560 = vadd.f32 %v1440, %v1551
        %v1561 = vadd.f32 %v1441, %v1547
        %s1562 = scalar_lea.vmem [#allocation3], 288
        %v1563 = vld [vmem:[%s1562] sm:$0xff]
        %v1564 = vld [vmem:[%s1562 + $0x8] sm:$0xff]
        %v1565 = vld [vmem:[%s1562 + $0x10] sm:$0xff]
        %v1566 = vld [vmem:[%s1562 + $0x18] sm:$0xff]
        %1571 = vrot.lane.b32.xlu0 %v1563, 46
        %v1572 = vpop.permute.xlu0 %1571
        %1573 = vrot.lane.b32.xlu0 %v1564, 46
        %v1574 = vpop.permute.xlu0 %1573
        %1575 = vrot.lane.b32.xlu0 %v1565, 46
        %v1576 = vpop.permute.xlu0 %1575
        %1577 = vrot.lane.b32.xlu0 %v1566, 46
        %v1578 = vpop.permute.xlu0 %1577
        %vm1579 = vcmask 375808
        %v1580 = vsel %vm1579, %v1572, %v1574
        %v1581 = vsel %vm1579, %v1574, %v1576
        %v1582 = vsel %vm1579, %v1576, %v1578
        %v1588 = vmul.f32 %v527, %v1572
        %v1589 = vmul.f32 %v528, %v1580
        %v1590 = vmul.f32 %v529, %v1581
        %v1591 = vmul.f32 %v530, %v1582
        %v1592 = vmul.f32 %v531, %v1578
        %1598 = vrot.lane.b32.xlu0 %v1588, 104
        %v1599 = vpop.permute.xlu0 %1598
        %1600 = vrot.lane.b32.xlu0 %v1589, 104
        %v1601 = vpop.permute.xlu0 %1600
        %1602 = vrot.lane.b32.xlu0 %v1590, 104
        %v1603 = vpop.permute.xlu0 %1602
        %1604 = vrot.lane.b32.xlu0 %v1591, 104
        %v1605 = vpop.permute.xlu0 %1604
        %1606 = vrot.lane.b32.xlu0 %v1592, 104
        %v1607 = vpop.permute.xlu0 %1606
        %vm1608 = vcmask 850944
        %v1609 = vsel %vm1608, %v1599, %v1601
        %v1610 = vsel %vm1608, %v1601, %v1603
        %v1611 = vsel %vm1608, %v1603, %v1605
        %v1612 = vsel %vm1608, %v1605, %v1607
        %v1618 = vadd.f32 %v1498, %v1609
        %v1619 = vadd.f32 %v1499, %v1610
        %v1620 = vadd.f32 %v1500, %v1611
        %v1621 = vadd.f32 %v1501, %v1612
        %v1622 = vadd.f32 %v1502, %v1607
        %s1623 = scalar_lea.vmem [#allocation3], 1088
        %v1624 = vld [vmem:[%s1623] sm:$0xff]
        %v1625 = vld [vmem:[%s1623 + $0x8] sm:$0xff]
        %v1626 = vld [vmem:[%s1623 + $0x10] sm:$0xff]
        %v1627 = vld [vmem:[%s1623 + $0x18] sm:$0xff]
        %1632 = vrot.lane.b32.xlu0 %v1624, 46
        %v1633 = vpop.permute.xlu0 %1632
        %1634 = vrot.lane.b32.xlu0 %v1625, 46
        %v1635 = vpop.permute.xlu0 %1634
        %1636 = vrot.lane.b32.xlu0 %v1626, 46
        %v1637 = vpop.permute.xlu0 %1636
        %1638 = vrot.lane.b32.xlu0 %v1627, 46
        %v1639 = vpop.permute.xlu0 %1638
        %v1640 = vsel %vm1579, %v1633, %v1635
        %v1641 = vsel %vm1579, %v1635, %v1637
        %v1642 = vsel %vm1579, %v1637, %v1639
        %v1648 = vmul.f32 %v527, %v1633
        %v1649 = vmul.f32 %v528, %v1640
        %v1650 = vmul.f32 %v529, %v1641
        %v1651 = vmul.f32 %v530, %v1642
        %v1652 = vmul.f32 %v531, %v1639
        %1658 = vrot.lane.b32.xlu0 %v1648, 104
        %v1659 = vpop.permute.xlu0 %1658
        %1660 = vrot.lane.b32.xlu0 %v1649, 104
        %v1661 = vpop.permute.xlu0 %1660
        %1662 = vrot.lane.b32.xlu0 %v1650, 104
        %v1663 = vpop.permute.xlu0 %1662
        %1664 = vrot.lane.b32.xlu0 %v1651, 104
        %v1665 = vpop.permute.xlu0 %1664
        %1666 = vrot.lane.b32.xlu0 %v1652, 104
        %v1667 = vpop.permute.xlu0 %1666
        %v1668 = vsel %vm1608, %v1659, %v1661
        %v1669 = vsel %vm1608, %v1661, %v1663
        %v1670 = vsel %vm1608, %v1663, %v1665
        %v1671 = vsel %vm1608, %v1665, %v1667
        %v1677 = vadd.f32 %v1557, %v1668
        %v1678 = vadd.f32 %v1558, %v1669
        %v1679 = vadd.f32 %v1559, %v1670
        %v1680 = vadd.f32 %v1560, %v1671
        %v1681 = vadd.f32 %v1561, %v1667
        %s1682 = scalar_lea.vmem [#allocation3], 320
        %v1683 = vld [vmem:[%s1682] sm:$0xff]
        %v1684 = vld [vmem:[%s1682 + $0x8] sm:$0xff]
        %v1685 = vld [vmem:[%s1682 + $0x10] sm:$0xff]
        %v1686 = vld [vmem:[%s1682 + $0x18] sm:$0xff]
        %1691 = vrot.lane.b32.xlu0 %v1683, 62
        %v1692 = vpop.permute.xlu0 %1691
        %1693 = vrot.lane.b32.xlu0 %v1684, 62
        %v1694 = vpop.permute.xlu0 %1693
        %1695 = vrot.lane.b32.xlu0 %v1685, 62
        %v1696 = vpop.permute.xlu0 %1695
        %1697 = vrot.lane.b32.xlu0 %v1686, 62
        %v1698 = vpop.permute.xlu0 %1697
        %vm1699 = vcmask 506880
        %v1700 = vsel %vm1699, %v1692, %v1694
        %v1701 = vsel %vm1699, %v1694, %v1696
        %v1702 = vsel %vm1699, %v1696, %v1698
        %v1708 = vmul.f32 %v527, %v1692
        %v1709 = vmul.f32 %v528, %v1700
        %v1710 = vmul.f32 %v529, %v1701
        %v1711 = vmul.f32 %v530, %v1702
        %v1712 = vmul.f32 %v531, %v1698
        %1718 = vrot.lane.b32.xlu0 %v1708, 88
        %v1719 = vpop.permute.xlu0 %1718
        %1720 = vrot.lane.b32.xlu0 %v1709, 88
        %v1721 = vpop.permute.xlu0 %1720
        %1722 = vrot.lane.b32.xlu0 %v1710, 88
        %v1723 = vpop.permute.xlu0 %1722
        %1724 = vrot.lane.b32.xlu0 %v1711, 88
        %v1725 = vpop.permute.xlu0 %1724
        %1726 = vrot.lane.b32.xlu0 %v1712, 88
        %v1727 = vpop.permute.xlu0 %1726
        %vm1728 = vcmask 719872
        %v1729 = vsel %vm1728, %v1719, %v1721
        %v1730 = vsel %vm1728, %v1721, %v1723
        %v1731 = vsel %vm1728, %v1723, %v1725
        %v1732 = vsel %vm1728, %v1725, %v1727
        %v1738 = vadd.f32 %v1618, %v1729
        %v1739 = vadd.f32 %v1619, %v1730
        %v1740 = vadd.f32 %v1620, %v1731
        %v1741 = vadd.f32 %v1621, %v1732
        %v1742 = vadd.f32 %v1622, %v1727
        %s1743 = scalar_lea.vmem [#allocation3], 1120
        %v1744 = vld [vmem:[%s1743] sm:$0xff]
        %v1745 = vld [vmem:[%s1743 + $0x8] sm:$0xff]
        %v1746 = vld [vmem:[%s1743 + $0x10] sm:$0xff]
        %v1747 = vld [vmem:[%s1743 + $0x18] sm:$0xff]
        %1752 = vrot.lane.b32.xlu0 %v1744, 62
        %v1753 = vpop.permute.xlu0 %1752
        %1754 = vrot.lane.b32.xlu0 %v1745, 62
        %v1755 = vpop.permute.xlu0 %1754
        %1756 = vrot.lane.b32.xlu0 %v1746, 62
        %v1757 = vpop.permute.xlu0 %1756
        %1758 = vrot.lane.b32.xlu0 %v1747, 62
        %v1759 = vpop.permute.xlu0 %1758
        %v1760 = vsel %vm1699, %v1753, %v1755
        %v1761 = vsel %vm1699, %v1755, %v1757
        %v1762 = vsel %vm1699, %v1757, %v1759
        %v1768 = vmul.f32 %v527, %v1753
        %v1769 = vmul.f32 %v528, %v1760
        %v1770 = vmul.f32 %v529, %v1761
        %v1771 = vmul.f32 %v530, %v1762
        %v1772 = vmul.f32 %v531, %v1759
        %1778 = vrot.lane.b32.xlu0 %v1768, 88
        %v1779 = vpop.permute.xlu0 %1778
        %1780 = vrot.lane.b32.xlu0 %v1769, 88
        %v1781 = vpop.permute.xlu0 %1780
        %1782 = vrot.lane.b32.xlu0 %v1770, 88
        %v1783 = vpop.permute.xlu0 %1782
        %1784 = vrot.lane.b32.xlu0 %v1771, 88
        %v1785 = vpop.permute.xlu0 %1784
        %1786 = vrot.lane.b32.xlu0 %v1772, 88
        %v1787 = vpop.permute.xlu0 %1786
        %v1788 = vsel %vm1728, %v1779, %v1781
        %v1789 = vsel %vm1728, %v1781, %v1783
        %v1790 = vsel %vm1728, %v1783, %v1785
        %v1791 = vsel %vm1728, %v1785, %v1787
        %v1797 = vadd.f32 %v1677, %v1788
        %v1798 = vadd.f32 %v1678, %v1789
        %v1799 = vadd.f32 %v1679, %v1790
        %v1800 = vadd.f32 %v1680, %v1791
        %v1801 = vadd.f32 %v1681, %v1787
        %s1802 = scalar_lea.vmem [#allocation3], 352
        %v1803 = vld [vmem:[%s1802] sm:$0xff]
        %v1804 = vld [vmem:[%s1802 + $0x8] sm:$0xff]
        %v1805 = vld [vmem:[%s1802 + $0x10] sm:$0xff]
        %v1806 = vld [vmem:[%s1802 + $0x18] sm:$0xff]
        %1811 = vrot.lane.b32.xlu0 %v1803, 63
        %v1812 = vpop.permute.xlu0 %1811
        %1813 = vrot.lane.b32.xlu0 %v1804, 63
        %v1814 = vpop.permute.xlu0 %1813
        %1815 = vrot.lane.b32.xlu0 %v1805, 63
        %v1816 = vpop.permute.xlu0 %1815
        %1817 = vrot.lane.b32.xlu0 %v1806, 63
        %v1818 = vpop.permute.xlu0 %1817
        %vm1819 = vcmask 515072
        %v1820 = vsel %vm1819, %v1812, %v1814
        %v1821 = vsel %vm1819, %v1814, %v1816
        %v1822 = vsel %vm1819, %v1816, %v1818
        %v1828 = vmul.f32 %v527, %v1812
        %v1829 = vmul.f32 %v528, %v1820
        %v1830 = vmul.f32 %v529, %v1821
        %v1831 = vmul.f32 %v530, %v1822
        %v1832 = vmul.f32 %v531, %v1818
        %1838 = vrot.lane.b32.xlu0 %v1828, 87
        %v1839 = vpop.permute.xlu0 %1838
        %1840 = vrot.lane.b32.xlu0 %v1829, 87
        %v1841 = vpop.permute.xlu0 %1840
        %1842 = vrot.lane.b32.xlu0 %v1830, 87
        %v1843 = vpop.permute.xlu0 %1842
        %1844 = vrot.lane.b32.xlu0 %v1831, 87
        %v1845 = vpop.permute.xlu0 %1844
        %1846 = vrot.lane.b32.xlu0 %v1832, 87
        %v1847 = vpop.permute.xlu0 %1846
        %vm1848 = vcmask 711680
        %v1849 = vsel %vm1848, %v1839, %v1841
        %v1850 = vsel %vm1848, %v1841, %v1843
        %v1851 = vsel %vm1848, %v1843, %v1845
        %v1852 = vsel %vm1848, %v1845, %v1847
        %v1858 = vadd.f32 %v1738, %v1849
        %v1859 = vadd.f32 %v1739, %v1850
        %v1860 = vadd.f32 %v1740, %v1851
        %v1861 = vadd.f32 %v1741, %v1852
        %v1862 = vadd.f32 %v1742, %v1847
        %s1863 = scalar_lea.vmem [#allocation3], 1152
        %v1864 = vld [vmem:[%s1863] sm:$0xff]
        %v1865 = vld [vmem:[%s1863 + $0x8] sm:$0xff]
        %v1866 = vld [vmem:[%s1863 + $0x10] sm:$0xff]
        %v1867 = vld [vmem:[%s1863 + $0x18] sm:$0xff]
        %1872 = vrot.lane.b32.xlu0 %v1864, 63
        %v1873 = vpop.permute.xlu0 %1872
        %1874 = vrot.lane.b32.xlu0 %v1865, 63
        %v1875 = vpop.permute.xlu0 %1874
        %1876 = vrot.lane.b32.xlu0 %v1866, 63
        %v1877 = vpop.permute.xlu0 %1876
        %1878 = vrot.lane.b32.xlu0 %v1867, 63
        %v1879 = vpop.permute.xlu0 %1878
        %v1880 = vsel %vm1819, %v1873, %v1875
        %v1881 = vsel %vm1819, %v1875, %v1877
        %v1882 = vsel %vm1819, %v1877, %v1879
        %v1888 = vmul.f32 %v527, %v1873
        %v1889 = vmul.f32 %v528, %v1880
        %v1890 = vmul.f32 %v529, %v1881
        %v1891 = vmul.f32 %v530, %v1882
        %v1892 = vmul.f32 %v531, %v1879
        %1898 = vrot.lane.b32.xlu0 %v1888, 87
        %v1899 = vpop.permute.xlu0 %1898
        %1900 = vrot.lane.b32.xlu0 %v1889, 87
        %v1901 = vpop.permute.xlu0 %1900
        %1902 = vrot.lane.b32.xlu0 %v1890, 87
        %v1903 = vpop.permute.xlu0 %1902
        %1904 = vrot.lane.b32.xlu0 %v1891, 87
        %v1905 = vpop.permute.xlu0 %1904
        %1906 = vrot.lane.b32.xlu0 %v1892, 87
        %v1907 = vpop.permute.xlu0 %1906
        %v1908 = vsel %vm1848, %v1899, %v1901
        %v1909 = vsel %vm1848, %v1901, %v1903
        %v1910 = vsel %vm1848, %v1903, %v1905
        %v1911 = vsel %vm1848, %v1905, %v1907
        %v1917 = vadd.f32 %v1797, %v1908
        %v1918 = vadd.f32 %v1798, %v1909
        %v1919 = vadd.f32 %v1799, %v1910
        %v1920 = vadd.f32 %v1800, %v1911
        %v1921 = vadd.f32 %v1801, %v1907
        %s1922 = scalar_lea.vmem [#allocation3], 384
        %v1923 = vld [vmem:[%s1922] sm:$0xff]
        %v1924 = vld [vmem:[%s1922 + $0x8] sm:$0xff]
        %v1925 = vld [vmem:[%s1922 + $0x10] sm:$0xff]
        %v1926 = vld [vmem:[%s1922 + $0x18] sm:$0xff]
        %1931 = vrot.lane.b32.xlu0 %v1923, 64
        %v1932 = vpop.permute.xlu0 %1931
        %1933 = vrot.lane.b32.xlu0 %v1924, 64
        %v1934 = vpop.permute.xlu0 %1933
        %1935 = vrot.lane.b32.xlu0 %v1925, 64
        %v1936 = vpop.permute.xlu0 %1935
        %1937 = vrot.lane.b32.xlu0 %v1926, 64
        %v1938 = vpop.permute.xlu0 %1937
        %vm1939 = vcmask 523264
        %v1940 = vsel %vm1939, %v1932, %v1934
        %v1941 = vsel %vm1939, %v1934, %v1936
        %v1942 = vsel %vm1939, %v1936, %v1938
        %v1948 = vmul.f32 %v527, %v1932
        %v1949 = vmul.f32 %v528, %v1940
        %v1950 = vmul.f32 %v529, %v1941
        %v1951 = vmul.f32 %v530, %v1942
        %v1952 = vmul.f32 %v531, %v1938
        %1958 = vrot.lane.b32.xlu0 %v1948, 86
        %v1959 = vpop.permute.xlu0 %1958
        %1960 = vrot.lane.b32.xlu0 %v1949, 86
        %v1961 = vpop.permute.xlu0 %1960
        %1962 = vrot.lane.b32.xlu0 %v1950, 86
        %v1963 = vpop.permute.xlu0 %1962
        %1964 = vrot.lane.b32.xlu0 %v1951, 86
        %v1965 = vpop.permute.xlu0 %1964
        %1966 = vrot.lane.b32.xlu0 %v1952, 86
        %v1967 = vpop.permute.xlu0 %1966
        %vm1968 = vcmask 703488
        %v1969 = vsel %vm1968, %v1959, %v1961
        %v1970 = vsel %vm1968, %v1961, %v1963
        %v1971 = vsel %vm1968, %v1963, %v1965
        %v1972 = vsel %vm1968, %v1965, %v1967
        %v1978 = vadd.f32 %v1858, %v1969
        %v1979 = vadd.f32 %v1859, %v1970
        %v1980 = vadd.f32 %v1860, %v1971
        %v1981 = vadd.f32 %v1861, %v1972
        %v1982 = vadd.f32 %v1862, %v1967
        %s1983 = scalar_lea.vmem [#allocation3], 1184
        %v1984 = vld [vmem:[%s1983] sm:$0xff]
        %v1985 = vld [vmem:[%s1983 + $0x8] sm:$0xff]
        %v1986 = vld [vmem:[%s1983 + $0x10] sm:$0xff]
        %v1987 = vld [vmem:[%s1983 + $0x18] sm:$0xff]
        %1992 = vrot.lane.b32.xlu0 %v1984, 64
        %v1993 = vpop.permute.xlu0 %1992
        %1994 = vrot.lane.b32.xlu0 %v1985, 64
        %v1995 = vpop.permute.xlu0 %1994
        %1996 = vrot.lane.b32.xlu0 %v1986, 64
        %v1997 = vpop.permute.xlu0 %1996
        %1998 = vrot.lane.b32.xlu0 %v1987, 64
        %v1999 = vpop.permute.xlu0 %1998
        %v2000 = vsel %vm1939, %v1993, %v1995
        %v2001 = vsel %vm1939, %v1995, %v1997
        %v2002 = vsel %vm1939, %v1997, %v1999
        %v2008 = vmul.f32 %v527, %v1993
        %v2009 = vmul.f32 %v528, %v2000
        %v2010 = vmul.f32 %v529, %v2001
        %v2011 = vmul.f32 %v530, %v2002
        %v2012 = vmul.f32 %v531, %v1999
        %2018 = vrot.lane.b32.xlu0 %v2008, 86
        %v2019 = vpop.permute.xlu0 %2018
        %2020 = vrot.lane.b32.xlu0 %v2009, 86
        %v2021 = vpop.permute.xlu0 %2020
        %2022 = vrot.lane.b32.xlu0 %v2010, 86
        %v2023 = vpop.permute.xlu0 %2022
        %2024 = vrot.lane.b32.xlu0 %v2011, 86
        %v2025 = vpop.permute.xlu0 %2024
        %2026 = vrot.lane.b32.xlu0 %v2012, 86
        %v2027 = vpop.permute.xlu0 %2026
        %v2028 = vsel %vm1968, %v2019, %v2021
        %v2029 = vsel %vm1968, %v2021, %v2023
        %v2030 = vsel %vm1968, %v2023, %v2025
        %v2031 = vsel %vm1968, %v2025, %v2027
        %v2037 = vadd.f32 %v1917, %v2028
        %v2038 = vadd.f32 %v1918, %v2029
        %v2039 = vadd.f32 %v1919, %v2030
        %v2040 = vadd.f32 %v1920, %v2031
        %v2041 = vadd.f32 %v1921, %v2027
        %s2042 = scalar_lea.vmem [#allocation3], 416
        %v2043 = vld [vmem:[%s2042] sm:$0xff]
        %v2044 = vld [vmem:[%s2042 + $0x8] sm:$0xff]
        %v2045 = vld [vmem:[%s2042 + $0x10] sm:$0xff]
        %v2046 = vld [vmem:[%s2042 + $0x18] sm:$0xff]
        %2051 = vrot.lane.b32.xlu0 %v2043, 65
        %v2052 = vpop.permute.xlu0 %2051
        %2053 = vrot.lane.b32.xlu0 %v2044, 65
        %v2054 = vpop.permute.xlu0 %2053
        %2055 = vrot.lane.b32.xlu0 %v2045, 65
        %v2056 = vpop.permute.xlu0 %2055
        %2057 = vrot.lane.b32.xlu0 %v2046, 65
        %v2058 = vpop.permute.xlu0 %2057
        %vm2059 = vcmask 531456
        %v2060 = vsel %vm2059, %v2052, %v2054
        %v2061 = vsel %vm2059, %v2054, %v2056
        %v2062 = vsel %vm2059, %v2056, %v2058
        %v2068 = vmul.f32 %v527, %v2052
        %v2069 = vmul.f32 %v528, %v2060
        %v2070 = vmul.f32 %v529, %v2061
        %v2071 = vmul.f32 %v530, %v2062
        %v2072 = vmul.f32 %v531, %v2058
        %2078 = vrot.lane.b32.xlu0 %v2068, 85
        %v2079 = vpop.permute.xlu0 %2078
        %2080 = vrot.lane.b32.xlu0 %v2069, 85
        %v2081 = vpop.permute.xlu0 %2080
        %2082 = vrot.lane.b32.xlu0 %v2070, 85
        %v2083 = vpop.permute.xlu0 %2082
        %2084 = vrot.lane.b32.xlu0 %v2071, 85
        %v2085 = vpop.permute.xlu0 %2084
        %2086 = vrot.lane.b32.xlu0 %v2072, 85
        %v2087 = vpop.permute.xlu0 %2086
        %vm2088 = vcmask 695296
        %v2089 = vsel %vm2088, %v2079, %v2081
        %v2090 = vsel %vm2088, %v2081, %v2083
        %v2091 = vsel %vm2088, %v2083, %v2085
        %v2092 = vsel %vm2088, %v2085, %v2087
        %v2098 = vadd.f32 %v1978, %v2089
        %v2099 = vadd.f32 %v1979, %v2090
        %v2100 = vadd.f32 %v1980, %v2091
        %v2101 = vadd.f32 %v1981, %v2092
        %v2102 = vadd.f32 %v1982, %v2087
        %s2103 = scalar_lea.vmem [#allocation3], 1216
        %v2104 = vld [vmem:[%s2103] sm:$0xff]
        %v2105 = vld [vmem:[%s2103 + $0x8] sm:$0xff]
        %v2106 = vld [vmem:[%s2103 + $0x10] sm:$0xff]
        %v2107 = vld [vmem:[%s2103 + $0x18] sm:$0xff]
        %2112 = vrot.lane.b32.xlu0 %v2104, 65
        %v2113 = vpop.permute.xlu0 %2112
        %2114 = vrot.lane.b32.xlu0 %v2105, 65
        %v2115 = vpop.permute.xlu0 %2114
        %2116 = vrot.lane.b32.xlu0 %v2106, 65
        %v2117 = vpop.permute.xlu0 %2116
        %2118 = vrot.lane.b32.xlu0 %v2107, 65
        %v2119 = vpop.permute.xlu0 %2118
        %v2120 = vsel %vm2059, %v2113, %v2115
        %v2121 = vsel %vm2059, %v2115, %v2117
        %v2122 = vsel %vm2059, %v2117, %v2119
        %v2128 = vmul.f32 %v527, %v2113
        %v2129 = vmul.f32 %v528, %v2120
        %v2130 = vmul.f32 %v529, %v2121
        %v2131 = vmul.f32 %v530, %v2122
        %v2132 = vmul.f32 %v531, %v2119
        %2138 = vrot.lane.b32.xlu0 %v2128, 85
        %v2139 = vpop.permute.xlu0 %2138
        %2140 = vrot.lane.b32.xlu0 %v2129, 85
        %v2141 = vpop.permute.xlu0 %2140
        %2142 = vrot.lane.b32.xlu0 %v2130, 85
        %v2143 = vpop.permute.xlu0 %2142
        %2144 = vrot.lane.b32.xlu0 %v2131, 85
        %v2145 = vpop.permute.xlu0 %2144
        %2146 = vrot.lane.b32.xlu0 %v2132, 85
        %v2147 = vpop.permute.xlu0 %2146
        %v2148 = vsel %vm2088, %v2139, %v2141
        %v2149 = vsel %vm2088, %v2141, %v2143
        %v2150 = vsel %vm2088, %v2143, %v2145
        %v2151 = vsel %vm2088, %v2145, %v2147
        %v2157 = vadd.f32 %v2037, %v2148
        %v2158 = vadd.f32 %v2038, %v2149
        %v2159 = vadd.f32 %v2039, %v2150
        %v2160 = vadd.f32 %v2040, %v2151
        %v2161 = vadd.f32 %v2041, %v2147
        %s2162 = scalar_lea.vmem [#allocation3], 448
        %v2163 = vld [vmem:[%s2162] sm:$0xff]
        %v2164 = vld [vmem:[%s2162 + $0x8] sm:$0xff]
        %v2165 = vld [vmem:[%s2162 + $0x10] sm:$0xff]
        %v2166 = vld [vmem:[%s2162 + $0x18] sm:$0xff]
        %2171 = vrot.lane.b32.xlu0 %v2163, 66
        %v2172 = vpop.permute.xlu0 %2171
        %2173 = vrot.lane.b32.xlu0 %v2164, 66
        %v2174 = vpop.permute.xlu0 %2173
        %2175 = vrot.lane.b32.xlu0 %v2165, 66
        %v2176 = vpop.permute.xlu0 %2175
        %2177 = vrot.lane.b32.xlu0 %v2166, 66
        %v2178 = vpop.permute.xlu0 %2177
        %vm2179 = vcmask 539648
        %v2180 = vsel %vm2179, %v2172, %v2174
        %v2181 = vsel %vm2179, %v2174, %v2176
        %v2182 = vsel %vm2179, %v2176, %v2178
        %v2188 = vmul.f32 %v527, %v2172
        %v2189 = vmul.f32 %v528, %v2180
        %v2190 = vmul.f32 %v529, %v2181
        %v2191 = vmul.f32 %v530, %v2182
        %v2192 = vmul.f32 %v531, %v2178
        %2198 = vrot.lane.b32.xlu0 %v2188, 84
        %v2199 = vpop.permute.xlu0 %2198
        %2200 = vrot.lane.b32.xlu0 %v2189, 84
        %v2201 = vpop.permute.xlu0 %2200
        %2202 = vrot.lane.b32.xlu0 %v2190, 84
        %v2203 = vpop.permute.xlu0 %2202
        %2204 = vrot.lane.b32.xlu0 %v2191, 84
        %v2205 = vpop.permute.xlu0 %2204
        %2206 = vrot.lane.b32.xlu0 %v2192, 84
        %v2207 = vpop.permute.xlu0 %2206
        %vm2208 = vcmask 687104
        %v2209 = vsel %vm2208, %v2199, %v2201
        %v2210 = vsel %vm2208, %v2201, %v2203
        %v2211 = vsel %vm2208, %v2203, %v2205
        %v2212 = vsel %vm2208, %v2205, %v2207
        %v2218 = vadd.f32 %v2098, %v2209
        %v2219 = vadd.f32 %v2099, %v2210
        %v2220 = vadd.f32 %v2100, %v2211
        %v2221 = vadd.f32 %v2101, %v2212
        %v2222 = vadd.f32 %v2102, %v2207
        %s2223 = scalar_lea.vmem [#allocation3], 1248
        %v2224 = vld [vmem:[%s2223] sm:$0xff]
        %v2225 = vld [vmem:[%s2223 + $0x8] sm:$0xff]
        %v2226 = vld [vmem:[%s2223 + $0x10] sm:$0xff]
        %v2227 = vld [vmem:[%s2223 + $0x18] sm:$0xff]
        %2232 = vrot.lane.b32.xlu0 %v2224, 66
        %v2233 = vpop.permute.xlu0 %2232
        %2234 = vrot.lane.b32.xlu0 %v2225, 66
        %v2235 = vpop.permute.xlu0 %2234
        %2236 = vrot.lane.b32.xlu0 %v2226, 66
        %v2237 = vpop.permute.xlu0 %2236
        %2238 = vrot.lane.b32.xlu0 %v2227, 66
        %v2239 = vpop.permute.xlu0 %2238
        %v2240 = vsel %vm2179, %v2233, %v2235
        %v2241 = vsel %vm2179, %v2235, %v2237
        %v2242 = vsel %vm2179, %v2237, %v2239
        %v2248 = vmul.f32 %v527, %v2233
        %v2249 = vmul.f32 %v528, %v2240
        %v2250 = vmul.f32 %v529, %v2241
        %v2251 = vmul.f32 %v530, %v2242
        %v2252 = vmul.f32 %v531, %v2239
        %2258 = vrot.lane.b32.xlu0 %v2248, 84
        %v2259 = vpop.permute.xlu0 %2258
        %2260 = vrot.lane.b32.xlu0 %v2249, 84
        %v2261 = vpop.permute.xlu0 %2260
        %2262 = vrot.lane.b32.xlu0 %v2250, 84
        %v2263 = vpop.permute.xlu0 %2262
        %2264 = vrot.lane.b32.xlu0 %v2251, 84
        %v2265 = vpop.permute.xlu0 %2264
        %2266 = vrot.lane.b32.xlu0 %v2252, 84
        %v2267 = vpop.permute.xlu0 %2266
        %v2268 = vsel %vm2208, %v2259, %v2261
        %v2269 = vsel %vm2208, %v2261, %v2263
        %v2270 = vsel %vm2208, %v2263, %v2265
        %v2271 = vsel %vm2208, %v2265, %v2267
        %v2277 = vadd.f32 %v2157, %v2268
        %v2278 = vadd.f32 %v2158, %v2269
        %v2279 = vadd.f32 %v2159, %v2270
        %v2280 = vadd.f32 %v2160, %v2271
        %v2281 = vadd.f32 %v2161, %v2267
        %s2282 = scalar_lea.vmem [#allocation3], 480
        %v2283 = vld [vmem:[%s2282] sm:$0xff]
        %v2284 = vld [vmem:[%s2282 + $0x8] sm:$0xff]
        %v2285 = vld [vmem:[%s2282 + $0x10] sm:$0xff]
        %v2286 = vld [vmem:[%s2282 + $0x18] sm:$0xff]
        %2291 = vrot.lane.b32.xlu0 %v2283, 82
        %v2292 = vpop.permute.xlu0 %2291
        %2293 = vrot.lane.b32.xlu0 %v2284, 82
        %v2294 = vpop.permute.xlu0 %2293
        %2295 = vrot.lane.b32.xlu0 %v2285, 82
        %v2296 = vpop.permute.xlu0 %2295
        %2297 = vrot.lane.b32.xlu0 %v2286, 82
        %v2298 = vpop.permute.xlu0 %2297
        %vm2299 = vcmask 670720
        %v2300 = vsel %vm2299, %v2292, %v2294
        %v2301 = vsel %vm2299, %v2294, %v2296
        %v2302 = vsel %vm2299, %v2296, %v2298
        %v2308 = vmul.f32 %v527, %v2292
        %v2309 = vmul.f32 %v528, %v2300
        %v2310 = vmul.f32 %v529, %v2301
        %v2311 = vmul.f32 %v530, %v2302
        %v2312 = vmul.f32 %v531, %v2298
        %2318 = vrot.lane.b32.xlu0 %v2308, 68
        %v2319 = vpop.permute.xlu0 %2318
        %2320 = vrot.lane.b32.xlu0 %v2309, 68
        %v2321 = vpop.permute.xlu0 %2320
        %2322 = vrot.lane.b32.xlu0 %v2310, 68
        %v2323 = vpop.permute.xlu0 %2322
        %2324 = vrot.lane.b32.xlu0 %v2311, 68
        %v2325 = vpop.permute.xlu0 %2324
        %2326 = vrot.lane.b32.xlu0 %v2312, 68
        %v2327 = vpop.permute.xlu0 %2326
        %vm2328 = vcmask 556032
        %v2329 = vsel %vm2328, %v2319, %v2321
        %v2330 = vsel %vm2328, %v2321, %v2323
        %v2331 = vsel %vm2328, %v2323, %v2325
        %v2332 = vsel %vm2328, %v2325, %v2327
        %v2338 = vadd.f32 %v2218, %v2329
        %v2339 = vadd.f32 %v2219, %v2330
        %v2340 = vadd.f32 %v2220, %v2331
        %v2341 = vadd.f32 %v2221, %v2332
        %v2342 = vadd.f32 %v2222, %v2327
        %s2343 = scalar_lea.vmem [#allocation3], 1280
        %v2344 = vld [vmem:[%s2343] sm:$0xff]
        %v2345 = vld [vmem:[%s2343 + $0x8] sm:$0xff]
        %v2346 = vld [vmem:[%s2343 + $0x10] sm:$0xff]
        %v2347 = vld [vmem:[%s2343 + $0x18] sm:$0xff]
        %2352 = vrot.lane.b32.xlu0 %v2344, 82
        %v2353 = vpop.permute.xlu0 %2352
        %2354 = vrot.lane.b32.xlu0 %v2345, 82
        %v2355 = vpop.permute.xlu0 %2354
        %2356 = vrot.lane.b32.xlu0 %v2346, 82
        %v2357 = vpop.permute.xlu0 %2356
        %2358 = vrot.lane.b32.xlu0 %v2347, 82
        %v2359 = vpop.permute.xlu0 %2358
        %v2360 = vsel %vm2299, %v2353, %v2355
        %v2361 = vsel %vm2299, %v2355, %v2357
        %v2362 = vsel %vm2299, %v2357, %v2359
        %v2368 = vmul.f32 %v527, %v2353
        %v2369 = vmul.f32 %v528, %v2360
        %v2370 = vmul.f32 %v529, %v2361
        %v2371 = vmul.f32 %v530, %v2362
        %v2372 = vmul.f32 %v531, %v2359
        %2378 = vrot.lane.b32.xlu0 %v2368, 68
        %v2379 = vpop.permute.xlu0 %2378
        %2380 = vrot.lane.b32.xlu0 %v2369, 68
        %v2381 = vpop.permute.xlu0 %2380
        %2382 = vrot.lane.b32.xlu0 %v2370, 68
        %v2383 = vpop.permute.xlu0 %2382
        %2384 = vrot.lane.b32.xlu0 %v2371, 68
        %v2385 = vpop.permute.xlu0 %2384
        %2386 = vrot.lane.b32.xlu0 %v2372, 68
        %v2387 = vpop.permute.xlu0 %2386
        %v2388 = vsel %vm2328, %v2379, %v2381
        %v2389 = vsel %vm2328, %v2381, %v2383
        %v2390 = vsel %vm2328, %v2383, %v2385
        %v2391 = vsel %vm2328, %v2385, %v2387
        %v2397 = vadd.f32 %v2277, %v2388
        %v2398 = vadd.f32 %v2278, %v2389
        %v2399 = vadd.f32 %v2279, %v2390
        %v2400 = vadd.f32 %v2280, %v2391
        %v2401 = vadd.f32 %v2281, %v2387
        %s2402 = scalar_lea.vmem [#allocation3], 512
        %v2403 = vld [vmem:[%s2402] sm:$0xff]
        %v2404 = vld [vmem:[%s2402 + $0x8] sm:$0xff]
        %v2405 = vld [vmem:[%s2402 + $0x10] sm:$0xff]
        %v2406 = vld [vmem:[%s2402 + $0x18] sm:$0xff]
        %2411 = vrot.lane.b32.xlu0 %v2403, 83
        %v2412 = vpop.permute.xlu0 %2411
        %2413 = vrot.lane.b32.xlu0 %v2404, 83
        %v2414 = vpop.permute.xlu0 %2413
        %2415 = vrot.lane.b32.xlu0 %v2405, 83
        %v2416 = vpop.permute.xlu0 %2415
        %2417 = vrot.lane.b32.xlu0 %v2406, 83
        %v2418 = vpop.permute.xlu0 %2417
        %vm2419 = vcmask 678912
        %v2420 = vsel %vm2419, %v2412, %v2414
        %v2421 = vsel %vm2419, %v2414, %v2416
        %v2422 = vsel %vm2419, %v2416, %v2418
        %v2428 = vmul.f32 %v527, %v2412
        %v2429 = vmul.f32 %v528, %v2420
        %v2430 = vmul.f32 %v529, %v2421
        %v2431 = vmul.f32 %v530, %v2422
        %v2432 = vmul.f32 %v531, %v2418
        %2438 = vrot.lane.b32.xlu0 %v2428, 67
        %v2439 = vpop.permute.xlu0 %2438
        %2440 = vrot.lane.b32.xlu0 %v2429, 67
        %v2441 = vpop.permute.xlu0 %2440
        %2442 = vrot.lane.b32.xlu0 %v2430, 67
        %v2443 = vpop.permute.xlu0 %2442
        %2444 = vrot.lane.b32.xlu0 %v2431, 67
        %v2445 = vpop.permute.xlu0 %2444
        %2446 = vrot.lane.b32.xlu0 %v2432, 67
        %v2447 = vpop.permute.xlu0 %2446
        %vm2448 = vcmask 547840
        %v2449 = vsel %vm2448, %v2439, %v2441
        %v2450 = vsel %vm2448, %v2441, %v2443
        %v2451 = vsel %vm2448, %v2443, %v2445
        %v2452 = vsel %vm2448, %v2445, %v2447
        %v2458 = vadd.f32 %v2338, %v2449
        %v2459 = vadd.f32 %v2339, %v2450
        %v2460 = vadd.f32 %v2340, %v2451
        %v2461 = vadd.f32 %v2341, %v2452
        %v2462 = vadd.f32 %v2342, %v2447
        %s2463 = scalar_lea.vmem [#allocation3], 1312
        %v2464 = vld [vmem:[%s2463] sm:$0xff]
        %v2465 = vld [vmem:[%s2463 + $0x8] sm:$0xff]
        %v2466 = vld [vmem:[%s2463 + $0x10] sm:$0xff]
        %v2467 = vld [vmem:[%s2463 + $0x18] sm:$0xff]
        %2472 = vrot.lane.b32.xlu0 %v2464, 83
        %v2473 = vpop.permute.xlu0 %2472
        %2474 = vrot.lane.b32.xlu0 %v2465, 83
        %v2475 = vpop.permute.xlu0 %2474
        %2476 = vrot.lane.b32.xlu0 %v2466, 83
        %v2477 = vpop.permute.xlu0 %2476
        %2478 = vrot.lane.b32.xlu0 %v2467, 83
        %v2479 = vpop.permute.xlu0 %2478
        %v2480 = vsel %vm2419, %v2473, %v2475
        %v2481 = vsel %vm2419, %v2475, %v2477
        %v2482 = vsel %vm2419, %v2477, %v2479
        %v2488 = vmul.f32 %v527, %v2473
        %v2489 = vmul.f32 %v528, %v2480
        %v2490 = vmul.f32 %v529, %v2481
        %v2491 = vmul.f32 %v530, %v2482
        %v2492 = vmul.f32 %v531, %v2479
        %2498 = vrot.lane.b32.xlu0 %v2488, 67
        %v2499 = vpop.permute.xlu0 %2498
        %2500 = vrot.lane.b32.xlu0 %v2489, 67
        %v2501 = vpop.permute.xlu0 %2500
        %2502 = vrot.lane.b32.xlu0 %v2490, 67
        %v2503 = vpop.permute.xlu0 %2502
        %2504 = vrot.lane.b32.xlu0 %v2491, 67
        %v2505 = vpop.permute.xlu0 %2504
        %2506 = vrot.lane.b32.xlu0 %v2492, 67
        %v2507 = vpop.permute.xlu0 %2506
        %v2508 = vsel %vm2448, %v2499, %v2501
        %v2509 = vsel %vm2448, %v2501, %v2503
        %v2510 = vsel %vm2448, %v2503, %v2505
        %v2511 = vsel %vm2448, %v2505, %v2507
        %v2517 = vadd.f32 %v2397, %v2508
        %v2518 = vadd.f32 %v2398, %v2509
        %v2519 = vadd.f32 %v2399, %v2510
        %v2520 = vadd.f32 %v2400, %v2511
        %v2521 = vadd.f32 %v2401, %v2507
        %s2522 = scalar_lea.vmem [#allocation3], 544
        %v2523 = vld [vmem:[%s2522] sm:$0xff]
        %v2524 = vld [vmem:[%s2522 + $0x8] sm:$0xff]
        %v2525 = vld [vmem:[%s2522 + $0x10] sm:$0xff]
        %v2526 = vld [vmem:[%s2522 + $0x18] sm:$0xff]
        %2531 = vrot.lane.b32.xlu0 %v2523, 84
        %v2532 = vpop.permute.xlu0 %2531
        %2533 = vrot.lane.b32.xlu0 %v2524, 84
        %v2534 = vpop.permute.xlu0 %2533
        %2535 = vrot.lane.b32.xlu0 %v2525, 84
        %v2536 = vpop.permute.xlu0 %2535
        %2537 = vrot.lane.b32.xlu0 %v2526, 84
        %v2538 = vpop.permute.xlu0 %2537
        %v2539 = vsel %vm2208, %v2532, %v2534
        %v2540 = vsel %vm2208, %v2534, %v2536
        %v2541 = vsel %vm2208, %v2536, %v2538
        %v2547 = vmul.f32 %v527, %v2532
        %v2548 = vmul.f32 %v528, %v2539
        %v2549 = vmul.f32 %v529, %v2540
        %v2550 = vmul.f32 %v530, %v2541
        %v2551 = vmul.f32 %v531, %v2538
        %2557 = vrot.lane.b32.xlu0 %v2547, 66
        %v2558 = vpop.permute.xlu0 %2557
        %2559 = vrot.lane.b32.xlu0 %v2548, 66
        %v2560 = vpop.permute.xlu0 %2559
        %2561 = vrot.lane.b32.xlu0 %v2549, 66
        %v2562 = vpop.permute.xlu0 %2561
        %2563 = vrot.lane.b32.xlu0 %v2550, 66
        %v2564 = vpop.permute.xlu0 %2563
        %2565 = vrot.lane.b32.xlu0 %v2551, 66
        %v2566 = vpop.permute.xlu0 %2565
        %v2567 = vsel %vm2179, %v2558, %v2560
        %v2568 = vsel %vm2179, %v2560, %v2562
        %v2569 = vsel %vm2179, %v2562, %v2564
        %v2570 = vsel %vm2179, %v2564, %v2566
        %v2576 = vadd.f32 %v2458, %v2567
        %v2577 = vadd.f32 %v2459, %v2568
        %v2578 = vadd.f32 %v2460, %v2569
        %v2579 = vadd.f32 %v2461, %v2570
        %v2580 = vadd.f32 %v2462, %v2566
        %s2581 = scalar_lea.vmem [#allocation3], 1344
        %v2582 = vld [vmem:[%s2581] sm:$0xff]
        %v2583 = vld [vmem:[%s2581 + $0x8] sm:$0xff]
        %v2584 = vld [vmem:[%s2581 + $0x10] sm:$0xff]
        %v2585 = vld [vmem:[%s2581 + $0x18] sm:$0xff]
        %2590 = vrot.lane.b32.xlu0 %v2582, 84
        %v2591 = vpop.permute.xlu0 %2590
        %2592 = vrot.lane.b32.xlu0 %v2583, 84
        %v2593 = vpop.permute.xlu0 %2592
        %2594 = vrot.lane.b32.xlu0 %v2584, 84
        %v2595 = vpop.permute.xlu0 %2594
        %2596 = vrot.lane.b32.xlu0 %v2585, 84
        %v2597 = vpop.permute.xlu0 %2596
        %v2598 = vsel %vm2208, %v2591, %v2593
        %v2599 = vsel %vm2208, %v2593, %v2595
        %v2600 = vsel %vm2208, %v2595, %v2597
        %v2606 = vmul.f32 %v527, %v2591
        %v2607 = vmul.f32 %v528, %v2598
        %v2608 = vmul.f32 %v529, %v2599
        %v2609 = vmul.f32 %v530, %v2600
        %v2610 = vmul.f32 %v531, %v2597
        %2616 = vrot.lane.b32.xlu0 %v2606, 66
        %v2617 = vpop.permute.xlu0 %2616
        %2618 = vrot.lane.b32.xlu0 %v2607, 66
        %v2619 = vpop.permute.xlu0 %2618
        %2620 = vrot.lane.b32.xlu0 %v2608, 66
        %v2621 = vpop.permute.xlu0 %2620
        %2622 = vrot.lane.b32.xlu0 %v2609, 66
        %v2623 = vpop.permute.xlu0 %2622
        %2624 = vrot.lane.b32.xlu0 %v2610, 66
        %v2625 = vpop.permute.xlu0 %2624
        %v2626 = vsel %vm2179, %v2617, %v2619
        %v2627 = vsel %vm2179, %v2619, %v2621
        %v2628 = vsel %vm2179, %v2621, %v2623
        %v2629 = vsel %vm2179, %v2623, %v2625
        %v2635 = vadd.f32 %v2517, %v2626
        %v2636 = vadd.f32 %v2518, %v2627
        %v2637 = vadd.f32 %v2519, %v2628
        %v2638 = vadd.f32 %v2520, %v2629
        %v2639 = vadd.f32 %v2521, %v2625
        %s2640 = scalar_lea.vmem [#allocation3], 576
        %v2641 = vld [vmem:[%s2640] sm:$0xff]
        %v2642 = vld [vmem:[%s2640 + $0x8] sm:$0xff]
        %v2643 = vld [vmem:[%s2640 + $0x10] sm:$0xff]
        %v2644 = vld [vmem:[%s2640 + $0x18] sm:$0xff]
        %2649 = vrot.lane.b32.xlu0 %v2641, 85
        %v2650 = vpop.permute.xlu0 %2649
        %2651 = vrot.lane.b32.xlu0 %v2642, 85
        %v2652 = vpop.permute.xlu0 %2651
        %2653 = vrot.lane.b32.xlu0 %v2643, 85
        %v2654 = vpop.permute.xlu0 %2653
        %2655 = vrot.lane.b32.xlu0 %v2644, 85
        %v2656 = vpop.permute.xlu0 %2655
        %v2657 = vsel %vm2088, %v2650, %v2652
        %v2658 = vsel %vm2088, %v2652, %v2654
        %v2659 = vsel %vm2088, %v2654, %v2656
        %v2665 = vmul.f32 %v527, %v2650
        %v2666 = vmul.f32 %v528, %v2657
        %v2667 = vmul.f32 %v529, %v2658
        %v2668 = vmul.f32 %v530, %v2659
        %v2669 = vmul.f32 %v531, %v2656
        %2675 = vrot.lane.b32.xlu0 %v2665, 65
        %v2676 = vpop.permute.xlu0 %2675
        %2677 = vrot.lane.b32.xlu0 %v2666, 65
        %v2678 = vpop.permute.xlu0 %2677
        %2679 = vrot.lane.b32.xlu0 %v2667, 65
        %v2680 = vpop.permute.xlu0 %2679
        %2681 = vrot.lane.b32.xlu0 %v2668, 65
        %v2682 = vpop.permute.xlu0 %2681
        %2683 = vrot.lane.b32.xlu0 %v2669, 65
        %v2684 = vpop.permute.xlu0 %2683
        %v2685 = vsel %vm2059, %v2676, %v2678
        %v2686 = vsel %vm2059, %v2678, %v2680
        %v2687 = vsel %vm2059, %v2680, %v2682
        %v2688 = vsel %vm2059, %v2682, %v2684
        %v2694 = vadd.f32 %v2576, %v2685
        %v2695 = vadd.f32 %v2577, %v2686
        %v2696 = vadd.f32 %v2578, %v2687
        %v2697 = vadd.f32 %v2579, %v2688
        %v2698 = vadd.f32 %v2580, %v2684
        %s2699 = scalar_lea.vmem [#allocation3], 1376
        %v2700 = vld [vmem:[%s2699] sm:$0xff]
        %v2701 = vld [vmem:[%s2699 + $0x8] sm:$0xff]
        %v2702 = vld [vmem:[%s2699 + $0x10] sm:$0xff]
        %v2703 = vld [vmem:[%s2699 + $0x18] sm:$0xff]
        %2708 = vrot.lane.b32.xlu0 %v2700, 85
        %v2709 = vpop.permute.xlu0 %2708
        %2710 = vrot.lane.b32.xlu0 %v2701, 85
        %v2711 = vpop.permute.xlu0 %2710
        %2712 = vrot.lane.b32.xlu0 %v2702, 85
        %v2713 = vpop.permute.xlu0 %2712
        %2714 = vrot.lane.b32.xlu0 %v2703, 85
        %v2715 = vpop.permute.xlu0 %2714
        %v2716 = vsel %vm2088, %v2709, %v2711
        %v2717 = vsel %vm2088, %v2711, %v2713
        %v2718 = vsel %vm2088, %v2713, %v2715
        %v2724 = vmul.f32 %v527, %v2709
        %v2725 = vmul.f32 %v528, %v2716
        %v2726 = vmul.f32 %v529, %v2717
        %v2727 = vmul.f32 %v530, %v2718
        %v2728 = vmul.f32 %v531, %v2715
        %2734 = vrot.lane.b32.xlu0 %v2724, 65
        %v2735 = vpop.permute.xlu0 %2734
        %2736 = vrot.lane.b32.xlu0 %v2725, 65
        %v2737 = vpop.permute.xlu0 %2736
        %2738 = vrot.lane.b32.xlu0 %v2726, 65
        %v2739 = vpop.permute.xlu0 %2738
        %2740 = vrot.lane.b32.xlu0 %v2727, 65
        %v2741 = vpop.permute.xlu0 %2740
        %2742 = vrot.lane.b32.xlu0 %v2728, 65
        %v2743 = vpop.permute.xlu0 %2742
        %v2744 = vsel %vm2059, %v2735, %v2737
        %v2745 = vsel %vm2059, %v2737, %v2739
        %v2746 = vsel %vm2059, %v2739, %v2741
        %v2747 = vsel %vm2059, %v2741, %v2743
        %v2753 = vadd.f32 %v2635, %v2744
        %v2754 = vadd.f32 %v2636, %v2745
        %v2755 = vadd.f32 %v2637, %v2746
        %v2756 = vadd.f32 %v2638, %v2747
        %v2757 = vadd.f32 %v2639, %v2743
        %s2758 = scalar_lea.vmem [#allocation3], 608
        %v2759 = vld [vmem:[%s2758] sm:$0xff]
        %v2760 = vld [vmem:[%s2758 + $0x8] sm:$0xff]
        %v2761 = vld [vmem:[%s2758 + $0x10] sm:$0xff]
        %v2762 = vld [vmem:[%s2758 + $0x18] sm:$0xff]
        %2767 = vrot.lane.b32.xlu0 %v2759, 86
        %v2768 = vpop.permute.xlu0 %2767
        %2769 = vrot.lane.b32.xlu0 %v2760, 86
        %v2770 = vpop.permute.xlu0 %2769
        %2771 = vrot.lane.b32.xlu0 %v2761, 86
        %v2772 = vpop.permute.xlu0 %2771
        %2773 = vrot.lane.b32.xlu0 %v2762, 86
        %v2774 = vpop.permute.xlu0 %2773
        %v2775 = vsel %vm1968, %v2768, %v2770
        %v2776 = vsel %vm1968, %v2770, %v2772
        %v2777 = vsel %vm1968, %v2772, %v2774
        %v2783 = vmul.f32 %v527, %v2768
        %v2784 = vmul.f32 %v528, %v2775
        %v2785 = vmul.f32 %v529, %v2776
        %v2786 = vmul.f32 %v530, %v2777
        %v2787 = vmul.f32 %v531, %v2774
        %2793 = vrot.lane.b32.xlu0 %v2783, 64
        %v2794 = vpop.permute.xlu0 %2793
        %2795 = vrot.lane.b32.xlu0 %v2784, 64
        %v2796 = vpop.permute.xlu0 %2795
        %2797 = vrot.lane.b32.xlu0 %v2785, 64
        %v2798 = vpop.permute.xlu0 %2797
        %2799 = vrot.lane.b32.xlu0 %v2786, 64
        %v2800 = vpop.permute.xlu0 %2799
        %2801 = vrot.lane.b32.xlu0 %v2787, 64
        %v2802 = vpop.permute.xlu0 %2801
        %v2803 = vsel %vm1939, %v2794, %v2796
        %v2804 = vsel %vm1939, %v2796, %v2798
        %v2805 = vsel %vm1939, %v2798, %v2800
        %v2806 = vsel %vm1939, %v2800, %v2802
        %v2812 = vadd.f32 %v2694, %v2803
        %v2813 = vadd.f32 %v2695, %v2804
        %v2814 = vadd.f32 %v2696, %v2805
        %v2815 = vadd.f32 %v2697, %v2806
        %v2816 = vadd.f32 %v2698, %v2802
        %s2817 = scalar_lea.vmem [#allocation3], 1408
        %v2818 = vld [vmem:[%s2817] sm:$0xff]
        %v2819 = vld [vmem:[%s2817 + $0x8] sm:$0xff]
        %v2820 = vld [vmem:[%s2817 + $0x10] sm:$0xff]
        %v2821 = vld [vmem:[%s2817 + $0x18] sm:$0xff]
        %2826 = vrot.lane.b32.xlu0 %v2818, 86
        %v2827 = vpop.permute.xlu0 %2826
        %2828 = vrot.lane.b32.xlu0 %v2819, 86
        %v2829 = vpop.permute.xlu0 %2828
        %2830 = vrot.lane.b32.xlu0 %v2820, 86
        %v2831 = vpop.permute.xlu0 %2830
        %2832 = vrot.lane.b32.xlu0 %v2821, 86
        %v2833 = vpop.permute.xlu0 %2832
        %v2834 = vsel %vm1968, %v2827, %v2829
        %v2835 = vsel %vm1968, %v2829, %v2831
        %v2836 = vsel %vm1968, %v2831, %v2833
        %v2842 = vmul.f32 %v527, %v2827
        %v2843 = vmul.f32 %v528, %v2834
        %v2844 = vmul.f32 %v529, %v2835
        %v2845 = vmul.f32 %v530, %v2836
        %v2846 = vmul.f32 %v531, %v2833
        %2852 = vrot.lane.b32.xlu0 %v2842, 64
        %v2853 = vpop.permute.xlu0 %2852
        %2854 = vrot.lane.b32.xlu0 %v2843, 64
        %v2855 = vpop.permute.xlu0 %2854
        %2856 = vrot.lane.b32.xlu0 %v2844, 64
        %v2857 = vpop.permute.xlu0 %2856
        %2858 = vrot.lane.b32.xlu0 %v2845, 64
        %v2859 = vpop.permute.xlu0 %2858
        %2860 = vrot.lane.b32.xlu0 %v2846, 64
        %v2861 = vpop.permute.xlu0 %2860
        %v2862 = vsel %vm1939, %v2853, %v2855
        %v2863 = vsel %vm1939, %v2855, %v2857
        %v2864 = vsel %vm1939, %v2857, %v2859
        %v2865 = vsel %vm1939, %v2859, %v2861
        %v2871 = vadd.f32 %v2753, %v2862
        %v2872 = vadd.f32 %v2754, %v2863
        %v2873 = vadd.f32 %v2755, %v2864
        %v2874 = vadd.f32 %v2756, %v2865
        %v2875 = vadd.f32 %v2757, %v2861
        %s2876 = scalar_lea.vmem [#allocation3], 640
        %v2877 = vld [vmem:[%s2876] sm:$0xff]
        %v2878 = vld [vmem:[%s2876 + $0x8] sm:$0xff]
        %v2879 = vld [vmem:[%s2876 + $0x10] sm:$0xff]
        %v2880 = vld [vmem:[%s2876 + $0x18] sm:$0xff]
        %2885 = vrot.lane.b32.xlu0 %v2877, 102
        %v2886 = vpop.permute.xlu0 %2885
        %2887 = vrot.lane.b32.xlu0 %v2878, 102
        %v2888 = vpop.permute.xlu0 %2887
        %2889 = vrot.lane.b32.xlu0 %v2879, 102
        %v2890 = vpop.permute.xlu0 %2889
        %2891 = vrot.lane.b32.xlu0 %v2880, 102
        %v2892 = vpop.permute.xlu0 %2891
        %vm2893 = vcmask 834560
        %v2894 = vsel %vm2893, %v2886, %v2888
        %v2895 = vsel %vm2893, %v2888, %v2890
        %v2896 = vsel %vm2893, %v2890, %v2892
        %v2902 = vmul.f32 %v527, %v2886
        %v2903 = vmul.f32 %v528, %v2894
        %v2904 = vmul.f32 %v529, %v2895
        %v2905 = vmul.f32 %v530, %v2896
        %v2906 = vmul.f32 %v531, %v2892
        %2912 = vrot.lane.b32.xlu0 %v2902, 48
        %v2913 = vpop.permute.xlu0 %2912
        %2914 = vrot.lane.b32.xlu0 %v2903, 48
        %v2915 = vpop.permute.xlu0 %2914
        %2916 = vrot.lane.b32.xlu0 %v2904, 48
        %v2917 = vpop.permute.xlu0 %2916
        %2918 = vrot.lane.b32.xlu0 %v2905, 48
        %v2919 = vpop.permute.xlu0 %2918
        %2920 = vrot.lane.b32.xlu0 %v2906, 48
        %v2921 = vpop.permute.xlu0 %2920
        %vm2922 = vcmask 392192
        %v2923 = vsel %vm2922, %v2913, %v2915
        %v2924 = vsel %vm2922, %v2915, %v2917
        %v2925 = vsel %vm2922, %v2917, %v2919
        %v2926 = vsel %vm2922, %v2919, %v2921
        %v2932 = vadd.f32 %v2812, %v2923
        %v2933 = vadd.f32 %v2813, %v2924
        %v2934 = vadd.f32 %v2814, %v2925
        %v2935 = vadd.f32 %v2815, %v2926
        %v2936 = vadd.f32 %v2816, %v2921
        %s2937 = scalar_lea.vmem [#allocation3], 1440
        %v2938 = vld [vmem:[%s2937] sm:$0xff]
        %v2939 = vld [vmem:[%s2937 + $0x8] sm:$0xff]
        %v2940 = vld [vmem:[%s2937 + $0x10] sm:$0xff]
        %v2941 = vld [vmem:[%s2937 + $0x18] sm:$0xff]
        %2946 = vrot.lane.b32.xlu0 %v2938, 102
        %v2947 = vpop.permute.xlu0 %2946
        %2948 = vrot.lane.b32.xlu0 %v2939, 102
        %v2949 = vpop.permute.xlu0 %2948
        %2950 = vrot.lane.b32.xlu0 %v2940, 102
        %v2951 = vpop.permute.xlu0 %2950
        %2952 = vrot.lane.b32.xlu0 %v2941, 102
        %v2953 = vpop.permute.xlu0 %2952
        %v2954 = vsel %vm2893, %v2947, %v2949
        %v2955 = vsel %vm2893, %v2949, %v2951
        %v2956 = vsel %vm2893, %v2951, %v2953
        %v2962 = vmul.f32 %v527, %v2947
        %v2963 = vmul.f32 %v528, %v2954
        %v2964 = vmul.f32 %v529, %v2955
        %v2965 = vmul.f32 %v530, %v2956
        %v2966 = vmul.f32 %v531, %v2953
        %2972 = vrot.lane.b32.xlu0 %v2962, 48
        %v2973 = vpop.permute.xlu0 %2972
        %2974 = vrot.lane.b32.xlu0 %v2963, 48
        %v2975 = vpop.permute.xlu0 %2974
        %2976 = vrot.lane.b32.xlu0 %v2964, 48
        %v2977 = vpop.permute.xlu0 %2976
        %2978 = vrot.lane.b32.xlu0 %v2965, 48
        %v2979 = vpop.permute.xlu0 %2978
        %2980 = vrot.lane.b32.xlu0 %v2966, 48
        %v2981 = vpop.permute.xlu0 %2980
        %v2982 = vsel %vm2922, %v2973, %v2975
        %v2983 = vsel %vm2922, %v2975, %v2977
        %v2984 = vsel %vm2922, %v2977, %v2979
        %v2985 = vsel %vm2922, %v2979, %v2981
        %v2991 = vadd.f32 %v2871, %v2982
        %v2992 = vadd.f32 %v2872, %v2983
        %v2993 = vadd.f32 %v2873, %v2984
        %v2994 = vadd.f32 %v2874, %v2985
        %v2995 = vadd.f32 %v2875, %v2981
        %s2996 = scalar_lea.vmem [#allocation3], 672
        %v2997 = vld [vmem:[%s2996] sm:$0xff]
        %v2998 = vld [vmem:[%s2996 + $0x8] sm:$0xff]
        %v2999 = vld [vmem:[%s2996 + $0x10] sm:$0xff]
        %v3000 = vld [vmem:[%s2996 + $0x18] sm:$0xff]
        %3005 = vrot.lane.b32.xlu0 %v2997, 103
        %v3006 = vpop.permute.xlu0 %3005
        %3007 = vrot.lane.b32.xlu0 %v2998, 103
        %v3008 = vpop.permute.xlu0 %3007
        %3009 = vrot.lane.b32.xlu0 %v2999, 103
        %v3010 = vpop.permute.xlu0 %3009
        %3011 = vrot.lane.b32.xlu0 %v3000, 103
        %v3012 = vpop.permute.xlu0 %3011
        %vm3013 = vcmask 842752
        %v3014 = vsel %vm3013, %v3006, %v3008
        %v3015 = vsel %vm3013, %v3008, %v3010
        %v3016 = vsel %vm3013, %v3010, %v3012
        %v3022 = vmul.f32 %v527, %v3006
        %v3023 = vmul.f32 %v528, %v3014
        %v3024 = vmul.f32 %v529, %v3015
        %v3025 = vmul.f32 %v530, %v3016
        %v3026 = vmul.f32 %v531, %v3012
        %3032 = vrot.lane.b32.xlu0 %v3022, 47
        %v3033 = vpop.permute.xlu0 %3032
        %3034 = vrot.lane.b32.xlu0 %v3023, 47
        %v3035 = vpop.permute.xlu0 %3034
        %3036 = vrot.lane.b32.xlu0 %v3024, 47
        %v3037 = vpop.permute.xlu0 %3036
        %3038 = vrot.lane.b32.xlu0 %v3025, 47
        %v3039 = vpop.permute.xlu0 %3038
        %3040 = vrot.lane.b32.xlu0 %v3026, 47
        %v3041 = vpop.permute.xlu0 %3040
        %vm3042 = vcmask 384000
        %v3043 = vsel %vm3042, %v3033, %v3035
        %v3044 = vsel %vm3042, %v3035, %v3037
        %v3045 = vsel %vm3042, %v3037, %v3039
        %v3046 = vsel %vm3042, %v3039, %v3041
        %v3052 = vadd.f32 %v2932, %v3043
        %v3053 = vadd.f32 %v2933, %v3044
        %v3054 = vadd.f32 %v2934, %v3045
        %v3055 = vadd.f32 %v2935, %v3046
        %v3056 = vadd.f32 %v2936, %v3041
        %s3057 = scalar_lea.vmem [#allocation3], 1472
        %v3058 = vld [vmem:[%s3057] sm:$0xff]
        %v3059 = vld [vmem:[%s3057 + $0x8] sm:$0xff]
        %v3060 = vld [vmem:[%s3057 + $0x10] sm:$0xff]
        %v3061 = vld [vmem:[%s3057 + $0x18] sm:$0xff]
        %3066 = vrot.lane.b32.xlu0 %v3058, 103
        %v3067 = vpop.permute.xlu0 %3066
        %3068 = vrot.lane.b32.xlu0 %v3059, 103
        %v3069 = vpop.permute.xlu0 %3068
        %3070 = vrot.lane.b32.xlu0 %v3060, 103
        %v3071 = vpop.permute.xlu0 %3070
        %3072 = vrot.lane.b32.xlu0 %v3061, 103
        %v3073 = vpop.permute.xlu0 %3072
        %v3074 = vsel %vm3013, %v3067, %v3069
        %v3075 = vsel %vm3013, %v3069, %v3071
        %v3076 = vsel %vm3013, %v3071, %v3073
        %v3082 = vmul.f32 %v527, %v3067
        %v3083 = vmul.f32 %v528, %v3074
        %v3084 = vmul.f32 %v529, %v3075
        %v3085 = vmul.f32 %v530, %v3076
        %v3086 = vmul.f32 %v531, %v3073
        %3092 = vrot.lane.b32.xlu0 %v3082, 47
        %v3093 = vpop.permute.xlu0 %3092
        %3094 = vrot.lane.b32.xlu0 %v3083, 47
        %v3095 = vpop.permute.xlu0 %3094
        %3096 = vrot.lane.b32.xlu0 %v3084, 47
        %v3097 = vpop.permute.xlu0 %3096
        %3098 = vrot.lane.b32.xlu0 %v3085, 47
        %v3099 = vpop.permute.xlu0 %3098
        %3100 = vrot.lane.b32.xlu0 %v3086, 47
        %v3101 = vpop.permute.xlu0 %3100
        %v3102 = vsel %vm3042, %v3093, %v3095
        %v3103 = vsel %vm3042, %v3095, %v3097
        %v3104 = vsel %vm3042, %v3097, %v3099
        %v3105 = vsel %vm3042, %v3099, %v3101
        %v3111 = vadd.f32 %v2991, %v3102
        %v3112 = vadd.f32 %v2992, %v3103
        %v3113 = vadd.f32 %v2993, %v3104
        %v3114 = vadd.f32 %v2994, %v3105
        %v3115 = vadd.f32 %v2995, %v3101
        %s3116 = scalar_lea.vmem [#allocation3], 704
        %v3117 = vld [vmem:[%s3116] sm:$0xff]
        %v3118 = vld [vmem:[%s3116 + $0x8] sm:$0xff]
        %v3119 = vld [vmem:[%s3116 + $0x10] sm:$0xff]
        %v3120 = vld [vmem:[%s3116 + $0x18] sm:$0xff]
        %3125 = vrot.lane.b32.xlu0 %v3117, 104
        %v3126 = vpop.permute.xlu0 %3125
        %3127 = vrot.lane.b32.xlu0 %v3118, 104
        %v3128 = vpop.permute.xlu0 %3127
        %3129 = vrot.lane.b32.xlu0 %v3119, 104
        %v3130 = vpop.permute.xlu0 %3129
        %3131 = vrot.lane.b32.xlu0 %v3120, 104
        %v3132 = vpop.permute.xlu0 %3131
        %v3133 = vsel %vm1608, %v3126, %v3128
        %v3134 = vsel %vm1608, %v3128, %v3130
        %v3135 = vsel %vm1608, %v3130, %v3132
        %v3141 = vmul.f32 %v527, %v3126
        %v3142 = vmul.f32 %v528, %v3133
        %v3143 = vmul.f32 %v529, %v3134
        %v3144 = vmul.f32 %v530, %v3135
        %v3145 = vmul.f32 %v531, %v3132
        %3151 = vrot.lane.b32.xlu0 %v3141, 46
        %v3152 = vpop.permute.xlu0 %3151
        %3153 = vrot.lane.b32.xlu0 %v3142, 46
        %v3154 = vpop.permute.xlu0 %3153
        %3155 = vrot.lane.b32.xlu0 %v3143, 46
        %v3156 = vpop.permute.xlu0 %3155
        %3157 = vrot.lane.b32.xlu0 %v3144, 46
        %v3158 = vpop.permute.xlu0 %3157
        %3159 = vrot.lane.b32.xlu0 %v3145, 46
        %v3160 = vpop.permute.xlu0 %3159
        %v3161 = vsel %vm1579, %v3152, %v3154
        %v3162 = vsel %vm1579, %v3154, %v3156
        %v3163 = vsel %vm1579, %v3156, %v3158
        %v3164 = vsel %vm1579, %v3158, %v3160
        %v3170 = vadd.f32 %v3052, %v3161
        %v3171 = vadd.f32 %v3053, %v3162
        %v3172 = vadd.f32 %v3054, %v3163
        %v3173 = vadd.f32 %v3055, %v3164
        %v3174 = vadd.f32 %v3056, %v3160
        %s3175 = scalar_lea.vmem [#allocation3], 1504
        %v3176 = vld [vmem:[%s3175] sm:$0xff]
        %v3177 = vld [vmem:[%s3175 + $0x8] sm:$0xff]
        %v3178 = vld [vmem:[%s3175 + $0x10] sm:$0xff]
        %v3179 = vld [vmem:[%s3175 + $0x18] sm:$0xff]
        %3184 = vrot.lane.b32.xlu0 %v3176, 104
        %v3185 = vpop.permute.xlu0 %3184
        %3186 = vrot.lane.b32.xlu0 %v3177, 104
        %v3187 = vpop.permute.xlu0 %3186
        %3188 = vrot.lane.b32.xlu0 %v3178, 104
        %v3189 = vpop.permute.xlu0 %3188
        %3190 = vrot.lane.b32.xlu0 %v3179, 104
        %v3191 = vpop.permute.xlu0 %3190
        %v3192 = vsel %vm1608, %v3185, %v3187
        %v3193 = vsel %vm1608, %v3187, %v3189
        %v3194 = vsel %vm1608, %v3189, %v3191
        %v3200 = vmul.f32 %v527, %v3185
        %v3201 = vmul.f32 %v528, %v3192
        %v3202 = vmul.f32 %v529, %v3193
        %v3203 = vmul.f32 %v530, %v3194
        %v3204 = vmul.f32 %v531, %v3191
        %3210 = vrot.lane.b32.xlu0 %v3200, 46
        %v3211 = vpop.permute.xlu0 %3210
        %3212 = vrot.lane.b32.xlu0 %v3201, 46
        %v3213 = vpop.permute.xlu0 %3212
        %3214 = vrot.lane.b32.xlu0 %v3202, 46
        %v3215 = vpop.permute.xlu0 %3214
        %3216 = vrot.lane.b32.xlu0 %v3203, 46
        %v3217 = vpop.permute.xlu0 %3216
        %3218 = vrot.lane.b32.xlu0 %v3204, 46
        %v3219 = vpop.permute.xlu0 %3218
        %v3220 = vsel %vm1579, %v3211, %v3213
        %v3221 = vsel %vm1579, %v3213, %v3215
        %v3222 = vsel %vm1579, %v3215, %v3217
        %v3223 = vsel %vm1579, %v3217, %v3219
        %v3229 = vadd.f32 %v3111, %v3220
        %v3230 = vadd.f32 %v3112, %v3221
        %v3231 = vadd.f32 %v3113, %v3222
        %v3232 = vadd.f32 %v3114, %v3223
        %v3233 = vadd.f32 %v3115, %v3219
        %s3234 = scalar_lea.vmem [#allocation3], 736
        %v3235 = vld [vmem:[%s3234] sm:$0xff]
        %v3236 = vld [vmem:[%s3234 + $0x8] sm:$0xff]
        %v3237 = vld [vmem:[%s3234 + $0x10] sm:$0xff]
        %v3238 = vld [vmem:[%s3234 + $0x18] sm:$0xff]
        %3243 = vrot.lane.b32.xlu0 %v3235, 105
        %v3244 = vpop.permute.xlu0 %3243
        %3245 = vrot.lane.b32.xlu0 %v3236, 105
        %v3246 = vpop.permute.xlu0 %3245
        %3247 = vrot.lane.b32.xlu0 %v3237, 105
        %v3248 = vpop.permute.xlu0 %3247
        %3249 = vrot.lane.b32.xlu0 %v3238, 105
        %v3250 = vpop.permute.xlu0 %3249
        %v3251 = vsel %vm1488, %v3244, %v3246
        %v3252 = vsel %vm1488, %v3246, %v3248
        %v3253 = vsel %vm1488, %v3248, %v3250
        %v3259 = vmul.f32 %v527, %v3244
        %v3260 = vmul.f32 %v528, %v3251
        %v3261 = vmul.f32 %v529, %v3252
        %v3262 = vmul.f32 %v530, %v3253
        %v3263 = vmul.f32 %v531, %v3250
        %3269 = vrot.lane.b32.xlu0 %v3259, 45
        %v3270 = vpop.permute.xlu0 %3269
        %3271 = vrot.lane.b32.xlu0 %v3260, 45
        %v3272 = vpop.permute.xlu0 %3271
        %3273 = vrot.lane.b32.xlu0 %v3261, 45
        %v3274 = vpop.permute.xlu0 %3273
        %3275 = vrot.lane.b32.xlu0 %v3262, 45
        %v3276 = vpop.permute.xlu0 %3275
        %3277 = vrot.lane.b32.xlu0 %v3263, 45
        %v3278 = vpop.permute.xlu0 %3277
        %v3279 = vsel %vm1459, %v3270, %v3272
        %v3280 = vsel %vm1459, %v3272, %v3274
        %v3281 = vsel %vm1459, %v3274, %v3276
        %v3282 = vsel %vm1459, %v3276, %v3278
        %v3288 = vadd.f32 %v3170, %v3279
        %v3289 = vadd.f32 %v3171, %v3280
        %v3290 = vadd.f32 %v3172, %v3281
        %v3291 = vadd.f32 %v3173, %v3282
        %v3292 = vadd.f32 %v3174, %v3278
        %s3293 = scalar_lea.vmem [#allocation3], 1536
        %v3294 = vld [vmem:[%s3293] sm:$0xff]
        %v3295 = vld [vmem:[%s3293 + $0x8] sm:$0xff]
        %v3296 = vld [vmem:[%s3293 + $0x10] sm:$0xff]
        %v3297 = vld [vmem:[%s3293 + $0x18] sm:$0xff]
        %3302 = vrot.lane.b32.xlu0 %v3294, 105
        %v3303 = vpop.permute.xlu0 %3302
        %3304 = vrot.lane.b32.xlu0 %v3295, 105
        %v3305 = vpop.permute.xlu0 %3304
        %3306 = vrot.lane.b32.xlu0 %v3296, 105
        %v3307 = vpop.permute.xlu0 %3306
        %3308 = vrot.lane.b32.xlu0 %v3297, 105
        %v3309 = vpop.permute.xlu0 %3308
        %v3310 = vsel %vm1488, %v3303, %v3305
        %v3311 = vsel %vm1488, %v3305, %v3307
        %v3312 = vsel %vm1488, %v3307, %v3309
        %v3318 = vmul.f32 %v527, %v3303
        %v3319 = vmul.f32 %v528, %v3310
        %v3320 = vmul.f32 %v529, %v3311
        %v3321 = vmul.f32 %v530, %v3312
        %v3322 = vmul.f32 %v531, %v3309
        %3328 = vrot.lane.b32.xlu0 %v3318, 45
        %v3329 = vpop.permute.xlu0 %3328
        %3330 = vrot.lane.b32.xlu0 %v3319, 45
        %v3331 = vpop.permute.xlu0 %3330
        %3332 = vrot.lane.b32.xlu0 %v3320, 45
        %v3333 = vpop.permute.xlu0 %3332
        %3334 = vrot.lane.b32.xlu0 %v3321, 45
        %v3335 = vpop.permute.xlu0 %3334
        %3336 = vrot.lane.b32.xlu0 %v3322, 45
        %v3337 = vpop.permute.xlu0 %3336
        %v3338 = vsel %vm1459, %v3329, %v3331
        %v3339 = vsel %vm1459, %v3331, %v3333
        %v3340 = vsel %vm1459, %v3333, %v3335
        %v3341 = vsel %vm1459, %v3335, %v3337
        %v3347 = vadd.f32 %v3229, %v3338
        %v3348 = vadd.f32 %v3230, %v3339
        %v3349 = vadd.f32 %v3231, %v3340
        %v3350 = vadd.f32 %v3232, %v3341
        %v3351 = vadd.f32 %v3233, %v3337
        %s3352 = scalar_lea.vmem [#allocation3], 768
        %v3353 = vld [vmem:[%s3352] sm:$0xff]
        %v3354 = vld [vmem:[%s3352 + $0x8] sm:$0xff]
        %v3355 = vld [vmem:[%s3352 + $0x10] sm:$0xff]
        %v3356 = vld [vmem:[%s3352 + $0x18] sm:$0xff]
        %3361 = vrot.lane.b32.xlu0 %v3353, 106
        %v3362 = vpop.permute.xlu0 %3361
        %3363 = vrot.lane.b32.xlu0 %v3354, 106
        %v3364 = vpop.permute.xlu0 %3363
        %3365 = vrot.lane.b32.xlu0 %v3355, 106
        %v3366 = vpop.permute.xlu0 %3365
        %3367 = vrot.lane.b32.xlu0 %v3356, 106
        %v3368 = vpop.permute.xlu0 %3367
        %v3369 = vsel %vm1368, %v3362, %v3364
        %v3370 = vsel %vm1368, %v3364, %v3366
        %v3371 = vsel %vm1368, %v3366, %v3368
        %v3377 = vmul.f32 %v527, %v3362
        %v3378 = vmul.f32 %v528, %v3369
        %v3379 = vmul.f32 %v529, %v3370
        %v3380 = vmul.f32 %v530, %v3371
        %v3381 = vmul.f32 %v531, %v3368
        %3387 = vrot.lane.b32.xlu0 %v3377, 44
        %v3388 = vpop.permute.xlu0 %3387
        %3389 = vrot.lane.b32.xlu0 %v3378, 44
        %v3390 = vpop.permute.xlu0 %3389
        %3391 = vrot.lane.b32.xlu0 %v3379, 44
        %v3392 = vpop.permute.xlu0 %3391
        %3393 = vrot.lane.b32.xlu0 %v3380, 44
        %v3394 = vpop.permute.xlu0 %3393
        %3395 = vrot.lane.b32.xlu0 %v3381, 44
        %v3396 = vpop.permute.xlu0 %3395
        %v3397 = vsel %vm1339, %v3388, %v3390
        %v3398 = vsel %vm1339, %v3390, %v3392
        %v3399 = vsel %vm1339, %v3392, %v3394
        %v3400 = vsel %vm1339, %v3394, %v3396
        %v3406 = vadd.f32 %v3288, %v3397
        %v3407 = vadd.f32 %v3289, %v3398
        %v3408 = vadd.f32 %v3290, %v3399
        %v3409 = vadd.f32 %v3291, %v3400
        %v3410 = vadd.f32 %v3292, %v3396
        %s3411 = scalar_lea.vmem [#allocation3], 1568
        %v3412 = vld [vmem:[%s3411] sm:$0xff]
        %v3413 = vld [vmem:[%s3411 + $0x8] sm:$0xff]
        %v3414 = vld [vmem:[%s3411 + $0x10] sm:$0xff]
        %v3415 = vld [vmem:[%s3411 + $0x18] sm:$0xff]
        %3420 = vrot.lane.b32.xlu0 %v3412, 106
        %v3421 = vpop.permute.xlu0 %3420
        %3422 = vrot.lane.b32.xlu0 %v3413, 106
        %v3423 = vpop.permute.xlu0 %3422
        %3424 = vrot.lane.b32.xlu0 %v3414, 106
        %v3425 = vpop.permute.xlu0 %3424
        %3426 = vrot.lane.b32.xlu0 %v3415, 106
        %v3427 = vpop.permute.xlu0 %3426
        %v3428 = vsel %vm1368, %v3421, %v3423
        %v3429 = vsel %vm1368, %v3423, %v3425
        %v3430 = vsel %vm1368, %v3425, %v3427
        %v3436 = vmul.f32 %v527, %v3421
        %v3437 = vmul.f32 %v528, %v3428
        %v3438 = vmul.f32 %v529, %v3429
        %v3439 = vmul.f32 %v530, %v3430
        %v3440 = vmul.f32 %v531, %v3427
        %3446 = vrot.lane.b32.xlu0 %v3436, 44
        %v3447 = vpop.permute.xlu0 %3446
        %3448 = vrot.lane.b32.xlu0 %v3437, 44
        %v3449 = vpop.permute.xlu0 %3448
        %3450 = vrot.lane.b32.xlu0 %v3438, 44
        %v3451 = vpop.permute.xlu0 %3450
        %3452 = vrot.lane.b32.xlu0 %v3439, 44
        %v3453 = vpop.permute.xlu0 %3452
        %3454 = vrot.lane.b32.xlu0 %v3440, 44
        %v3455 = vpop.permute.xlu0 %3454
        %v3456 = vsel %vm1339, %v3447, %v3449
        %v3457 = vsel %vm1339, %v3449, %v3451
        %v3458 = vsel %vm1339, %v3451, %v3453
        %v3459 = vsel %vm1339, %v3453, %v3455
        %v3465 = vadd.f32 %v3347, %v3456
        %v3466 = vadd.f32 %v3348, %v3457
        %v3467 = vadd.f32 %v3349, %v3458
        %v3468 = vadd.f32 %v3350, %v3459
        %v3469 = vadd.f32 %v3351, %v3455
        %v3470 = vld [vmem:[%s4] sm:$0xff]
        %v3471 = vld [vmem:[%s4 + $0x8] sm:$0xff]
        %v3472 = vld [vmem:[%s4 + $0x10] sm:$0xff]
        %v3473 = vld [vmem:[%s4 + $0x18] sm:$0xff]
        %3478 = vrot.lane.b32.xlu0 %v3470, 22
        %v3479 = vpop.permute.xlu0 %3478
        %3480 = vrot.lane.b32.xlu0 %v3471, 22
        %v3481 = vpop.permute.xlu0 %3480
        %3482 = vrot.lane.b32.xlu0 %v3472, 22
        %v3483 = vpop.permute.xlu0 %3482
        %3484 = vrot.lane.b32.xlu0 %v3473, 22
        %v3485 = vpop.permute.xlu0 %3484
        %v3486 = vsel %vm548, %v3479, %v3481
        %v3487 = vsel %vm548, %v3481, %v3483
        %v3488 = vsel %vm548, %v3483, %v3485
        %v3494 = vmul.f32 %v3406, %v3479
        %v3495 = vmul.f32 %v3407, %v3486
        %v3496 = vmul.f32 %v3408, %v3487
        %v3497 = vmul.f32 %v3409, %v3488
        %v3498 = vmul.f32 %v3410, %v3485
        %3504 = vrot.lane.b32.xlu0 %v3494, 106
        %v3505 = vpop.permute.xlu0 %3504
        %3506 = vrot.lane.b32.xlu0 %v3495, 106
        %v3507 = vpop.permute.xlu0 %3506
        %3508 = vrot.lane.b32.xlu0 %v3496, 106
        %v3509 = vpop.permute.xlu0 %3508
        %3510 = vrot.lane.b32.xlu0 %v3497, 106
        %v3511 = vpop.permute.xlu0 %3510
        %3512 = vrot.lane.b32.xlu0 %v3498, 106
        %v3513 = vpop.permute.xlu0 %3512
        %v3514 = vsel %vm1368, %v3505, %v3507
        %v3515 = vsel %vm1368, %v3507, %v3509
        %v3516 = vsel %vm1368, %v3509, %v3511
        %v3517 = vsel %vm1368, %v3511, %v3513
        %v3522 = vadd.f32 %v3514, %v3515
        %v3523 = vadd.f32 %v3522, %v3516
        %v3524 = vadd.f32 %v3523, %v3517
        %3525 = vadd.xlane.f32.xlu0 %v3524
        %v3526 = vpop.xlane.xlu0 %3525
        %v3527 = vmul.f32 %v3526, 0.00390625
        %v3528 = vsub.f32 %v3494, %v3527
        %v3529 = vsub.f32 %v3495, %v3527
        %v3530 = vsub.f32 %v3496, %v3527
        %v3531 = vsub.f32 %v3497, %v3527
        %v3532 = vsub.f32 %v3498, %v3527
        %v3533 = vmul.f32 %v3528, %v3479
        %v3534 = vmul.f32 %v3529, %v3486
        %v3535 = vmul.f32 %v3530, %v3487
        %v3536 = vmul.f32 %v3531, %v3488
        %v3537 = vmul.f32 %v3532, %v3485
        %v3538 = vmul.f32 %v3533, %v3528
        %v3539 = vmul.f32 %v3534, %v3529
        %v3540 = vmul.f32 %v3535, %v3530
        %v3541 = vmul.f32 %v3536, %v3531
        %v3542 = vmul.f32 %v3537, %v3532
        %3548 = vrot.lane.b32.xlu0 %v3538, 106
        %v3549 = vpop.permute.xlu0 %3548
        %3550 = vrot.lane.b32.xlu0 %v3539, 106
        %v3551 = vpop.permute.xlu0 %3550
        %3552 = vrot.lane.b32.xlu0 %v3540, 106
        %v3553 = vpop.permute.xlu0 %3552
        %3554 = vrot.lane.b32.xlu0 %v3541, 106
        %v3555 = vpop.permute.xlu0 %3554
        %3556 = vrot.lane.b32.xlu0 %v3542, 106
        %v3557 = vpop.permute.xlu0 %3556
        %v3558 = vsel %vm1368, %v3549, %v3551
        %v3559 = vsel %vm1368, %v3551, %v3553
        %v3560 = vsel %vm1368, %v3553, %v3555
        %v3561 = vsel %vm1368, %v3555, %v3557
        %v3566 = vadd.f32 %v3558, %v3559
        %v3567 = vadd.f32 %v3566, %v3560
        %v3568 = vadd.f32 %v3567, %v3561
        %3569 = vadd.xlane.f32.xlu0 %v3568
        %v3570 = vpop.xlane.xlu0 %3569
        %v3571 = vmul.f32 %v3570, 0.00390625
        %v3572 = vadd.f32 %v3571, 1e-05
        %v3573 = vrsqrt.pop %v3572
        %v3574 = vmul.f32 %v3573, %v3572
        %v3575 = vmul.f32 %v3574, %v3573
        %v3576 = vmul.f32 0.5, %v3575
        %v3577 = vsub.f32 1.5, %v3576
        %v3578 = vmul.f32 %v3573, %v3577
        %vm3579 = vweird.f32 %v3572
        %vm3580 = vweird.f32 %v3573
        %vm3581 = vmor %vm3579, %vm3580
        %v3582 = vsel %vm3581, %v3573, %v3578
        %v3583 = vmul.f32 %v3528, %v3582
        %v3584 = vmul.f32 %v3529, %v3582
        %v3585 = vmul.f32 %v3530, %v3582
        %v3586 = vmul.f32 %v3531, %v3582
        %v3587 = vmul.f32 %v3532, %v3582
        %v3588 = vmax.f32 %v3583, 0.0
        %v3589 = vmax.f32 %v3584, 0.0
        %v3590 = vmax.f32 %v3585, 0.0
        %v3591 = vmax.f32 %v3586, 0.0
        %v3592 = vmax.f32 %v3587, 0.0
        %v3593 = vmul.f32 %v3465, %v3479
        %v3594 = vmul.f32 %v3466, %v3486
        %v3595 = vmul.f32 %v3467, %v3487
        %v3596 = vmul.f32 %v3468, %v3488
        %v3597 = vmul.f32 %v3469, %v3485
        %3603 = vrot.lane.b32.xlu0 %v3593, 106
        %v3604 = vpop.permute.xlu0 %3603
        %3605 = vrot.lane.b32.xlu0 %v3594, 106
        %v3606 = vpop.permute.xlu0 %3605
        %3607 = vrot.lane.b32.xlu0 %v3595, 106
        %v3608 = vpop.permute.xlu0 %3607
        %3609 = vrot.lane.b32.xlu0 %v3596, 106
        %v3610 = vpop.permute.xlu0 %3609
        %3611 = vrot.lane.b32.xlu0 %v3597, 106
        %v3612 = vpop.permute.xlu0 %3611
        %v3613 = vsel %vm1368, %v3604, %v3606
        %v3614 = vsel %vm1368, %v3606, %v3608
        %v3615 = vsel %vm1368, %v3608, %v3610
        %v3616 = vsel %vm1368, %v3610, %v3612
        %v3621 = vadd.f32 %v3613, %v3614
        %v3622 = vadd.f32 %v3621, %v3615
        %v3623 = vadd.f32 %v3622, %v3616
        %3624 = vadd.xlane.f32.xlu0 %v3623
        %v3625 = vpop.xlane.xlu0 %3624
        %v3626 = vmul.f32 %v3625, 0.00390625
        %v3627 = vsub.f32 %v3593, %v3626
        %v3628 = vsub.f32 %v3594, %v3626
        %v3629 = vsub.f32 %v3595, %v3626
        %v3630 = vsub.f32 %v3596, %v3626
        %v3631 = vsub.f32 %v3597, %v3626
        %v3632 = vmul.f32 %v3627, %v3479
        %v3633 = vmul.f32 %v3628, %v3486
        %v3634 = vmul.f32 %v3629, %v3487
        %v3635 = vmul.f32 %v3630, %v3488
        %v3636 = vmul.f32 %v3631, %v3485
        %v3637 = vmul.f32 %v3632, %v3627
        %v3638 = vmul.f32 %v3633, %v3628
        %v3639 = vmul.f32 %v3634, %v3629
        %v3640 = vmul.f32 %v3635, %v3630
        %v3641 = vmul.f32 %v3636, %v3631
        %3647 = vrot.lane.b32.xlu0 %v3637, 106
        %v3648 = vpop.permute.xlu0 %3647
        %3649 = vrot.lane.b32.xlu0 %v3638, 106
        %v3650 = vpop.permute.xlu0 %3649
        %3651 = vrot.lane.b32.xlu0 %v3639, 106
        %v3652 = vpop.permute.xlu0 %3651
        %3653 = vrot.lane.b32.xlu0 %v3640, 106
        %v3654 = vpop.permute.xlu0 %3653
        %3655 = vrot.lane.b32.xlu0 %v3641, 106
        %v3656 = vpop.permute.xlu0 %3655
        %v3657 = vsel %vm1368, %v3648, %v3650
        %v3658 = vsel %vm1368, %v3650, %v3652
        %v3659 = vsel %vm1368, %v3652, %v3654
        %v3660 = vsel %vm1368, %v3654, %v3656
        %v3665 = vadd.f32 %v3657, %v3658
        %v3666 = vadd.f32 %v3665, %v3659
        %v3667 = vadd.f32 %v3666, %v3660
        %3668 = vadd.xlane.f32.xlu0 %v3667
        %v3669 = vpop.xlane.xlu0 %3668
        %v3670 = vmul.f32 %v3669, 0.00390625
        %v3671 = vadd.f32 %v3670, 1e-05
        %v3672 = vrsqrt.pop %v3671
        %v3673 = vmul.f32 %v3672, %v3671
        %v3674 = vmul.f32 %v3673, %v3672
        %v3675 = vmul.f32 0.5, %v3674
        %v3676 = vsub.f32 1.5, %v3675
        %v3677 = vmul.f32 %v3672, %v3676
        %vm3678 = vweird.f32 %v3671
        %vm3679 = vweird.f32 %v3672
        %vm3680 = vmor %vm3678, %vm3679
        %v3681 = vsel %vm3680, %v3672, %v3677
        %v3682 = vmul.f32 %v3627, %v3681
        %v3683 = vmul.f32 %v3628, %v3681
        %v3684 = vmul.f32 %v3629, %v3681
        %v3685 = vmul.f32 %v3630, %v3681
        %v3686 = vmul.f32 %v3631, %v3681
        %v3687 = vmax.f32 %v3682, 0.0
        %v3688 = vmax.f32 %v3683, 0.0
        %v3689 = vmax.f32 %v3684, 0.0
        %v3690 = vmax.f32 %v3685, 0.0
        %v3691 = vmax.f32 %v3686, 0.0
        %v3692 = vadd.f32 %v3588, %v3687
        %v3693 = vadd.f32 %v3589, %v3688
        %v3694 = vadd.f32 %v3590, %v3689
        %v3695 = vadd.f32 %v3591, %v3690
        %v3696 = vadd.f32 %v3592, %v3691
        %v3702 = vrot.slane %v3692, 4
        %v3703 = vrot.slane %v3693, 4
        %v3704 = vrot.slane %v3694, 4
        %v3705 = vrot.slane %v3695, 4
        %v3706 = vrot.slane %v3696, 4
        %v3712 = vadd.f32 %v3692, %v3702
        %v3713 = vadd.f32 %v3693, %v3703
        %v3714 = vadd.f32 %v3694, %v3704
        %v3715 = vadd.f32 %v3695, %v3705
        %v3716 = vadd.f32 %v3696, %v3706
        %v3717 = vld [vmem:[%s2] sm:$0xf]
        %3719 = vset.pattern.permute.xlu0 0
        %3720 = vperm.xlu0 %3719, %v3717
        %v3721 = vpop.permute.xlu0 %3720
        %v3723 = vperm.slane %v3712, 0
        %v3724 = vperm.slane %v3713, 0
        %v3725 = vperm.slane %v3714, 0
        %v3726 = vperm.slane %v3715, 0
        %v3727 = vperm.slane %v3716, 0
        %v3728 = vmul.f32 %v3721, %v3723
        %v3729 = vmul.f32 %v3721, %v3724
        %v3730 = vmul.f32 %v3721, %v3725
        %v3731 = vmul.f32 %v3721, %v3726
        %v3732 = vmul.f32 %v3721, %v3727
        %3733 = vset.pattern.permute.xlu0 1
        %3734 = vperm.xlu0 %3733, %v3717
        %v3735 = vpop.permute.xlu0 %3734
        %v3737 = vperm.slane %v3712, 1
        %v3738 = vperm.slane %v3713, 1
        %v3739 = vperm.slane %v3714, 1
        %v3740 = vperm.slane %v3715, 1
        %v3741 = vperm.slane %v3716, 1
        %v3742 = vmul.f32 %v3735, %v3737
        %v3743 = vmul.f32 %v3735, %v3738
        %v3744 = vmul.f32 %v3735, %v3739
        %v3745 = vmul.f32 %v3735, %v3740
        %v3746 = vmul.f32 %v3735, %v3741
        %v3747 = vadd.f32 %v3728, %v3742
        %v3748 = vadd.f32 %v3729, %v3743
        %v3749 = vadd.f32 %v3730, %v3744
        %v3750 = vadd.f32 %v3731, %v3745
        %v3751 = vadd.f32 %v3732, %v3746
        %3752 = vset.pattern.permute.xlu0 2
        %3753 = vperm.xlu0 %3752, %v3717
        %v3754 = vpop.permute.xlu0 %3753
        %v3756 = vperm.slane %v3712, 2
        %v3757 = vperm.slane %v3713, 2
        %v3758 = vperm.slane %v3714, 2
        %v3759 = vperm.slane %v3715, 2
        %v3760 = vperm.slane %v3716, 2
        %v3761 = vmul.f32 %v3754, %v3756
        %v3762 = vmul.f32 %v3754, %v3757
        %v3763 = vmul.f32 %v3754, %v3758
        %v3764 = vmul.f32 %v3754, %v3759
        %v3765 = vmul.f32 %v3754, %v3760
        %v3766 = vadd.f32 %v3747, %v3761
        %v3767 = vadd.f32 %v3748, %v3762
        %v3768 = vadd.f32 %v3749, %v3763
        %v3769 = vadd.f32 %v3750, %v3764
        %v3770 = vadd.f32 %v3751, %v3765
        %3771 = vset.pattern.permute.xlu0 3
        %3772 = vperm.xlu0 %3771, %v3717
        %v3773 = vpop.permute.xlu0 %3772
        %v3775 = vperm.slane %v3712, 3
        %v3776 = vperm.slane %v3713, 3
        %v3777 = vperm.slane %v3714, 3
        %v3778 = vperm.slane %v3715, 3
        %v3779 = vperm.slane %v3716, 3
        %v3780 = vmul.f32 %v3773, %v3775
        %v3781 = vmul.f32 %v3773, %v3776
        %v3782 = vmul.f32 %v3773, %v3777
        %v3783 = vmul.f32 %v3773, %v3778
        %v3784 = vmul.f32 %v3773, %v3779
        %v3785 = vadd.f32 %v3766, %v3780
        %v3786 = vadd.f32 %v3767, %v3781
        %v3787 = vadd.f32 %v3768, %v3782
        %v3788 = vadd.f32 %v3769, %v3783
        %v3789 = vadd.f32 %v3770, %v3784
        %v3790 = vld [vmem:[%s3] sm:$0xf]
        %3792 = vset.pattern.permute.xlu0 0
        %3793 = vperm.xlu0 %3792, %v3790
        %v3794 = vpop.permute.xlu0 %3793
        %v3796 = vadd.f32 %v3785, %v3794
        %v3797 = vadd.f32 %v3786, %v3794
        %v3798 = vadd.f32 %v3787, %v3794
        %v3799 = vadd.f32 %v3788, %v3794
        %v3800 = vadd.f32 %v3789, %v3794
        %3806 = vrot.lane.b32.xlu0 %v3796, 42
        %v3807 = vpop.permute.xlu0 %3806
        %3808 = vrot.lane.b32.xlu0 %v3797, 42
        %v3809 = vpop.permute.xlu0 %3808
        %3810 = vrot.lane.b32.xlu0 %v3798, 42
        %v3811 = vpop.permute.xlu0 %3810
        %3812 = vrot.lane.b32.xlu0 %v3799, 42
        %v3813 = vpop.permute.xlu0 %3812
        %3814 = vrot.lane.b32.xlu0 %v3800, 42
        %v3815 = vpop.permute.xlu0 %3814
        %v3816 = vsel %vm1099, %v3807, %v3809
        %v3817 = vsel %vm1099, %v3809, %v3811
        %v3818 = vsel %vm1099, %v3811, %v3813
        %v3819 = vsel %vm1099, %v3813, %v3815
        %vm3825 = vcmask 1043968
        %3826 = vst.msk [vmem:[#allocation2] sm:$0xf] %vm3825, %v3807
        %3827 = vst [vmem:[#allocation2 + $0x8] sm:$0xf] %v3816
        %3828 = vst [vmem:[#allocation2 + $0x10] sm:$0xf] %v3817
        %3829 = vst [vmem:[#allocation2 + $0x18] sm:$0xf] %v3818
        %vm3830 = vcmask 519168
        %3831 = vst.msk [vmem:[#allocation2 + $0x20] sm:$0xf] %vm3830, %v3819
        %v3832 = vld [vmem:[#allocation2] sm:$0xf]
        %3834 = vrot.lane.b32.xlu0 %v3832, 22
        %v3835 = vpop.permute.xlu0 %3834
        %vm3837 = vcmask 125952
        %3838 = vst.msk [vmem:[%s241] sm:$0xf] %vm3837, %v3835
        %v3839 = vld [vmem:[#allocation2] sm:$0xf]
        %v3840 = vld [vmem:[#allocation2 + $0x8] sm:$0xf]
        %v3843 = vrot.slane %v3840, 4
        %vm3844 = vcmask 1043456
        %v3845 = vsel %vm3844, %v3839, %v3843
        %3846 = vrot.lane.b32.xlu0 %v3845, 18
        %v3847 = vpop.permute.xlu0 %3846
        %v3848 = vrot.slane %v3847, 4
        %vm3849 = vcmask 146432
        %v3850 = vsel %vm3849, %v3847, %v3848
        %vm3852 = vcmask 257152
        %3853 = vst.msk [vmem:[%s241] sm:$0xf] %vm3852, %v3850
        %v3854 = vld [vmem:[#allocation2 + $0x8] sm:$0xf]
        %3856 = vrot.lane.b32.xlu0 %v3854, 14
        %v3857 = vpop.permute.xlu0 %3856
        %vm3859 = vcmask 388352
        %3860 = vst.msk [vmem:[%s241] sm:$0xf] %vm3859, %v3857
        %v3861 = vld [vmem:[#allocation2 + $0x8] sm:$0xf]
        %3863 = vrot.lane.b32.xlu0 %v3861, 10
        %v3864 = vpop.permute.xlu0 %3863
        %vm3866 = vcmask 519552
        %3867 = vst.msk [vmem:[%s241] sm:$0xf] %vm3866, %v3864
        %v3868 = vld [vmem:[#allocation2 + $0x8] sm:$0xf]
        %3870 = vrot.lane.b32.xlu0 %v3868, 6
        %v3871 = vpop.permute.xlu0 %3870
        %vm3873 = vcmask 650752
        %3874 = vst.msk [vmem:[%s241] sm:$0xf] %vm3873, %v3871
        %v3875 = vld [vmem:[#allocation2 + $0x8] sm:$0xf]
        %3877 = vrot.lane.b32.xlu0 %v3875, 2
        %v3878 = vpop.permute.xlu0 %3877
        %vm3880 = vcmask 781952
        %3881 = vst.msk [vmem:[%s241] sm:$0xf] %vm3880, %v3878
        %v3882 = vld [vmem:[#allocation2 + $0x8] sm:$0xf]
        %3884 = vrot.lane.b32.xlu0 %v3882, 126
        %v3885 = vpop.permute.xlu0 %3884
        %vm3887 = vcmask 913152
        %3888 = vst.msk [vmem:[%s241] sm:$0xf] %vm3887, %v3885
        %v3889 = vld [vmem:[#allocation2 + $0x8] sm:$0xf]
        %v3890 = vld [vmem:[#allocation2 + $0x10] sm:$0xf]
        %v3893 = vrot.slane %v3890, 4
        %v3894 = vsel %vm3844, %v3889, %v3893
        %3895 = vrot.lane.b32.xlu0 %v3894, 122
        %v3896 = vpop.permute.xlu0 %3895
        %v3897 = vrot.slane %v3896, 4
        %vm3898 = vcmask 998400
        %v3899 = vsel %vm3898, %v3896, %v3897
        %vm3901 = vcmask 1044352
        %3902 = vst.msk [vmem:[%s241] sm:$0xf] %vm3901, %v3899
        %v3903 = vld [vmem:[#allocation2 + $0x10] sm:$0xf]
        %3905 = vrot.lane.b32.xlu0 %v3903, 118
        %v3906 = vpop.permute.xlu0 %3905
        %3908 = vst.msk [vmem:[%s241 + $0x4] sm:$0xf] %vm3837, %v3906
        %v3909 = vld [vmem:[#allocation2 + $0x10] sm:$0xf]
        %3911 = vrot.lane.b32.xlu0 %v3909, 114
        %v3912 = vpop.permute.xlu0 %3911
        %3914 = vst.msk [vmem:[%s241 + $0x4] sm:$0xf] %vm3852, %v3912
        %v3915 = vld [vmem:[#allocation2 + $0x10] sm:$0xf]
        %3917 = vrot.lane.b32.xlu0 %v3915, 110
        %v3918 = vpop.permute.xlu0 %3917
        %3920 = vst.msk [vmem:[%s241 + $0x4] sm:$0xf] %vm3859, %v3918
        %v3921 = vld [vmem:[#allocation2 + $0x10] sm:$0xf]
        %3923 = vrot.lane.b32.xlu0 %v3921, 106
        %v3924 = vpop.permute.xlu0 %3923
        %3926 = vst.msk [vmem:[%s241 + $0x4] sm:$0xf] %vm3866, %v3924
        %v3927 = vld [vmem:[#allocation2 + $0x10] sm:$0xf]
        %3929 = vrot.lane.b32.xlu0 %v3927, 102
        %v3930 = vpop.permute.xlu0 %3929
        %3932 = vst.msk [vmem:[%s241 + $0x4] sm:$0xf] %vm3873, %v3930
        %v3933 = vld [vmem:[#allocation2 + $0x10] sm:$0xf]
        %3935 = vrot.lane.b32.xlu0 %v3933, 98
        %v3936 = vpop.permute.xlu0 %3935
        %3938 = vst.msk [vmem:[%s241 + $0x4] sm:$0xf] %vm3880, %v3936
        %v3939 = vld [vmem:[#allocation2 + $0x18] sm:$0xf]
        %3941 = vrot.lane.b32.xlu0 %v3939, 94
        %v3942 = vpop.permute.xlu0 %3941
        %3944 = vst.msk [vmem:[%s241 + $0x4] sm:$0xf] %vm3887, %v3942
        %v3945 = vld [vmem:[#allocation2 + $0x18] sm:$0xf]
        %3947 = vrot.lane.b32.xlu0 %v3945, 90
        %v3948 = vpop.permute.xlu0 %3947
        %3950 = vst.msk [vmem:[%s241 + $0x4] sm:$0xf] %vm3901, %v3948
        %p3951 = scmp.lt.s32.totalorder %s17, 1
        %s3952 = scalar_select %p3951, %s17, 1
        %s3953 = smul.addr %s3952, 2
        %s3954 = smul.addr %s3953, 4
        %s3955 = scalar_lea.vmem %s5, %s3954
        // Predicated region
        $region45: #{basic_block2_forward.1} parent=39 // pred_check
          %p3956 = pneg %p145
        $region46: #{basic_block2_forward.1} parent=39 // pred_check_branch
          %3958 = sbr.rel (%p3956) target = $region48
        $region47: #{basic_block2_forward.1} parent=39 // pred_region
          _
        $region48: #{basic_block2_forward.1} parent=39 // pred_fallthru
          _
      $region40: #{basic_block2_forward.1} parent=5 // pred_fallthru
        _
      %p3959 = scmp.le.s32.totalorder 2, %s12
      // Predicated region
      $region49: #{basic_block2_forward.1} parent=5 // pred_check
        %p3960 = pneg %p3959
      $region50: #{basic_block2_forward.1} parent=5 // pred_check_branch
        %3962 = sbr.rel (%p3960) target = $region52
      $region51: #{basic_block2_forward.1} parent=5 // pred_region
        %s3963 = ssub.s32 %s12, 2
        // Predicated region
        $region53: #{basic_block2_forward.1} parent=51 // pred_check
          %p3964 = pneg %p151
        $region54: #{basic_block2_forward.1} parent=51 // pred_check_branch
          %3966 = sbr.rel (%p3964) target = $region56
        $region55: #{basic_block2_forward.1} parent=51 // pred_region
          %p3967 = scmp.lt.s32.totalorder %s18, 1
          %s3968 = scalar_select %p3967, %s18, 1
          %s3969 = smul.addr %s3968, 2
          %s3970 = smul.addr %s3969, 4
          %s3971 = scalar_lea.vmem %s5, %s3970
        $region56: #{basic_block2_forward.1} parent=51 // pred_fallthru
          _
      $region52: #{basic_block2_forward.1} parent=5 // pred_fallthru
        _
    $region6: #{basic_block2_forward.1} parent=1 // loop_footer
      %s16 = sadd.s32 1, %s12
    $region7: #{basic_block2_forward.1} parent=1 // loop_footer_branch
      %11 = sbr.rel target = $region3
    $region8: #{basic_block2_forward.1} parent=1 // loop_exit
      _
    %3972 = vsyncpa [#allocation4], 1
    %s3973 = scalar_lea.sflag [#allocation4], 1
    %3974 = vsyncpa %s3973, 1

</llo_original>
